<compile_context>
chip_gen: v7x
topology: tpu7x:2x2x1
jax: 0.10.0
libtpu: 0.0.40
codegen_flags: <defaults>
</compile_context>

<pallas_src>
import math

import numpy as np
import jax
import jax.numpy as jnp
from jax import lax
from jax.experimental import pallas as pl
from jax.experimental.pallas import tpu as pltpu

# ---------------- small config consistent with the module ----------------
N_BATCH = 2
IMG_H = IMG_W = 16
PATCH = 4                      # patch_res
DIM = 32
MLP_DIM = 64
HEAD_DIM = 16
DEPTH = 2
N_CLASSES = 10
N_HEADS = DIM // HEAD_DIM      # 2
N_FREQS = HEAD_DIM // 2        # 8
POS_DIM = 2
NH_PATCH = IMG_H // PATCH      # 4
NW_PATCH = IMG_W // PATCH      # 4
T = NH_PATCH * NW_PATCH        # 16 tokens per image
P_IN = PATCH * PATCH * 3       # 48
MIN_FREQ = 1.0                 # TODO(synk): rotary min/max freqs are not given in __init__; chosen deterministically
MAX_FREQ = 10.0
EPS = 1e-6
OUT_PAD = 128                  # lane-dense classifier output width (sliced to n_classes outside)
NEG = -1e30                    # large finite negative for the block-diagonal attention mask


# ---------------- shared math helpers ----------------
def rmsnorm(v):
    return v * lax.rsqrt(jnp.mean(v * v, axis=-1, keepdims=True) + EPS)


def rope(v, cos, sin):
    # v: (rows, HEAD_DIM); cos/sin: (rows, N_FREQS)
    xr = v[:, :N_FREQS]
    xi = v[:, N_FREQS:]
    return jnp.concatenate([xr * cos - xi * sin, xr * sin + xi * cos], axis=-1)


# ---------------- parameter construction (deterministic host-side glue) ----------------
def uniform_directions(n, dim):
    primes = [2, 3, 5, 7, 11, 13, 17, 19]
    x = 23
    while len(primes) < dim:
        if all(x % p != 0 for p in primes):
            primes.append(x)
        x += 2
    z = np.mod(
        np.arange(1, n + 1, dtype=np.float64).reshape(n, 1)
        * np.sqrt(np.array(primes[:dim], dtype=np.float64)),
        1.0,
    )
    z = jnp.asarray(z, dtype=jnp.float32)
    z = math.sqrt(2.0) * jax.scipy.special.erfinv(2.0 * z - 1.0)
    return z / jnp.linalg.norm(z, axis=1, keepdims=True)


def init_params(key):
    ks = jax.random.split(key, 6)
    wp = jax.random.normal(ks[0], (DIM, P_IN), jnp.float32) / math.sqrt(P_IN)
    wqkv = jax.random.normal(ks[1], (DEPTH, 3 * DIM, DIM), jnp.float32) / math.sqrt(DIM) / 2.0
    # torch zero-inits o_proj / second MLP linear; small random so the full path is exercised.
    wo = jax.random.normal(ks[2], (DEPTH, DIM, DIM), jnp.float32) * 0.02
    w1 = jax.random.normal(ks[3], (DEPTH, MLP_DIM, DIM), jnp.float32) / math.sqrt(DIM)
    w2 = jax.random.normal(ks[4], (DEPTH, DIM, MLP_DIM), jnp.float32) / math.sqrt(MLP_DIM) * 0.02
    wout = jax.random.normal(ks[5], (N_CLASSES, DIM), jnp.float32) / math.sqrt(DIM)

    directions = uniform_directions(N_HEADS * N_FREQS, POS_DIM).reshape(N_HEADS, N_FREQS, POS_DIM)
    omega_F = MIN_FREQ * (MAX_FREQ / MIN_FREQ) ** jnp.linspace(0.0, 1.0, N_FREQS)
    freqs_hFP = directions * omega_F[None, :, None]

    # (in, out) layouts; q/k/v output columns are already head-major (torch flatten(0,1).t()).
    wqkv_t = jnp.transpose(wqkv, (0, 2, 1))          # (DEPTH, DIM, 3*DIM) fused qkv weight
    wo_t = jnp.transpose(wo, (0, 2, 1))              # (DEPTH, DIM, DIM)
    w1_t = jnp.transpose(w1, (0, 2, 1))              # (DEPTH, DIM, MLP_DIM)
    w2_t = jnp.transpose(w2, (0, 2, 1))              # (DEPTH, MLP_DIM, DIM)
    wout_t = wout.T                                  # (DIM, N_CLASSES)
    wout_pad = jnp.zeros((DIM, OUT_PAD), jnp.float32).at[:, :N_CLASSES].set(wout_t)

    bf = lambda a: a.astype(jnp.bfloat16)
    return dict(
        # f32 weights for the pure-JAX reference
        wp_t=wp.T, wqkv_t=wqkv_t, wo_t=wo_t, w1_t=w1_t, w2_t=w2_t, wout_t=wout_t,
        freqs_hFP=freqs_hFP,
        # bf16 weights for the kernel (single-pass MXU inputs, f32 accumulation)
        wp_b=bf(wp.T), wqkv_b=bf(wqkv_t), wo_b=bf(wo_t),
        w1_b=bf(w1_t), w2_b=bf(w2_t), wout_b=bf(wout_pad),
    )


# ---------------- glue: patch extraction, RoPE tables, constant matrices ----------------
def extract_patches(images_NCHW):
    n = images_NCHW.shape[0]
    x = images_NCHW.reshape(n, 3, NH_PATCH, PATCH, NW_PATCH, PATCH)
    x = x.transpose(0, 2, 4, 3, 5, 1)            # N, nh, nw, ph, pw, C
    return x.reshape(n, T, P_IN)


def patch_positions():
    ii, jj = jnp.meshgrid(jnp.arange(NH_PATCH), jnp.arange(NW_PATCH), indexing="ij")
    return jnp.stack([ii.reshape(-1), jj.reshape(-1)], axis=-1).astype(jnp.float32)  # (T, 2)


def build_rope_tables(freqs_hFP, b_tile):
    # One unscaled cos/sin table pair per head, tiled over the batch tile (host-side, tiny).
    pos_TP = patch_positions()
    theta_hTF = jnp.einsum("tp,hfp->htf", pos_TP, freqs_hFP)          # (H, T, F)
    cos = jnp.tile(jnp.cos(theta_hTF), (1, b_tile, 1))                # (H, R, F)
    sin = jnp.tile(jnp.sin(theta_hTF), (1, b_tile, 1))
    return cos, sin


def build_block_mask(b_tile):
    # (R, R): 0 inside each image's TxT diagonal block, large-negative off-block.
    same = np.kron(np.eye(b_tile, dtype=np.float32), np.ones((T, T), np.float32))
    return jnp.asarray(np.where(same > 0.5, 0.0, NEG).astype(np.float32))


def build_pool_matrix(b_tile):
    # (b_tile, R): mean over the T tokens of each image, as a matmul (1/16 exact in bf16).
    pool = np.kron(np.eye(b_tile, dtype=np.float32), np.full((1, T), 1.0 / T, np.float32))
    return jnp.asarray(pool, dtype=jnp.bfloat16)


def _pick_max_b_tile():
    # R = b_tile*T rows per grid step: 128 fills a v5e MXU pass; 256 fills v6e/v7x.
    try:
        kind = jax.devices()[0].device_kind.lower()
    except Exception:
        return 8
    return 16 if ("v6" in kind or "v7" in kind) else 8


# ---------------- the Pallas kernel: full forward for one batch tile ----------------
def vit_kernel(patches_ref, cos_ref, sin_ref, mask_ref, pool_ref,
               wp_ref, wqkv_ref, wo_ref, w1_ref, w2_ref, wout_ref, out_ref):
    f32 = jnp.float32
    bf16 = jnp.bfloat16
    scale = 1.0 / math.sqrt(HEAD_DIM)

    # patchify: all images of the tile folded into the M dimension -> (R, DIM) f32 residual
    x = jnp.dot(patches_ref[...], wp_ref[...], preferred_element_type=f32)
    mask = mask_ref[...]                                   # (R, R) block-diagonal additive mask

    for l in range(DEPTH):
        # ---- EncoderSelfAttention ----
        h = rmsnorm(x).astype(bf16)
        qkv = jnp.dot(h, wqkv_ref[l], preferred_element_type=f32)     # (R, 3*DIM), one wide matmul
        head_outs = []
        for hi in range(N_HEADS):
            q = rmsnorm(qkv[:, hi * HEAD_DIM:(hi + 1) * HEAD_DIM])
            k = rmsnorm(qkv[:, DIM + hi * HEAD_DIM:DIM + (hi + 1) * HEAD_DIM])
            v = qkv[:, 2 * DIM + hi * HEAD_DIM:2 * DIM + (hi + 1) * HEAD_DIM]
            cos = cos_ref[hi]
            sin = sin_ref[hi]
            # RoPE: pure VPU/lane ops (no MXU). 1/sqrt(head_dim) as one VPU mul on q
            # (cannot be folded into wq because the qk RMSNorm would normalise it away).
            q = rope(q, cos, sin) * scale
            k = rope(k, cos, sin)

            # Folded attention: one (R, R) score matmul + additive block-diag mask instead of
            # b_tile tiny per-image einsums.
            s = lax.dot_general(q.astype(bf16), k.astype(bf16),
                                (((1,), (1,)), ((), ())),
                                preferred_element_type=f32)            # (R, R)
            s = s + mask
            s = s - jnp.max(s, axis=-1, keepdims=True)
            p = jnp.exp(s)
            p = p * pl.reciprocal(jnp.sum(p, axis=-1, keepdims=True), approx=True)
            head_outs.append(jnp.dot(p.astype(bf16), v.astype(bf16),
                                     preferred_element_type=f32))       # (R, HEAD_DIM)

        o = jnp.concatenate(head_outs, axis=-1).astype(bf16)             # (R, DIM) head pack
        x = x + jnp.dot(o, wo_ref[l], preferred_element_type=f32)        # single o-proj matmul

        # ---- MLPBlock ----
        u = jnp.dot(rmsnorm(x).astype(bf16), w1_ref[l], preferred_element_type=f32)
        u = jnp.square(jnp.maximum(u, 0.0)).astype(bf16)  # TODO(synk): MLPBlock activation not in source; squared ReLU assumed
        x = x + jnp.dot(u, w2_ref[l], preferred_element_type=f32)

    # ---- mean pooling over patches (small matmul) + classifier head (lane-dense 128 cols) ----
    pooled = jnp.dot(pool_ref[...], x.astype(bf16), preferred_element_type=f32)  # (b_tile, DIM)
    pooled = rmsnorm(pooled)  # TODO(synk): Output(dim, n_classes) internals not in source; RMSNorm + Linear assumed
    out_ref[...] = jnp.dot(pooled.astype(bf16), wout_ref[...], preferred_element_type=f32)


# ---------------- wrapper ----------------
def multiscale_vit_forward(images_NCHW, params):
    n = images_NCHW.shape[0]
    b_tile = max(1, min(_pick_max_b_tile(), n))
    n_tiles = pl.cdiv(n, b_tile)
    n_pad = n_tiles * b_tile
    R = b_tile * T

    patches = extract_patches(images_NCHW).astype(jnp.bfloat16)         # (n, T, P_IN)
    if n_pad != n:
        patches = jnp.concatenate(
            [patches, jnp.zeros((n_pad - n, T, P_IN), jnp.bfloat16)], axis=0)
    patches2d = patches.reshape(n_pad * T, P_IN)                          # batch folded into M

    cos_tab, sin_tab = build_rope_tables(params["freqs_hFP"], b_tile)
    mask = build_block_mask(b_tile)
    pool = build_pool_matrix(b_tile)

    c2 = lambda i: (0, 0)
    c3 = lambda i: (0, 0, 0)
    grid_spec = pltpu.PrefetchScalarGridSpec(
        num_scalar_prefetch=0,
        grid=(n_tiles,),
        in_specs=[
            pl.BlockSpec((R, P_IN), lambda i: (i, 0)),            # patches (per-step varying)
            pl.BlockSpec((N_HEADS, R, N_FREQS), c3),              # cos table
            pl.BlockSpec((N_HEADS, R, N_FREQS), c3),              # sin table
            pl.BlockSpec((R, R), c2),                             # block-diag attention mask
            pl.BlockSpec((b_tile, R), c2),                        # mean-pool matrix
            pl.BlockSpec((P_IN, DIM), c2),                        # patchify weight
            pl.BlockSpec((DEPTH, DIM, 3 * DIM), c3),              # fused qkv weight
            pl.BlockSpec((DEPTH, DIM, DIM), c3),                  # o-proj weight
            pl.BlockSpec((DEPTH, DIM, MLP_DIM), c3),              # mlp up weight
            pl.BlockSpec((DEPTH, MLP_DIM, DIM), c3),              # mlp down weight
            pl.BlockSpec((DIM, OUT_PAD), c2),                     # padded classifier weight
        ],
        out_specs=pl.BlockSpec((b_tile, OUT_PAD), lambda i: (i, 0)),
    )

    out = pl.pallas_call(
        vit_kernel,
        out_shape=jax.ShapeDtypeStruct((n_pad, OUT_PAD), jnp.float32),
        grid_spec=grid_spec,
        compiler_params=pltpu.CompilerParams(dimension_semantics=("parallel",)),
    )(patches2d, cos_tab, sin_tab, mask, pool,
      params["wp_b"], params["wqkv_b"], params["wo_b"],
      params["w1_b"], params["w2_b"], params["wout_b"])

    return out[:n, :N_CLASSES]                                            # (N, n_classes)


# ---------------- pure-JAX reference (same math, f32, for a sanity check) ----------------
def reference_forward(images_NCHW, params):
    patches = extract_patches(images_NCHW).astype(jnp.float32)
    pos_TP = patch_positions()
    theta_ThF = jnp.einsum("tp,hfp->thf", pos_TP, params["freqs_hFP"])
    cos_ThF = jnp.cos(theta_ThF)
    sin_ThF = jnp.sin(theta_ThF)

    def one(tokens):
        x = tokens @ params["wp_t"]
        for l in range(DEPTH):
            qkv = rmsnorm(x) @ params["wqkv_t"][l]
            heads = []
            for hi in range(N_HEADS):
                q = rmsnorm(qkv[:, hi * HEAD_DIM:(hi + 1) * HEAD_DIM])
                k = rmsnorm(qkv[:, DIM + hi * HEAD_DIM:DIM + (hi + 1) * HEAD_DIM])
                v = qkv[:, 2 * DIM + hi * HEAD_DIM:2 * DIM + (hi + 1) * HEAD_DIM]
                q = rope(q, cos_ThF[:, hi, :], sin_ThF[:, hi, :])
                k = rope(k, cos_ThF[:, hi, :], sin_ThF[:, hi, :])
                att = jax.nn.softmax((q @ k.T) / math.sqrt(HEAD_DIM), axis=-1)
                heads.append(att @ v)
            x = x + jnp.concatenate(heads, axis=-1) @ params["wo_t"][l]
            u = jnp.square(jnp.maximum(rmsnorm(x) @ params["w1_t"][l], 0.0))
            x = x + u @ params["w2_t"][l]
        pooled = rmsnorm(jnp.mean(x, axis=0, keepdims=True))
        return (pooled @ params["wout_t"])[0]

    with jax.default_matmul_precision("highest"):
        return jax.vmap(one)(patches)


if __name__ == "__main__":
    key = jax.random.PRNGKey(0)
    pkey, xkey = jax.random.split(key)
    params = init_params(pkey)
    images = jax.random.normal(xkey, (N_BATCH, 3, IMG_H, IMG_W), jnp.float32)

    logits = multiscale_vit_forward(images, params)
    logits = jax.block_until_ready(logits)

    ref = reference_forward(images, params)
    # Tolerance accounts for bf16 MXU inputs (f32 accumulation) and the approx reciprocal.
    if not np.allclose(np.asarray(logits), np.asarray(ref), rtol=3e-2, atol=3e-2):
        raise AssertionError(f"mismatch vs reference:\n{np.asarray(logits)}\n{np.asarray(ref)}")
    print("KERNEL_OK")
</pallas_src>

<mosaic_0001>
module attributes {stable_mosaic.version = 11 : i64} {
  func.func @vit_kernel(%arg0: i32, %arg1: memref<32x48xbf16, #tpu.memory_space<vmem>>, %arg2: memref<2x32x8xf32, #tpu.memory_space<vmem>>, %arg3: memref<2x32x8xf32, #tpu.memory_space<vmem>>, %arg4: memref<32x32xf32, #tpu.memory_space<vmem>>, %arg5: memref<2x32xbf16, #tpu.memory_space<vmem>>, %arg6: memref<48x32xbf16, #tpu.memory_space<vmem>>, %arg7: memref<2x32x96xbf16, #tpu.memory_space<vmem>>, %arg8: memref<2x32x32xbf16, #tpu.memory_space<vmem>>, %arg9: memref<2x32x64xbf16, #tpu.memory_space<vmem>>, %arg10: memref<2x64x32xbf16, #tpu.memory_space<vmem>>, %arg11: memref<32x128xbf16, #tpu.memory_space<vmem>>, %arg12: memref<2x128xf32, #tpu.memory_space<vmem>>) attributes {dimension_semantics = [#tpu.dimension_semantics<parallel>], iteration_bounds = array<i64: 1>, scalar_prefetch = 0 : i64, scratch_operands = 0 : i64, tpu.core_type = #tpu.core_type<tc>, window_params = [{transform_indices = @transform_0, window_bounds = array<i64: 32, 48>}, {pipeline_mode = #tpu.pipeline_mode<synchronous>, transform_indices = @transform_1, window_bounds = array<i64: 2, 32, 8>}, {pipeline_mode = #tpu.pipeline_mode<synchronous>, transform_indices = @transform_2, window_bounds = array<i64: 2, 32, 8>}, {pipeline_mode = #tpu.pipeline_mode<synchronous>, transform_indices = @transform_3, window_bounds = array<i64: 32, 32>}, {pipeline_mode = #tpu.pipeline_mode<synchronous>, transform_indices = @transform_4, window_bounds = array<i64: 2, 32>}, {pipeline_mode = #tpu.pipeline_mode<synchronous>, transform_indices = @transform_5, window_bounds = array<i64: 48, 32>}, {pipeline_mode = #tpu.pipeline_mode<synchronous>, transform_indices = @transform_6, window_bounds = array<i64: 2, 32, 96>}, {pipeline_mode = #tpu.pipeline_mode<synchronous>, transform_indices = @transform_7, window_bounds = array<i64: 2, 32, 32>}, {pipeline_mode = #tpu.pipeline_mode<synchronous>, transform_indices = @transform_8, window_bounds = array<i64: 2, 32, 64>}, {pipeline_mode = #tpu.pipeline_mode<synchronous>, transform_indices = @transform_9, window_bounds = array<i64: 2, 64, 32>}, {pipeline_mode = #tpu.pipeline_mode<synchronous>, transform_indices = @transform_10, window_bounds = array<i64: 32, 128>}, {transform_indices = @transform_11, window_bounds = array<i64: 2, 128>}]} {
    %c0 = arith.constant 0 : index
    %c0_0 = arith.constant 0 : index
    %0 = vector.load %arg1[%c0, %c0_0] : memref<32x48xbf16, #tpu.memory_space<vmem>>, vector<32x48xbf16>
    %c0_1 = arith.constant 0 : index
    %c0_2 = arith.constant 0 : index
    %1 = vector.load %arg6[%c0_1, %c0_2] : memref<48x32xbf16, #tpu.memory_space<vmem>>, vector<48x32xbf16>
    %cst = arith.constant dense<0.000000e+00> : vector<32x32xf32>
    %2 = tpu.matmul %0, %1, %cst {dimension_numbers = #tpu.dot_dimension_numbers<[1], [0], [0], [1], [0, 0, 1, 1], [], []>} : vector<32x48xbf16>, vector<48x32xbf16>, vector<32x32xf32> -> vector<32x32xf32>
    %c0_3 = arith.constant 0 : index
    %c0_4 = arith.constant 0 : index
    %3 = vector.load %arg4[%c0_3, %c0_4] : memref<32x32xf32, #tpu.memory_space<vmem>>, vector<32x32xf32>
    %4 = arith.mulf %2, %2 : vector<32x32xf32>
    %cst_5 = arith.constant dense<0.000000e+00> : vector<32xf32>
    %5 = vector.multi_reduction <add>, %4, %cst_5 [1] : vector<32x32xf32> to vector<32xf32>
    %6 = vector.shape_cast %5 : vector<32xf32> to vector<32x1xf32>
    %cst_6 = arith.constant 3.200000e+01 : f32
    %7 = vector.broadcast %cst_6 : f32 to vector<32x1xf32>
    %8 = arith.divf %6, %7 : vector<32x1xf32>
    %cst_7 = arith.constant 9.99999997E-7 : f32
    %9 = vector.broadcast %cst_7 : f32 to vector<32x1xf32>
    %10 = arith.addf %8, %9 : vector<32x1xf32>
    %11 = math.rsqrt %10 : vector<32x1xf32>
    %12 = vector.broadcast %11 : vector<32x1xf32> to vector<32x32xf32>
    %13 = arith.mulf %2, %12 : vector<32x32xf32>
    %14 = arith.truncf %13 : vector<32x32xf32> to vector<32x32xbf16>
    %c0_8 = arith.constant 0 : index
    %c0_9 = arith.constant 0 : index
    %c0_10 = arith.constant 0 : index
    %15 = vector.load %arg7[%c0_8, %c0_9, %c0_10] : memref<2x32x96xbf16, #tpu.memory_space<vmem>>, vector<1x32x96xbf16>
    %16 = vector.shape_cast %15 : vector<1x32x96xbf16> to vector<32x96xbf16>
    %cst_11 = arith.constant dense<0.000000e+00> : vector<32x96xf32>
    %17 = tpu.matmul %14, %16, %cst_11 {dimension_numbers = #tpu.dot_dimension_numbers<[1], [0], [0], [1], [0, 0, 1, 1], [], []>} : vector<32x32xbf16>, vector<32x96xbf16>, vector<32x96xf32> -> vector<32x96xf32>
    %18 = vector.extract_strided_slice %17 {offsets = [0, 0], sizes = [32, 16], strides = [1, 1]} : vector<32x96xf32> to vector<32x16xf32>
    %19 = arith.mulf %18, %18 : vector<32x16xf32>
    %cst_12 = arith.constant dense<0.000000e+00> : vector<32xf32>
    %20 = vector.multi_reduction <add>, %19, %cst_12 [1] : vector<32x16xf32> to vector<32xf32>
    %21 = vector.shape_cast %20 : vector<32xf32> to vector<32x1xf32>
    %cst_13 = arith.constant 1.600000e+01 : f32
    %22 = vector.broadcast %cst_13 : f32 to vector<32x1xf32>
    %23 = arith.divf %21, %22 : vector<32x1xf32>
    %cst_14 = arith.constant 9.99999997E-7 : f32
    %24 = vector.broadcast %cst_14 : f32 to vector<32x1xf32>
    %25 = arith.addf %23, %24 : vector<32x1xf32>
    %26 = math.rsqrt %25 : vector<32x1xf32>
    %27 = vector.broadcast %26 : vector<32x1xf32> to vector<32x16xf32>
    %28 = arith.mulf %18, %27 : vector<32x16xf32>
    %29 = vector.extract_strided_slice %17 {offsets = [0, 32], sizes = [32, 16], strides = [1, 1]} : vector<32x96xf32> to vector<32x16xf32>
    %30 = arith.mulf %29, %29 : vector<32x16xf32>
    %cst_15 = arith.constant dense<0.000000e+00> : vector<32xf32>
    %31 = vector.multi_reduction <add>, %30, %cst_15 [1] : vector<32x16xf32> to vector<32xf32>
    %32 = vector.shape_cast %31 : vector<32xf32> to vector<32x1xf32>
    %cst_16 = arith.constant 1.600000e+01 : f32
    %33 = vector.broadcast %cst_16 : f32 to vector<32x1xf32>
    %34 = arith.divf %32, %33 : vector<32x1xf32>
    %cst_17 = arith.constant 9.99999997E-7 : f32
    %35 = vector.broadcast %cst_17 : f32 to vector<32x1xf32>
    %36 = arith.addf %34, %35 : vector<32x1xf32>
    %37 = math.rsqrt %36 : vector<32x1xf32>
    %38 = vector.broadcast %37 : vector<32x1xf32> to vector<32x16xf32>
    %39 = arith.mulf %29, %38 : vector<32x16xf32>
    %40 = vector.extract_strided_slice %17 {offsets = [0, 64], sizes = [32, 16], strides = [1, 1]} : vector<32x96xf32> to vector<32x16xf32>
    %c0_18 = arith.constant 0 : index
    %c0_19 = arith.constant 0 : index
    %c0_20 = arith.constant 0 : index
    %41 = vector.load %arg2[%c0_18, %c0_19, %c0_20] : memref<2x32x8xf32, #tpu.memory_space<vmem>>, vector<1x32x8xf32>
    %42 = vector.shape_cast %41 : vector<1x32x8xf32> to vector<32x8xf32>
    %c0_21 = arith.constant 0 : index
    %c0_22 = arith.constant 0 : index
    %c0_23 = arith.constant 0 : index
    %43 = vector.load %arg3[%c0_21, %c0_22, %c0_23] : memref<2x32x8xf32, #tpu.memory_space<vmem>>, vector<1x32x8xf32>
    %44 = vector.shape_cast %43 : vector<1x32x8xf32> to vector<32x8xf32>
    %45 = vector.extract_strided_slice %28 {offsets = [0, 0], sizes = [32, 8], strides = [1, 1]} : vector<32x16xf32> to vector<32x8xf32>
    %46 = vector.extract_strided_slice %28 {offsets = [0, 8], sizes = [32, 8], strides = [1, 1]} : vector<32x16xf32> to vector<32x8xf32>
    %47 = arith.mulf %45, %42 : vector<32x8xf32>
    %48 = arith.mulf %46, %44 : vector<32x8xf32>
    %49 = arith.subf %47, %48 : vector<32x8xf32>
    %50 = arith.mulf %45, %44 : vector<32x8xf32>
    %51 = arith.mulf %46, %42 : vector<32x8xf32>
    %52 = arith.addf %50, %51 : vector<32x8xf32>
    %53 = tpu.concatenate %49, %52 in 1 : vector<32x8xf32>, vector<32x8xf32> -> vector<32x16xf32>
    %cst_24 = arith.constant 2.500000e-01 : f32
    %54 = vector.broadcast %cst_24 : f32 to vector<32x16xf32>
    %55 = arith.mulf %53, %54 : vector<32x16xf32>
    %56 = vector.extract_strided_slice %39 {offsets = [0, 0], sizes = [32, 8], strides = [1, 1]} : vector<32x16xf32> to vector<32x8xf32>
    %57 = vector.extract_strided_slice %39 {offsets = [0, 8], sizes = [32, 8], strides = [1, 1]} : vector<32x16xf32> to vector<32x8xf32>
    %58 = arith.mulf %56, %42 : vector<32x8xf32>
    %59 = arith.mulf %57, %44 : vector<32x8xf32>
    %60 = arith.subf %58, %59 : vector<32x8xf32>
    %61 = arith.mulf %56, %44 : vector<32x8xf32>
    %62 = arith.mulf %57, %42 : vector<32x8xf32>
    %63 = arith.addf %61, %62 : vector<32x8xf32>
    %64 = tpu.concatenate %60, %63 in 1 : vector<32x8xf32>, vector<32x8xf32> -> vector<32x16xf32>
    %65 = arith.truncf %55 : vector<32x16xf32> to vector<32x16xbf16>
    %66 = arith.truncf %64 : vector<32x16xf32> to vector<32x16xbf16>
    %cst_25 = arith.constant dense<0.000000e+00> : vector<32x32xf32>
    %67 = tpu.matmul %65, %66, %cst_25 {dimension_numbers = #tpu.dot_dimension_numbers<[1], [1], [0], [0], [0, 0, 1, 0], [], []>} : vector<32x16xbf16>, vector<32x16xbf16>, vector<32x32xf32> -> vector<32x32xf32>
    %68 = arith.addf %67, %3 : vector<32x32xf32>
    %cst_26 = arith.constant dense<0xFF800000> : vector<32xf32>
    %69 = vector.multi_reduction <maximumf>, %68, %cst_26 [1] : vector<32x32xf32> to vector<32xf32>
    %70 = vector.shape_cast %69 : vector<32xf32> to vector<32x1xf32>
    %71 = vector.broadcast %70 : vector<32x1xf32> to vector<32x32xf32>
    %72 = arith.subf %68, %71 : vector<32x32xf32>
    %73 = math.exp %72 : vector<32x32xf32>
    %cst_27 = arith.constant dense<0.000000e+00> : vector<32xf32>
    %74 = vector.multi_reduction <add>, %73, %cst_27 [1] : vector<32x32xf32> to vector<32xf32>
    %75 = vector.shape_cast %74 : vector<32xf32> to vector<32x1xf32>
    %76 = tpu.reciprocal %75 {approx = true} : vector<32x1xf32> -> vector<32x1xf32>
    %77 = vector.broadcast %76 : vector<32x1xf32> to vector<32x32xf32>
    %78 = arith.mulf %73, %77 : vector<32x32xf32>
    %79 = arith.truncf %78 : vector<32x32xf32> to vector<32x32xbf16>
    %80 = arith.truncf %40 : vector<32x16xf32> to vector<32x16xbf16>
    %cst_28 = arith.constant dense<0.000000e+00> : vector<32x16xf32>
    %81 = tpu.matmul %79, %80, %cst_28 {dimension_numbers = #tpu.dot_dimension_numbers<[1], [0], [0], [1], [0, 0, 1, 1], [], []>} : vector<32x32xbf16>, vector<32x16xbf16>, vector<32x16xf32> -> vector<32x16xf32>
    %82 = vector.extract_strided_slice %17 {offsets = [0, 16], sizes = [32, 16], strides = [1, 1]} : vector<32x96xf32> to vector<32x16xf32>
    %83 = arith.mulf %82, %82 : vector<32x16xf32>
    %cst_29 = arith.constant dense<0.000000e+00> : vector<32xf32>
    %84 = vector.multi_reduction <add>, %83, %cst_29 [1] : vector<32x16xf32> to vector<32xf32>
    %85 = vector.shape_cast %84 : vector<32xf32> to vector<32x1xf32>
    %cst_30 = arith.constant 1.600000e+01 : f32
    %86 = vector.broadcast %cst_30 : f32 to vector<32x1xf32>
    %87 = arith.divf %85, %86 : vector<32x1xf32>
    %cst_31 = arith.constant 9.99999997E-7 : f32
    %88 = vector.broadcast %cst_31 : f32 to vector<32x1xf32>
    %89 = arith.addf %87, %88 : vector<32x1xf32>
    %90 = math.rsqrt %89 : vector<32x1xf32>
    %91 = vector.broadcast %90 : vector<32x1xf32> to vector<32x16xf32>
    %92 = arith.mulf %82, %91 : vector<32x16xf32>
    %93 = vector.extract_strided_slice %17 {offsets = [0, 48], sizes = [32, 16], strides = [1, 1]} : vector<32x96xf32> to vector<32x16xf32>
    %94 = arith.mulf %93, %93 : vector<32x16xf32>
    %cst_32 = arith.constant dense<0.000000e+00> : vector<32xf32>
    %95 = vector.multi_reduction <add>, %94, %cst_32 [1] : vector<32x16xf32> to vector<32xf32>
    %96 = vector.shape_cast %95 : vector<32xf32> to vector<32x1xf32>
    %cst_33 = arith.constant 1.600000e+01 : f32
    %97 = vector.broadcast %cst_33 : f32 to vector<32x1xf32>
    %98 = arith.divf %96, %97 : vector<32x1xf32>
    %cst_34 = arith.constant 9.99999997E-7 : f32
    %99 = vector.broadcast %cst_34 : f32 to vector<32x1xf32>
    %100 = arith.addf %98, %99 : vector<32x1xf32>
    %101 = math.rsqrt %100 : vector<32x1xf32>
    %102 = vector.broadcast %101 : vector<32x1xf32> to vector<32x16xf32>
    %103 = arith.mulf %93, %102 : vector<32x16xf32>
    %104 = vector.extract_strided_slice %17 {offsets = [0, 80], sizes = [32, 16], strides = [1, 1]} : vector<32x96xf32> to vector<32x16xf32>
    %c1 = arith.constant 1 : index
    %c0_35 = arith.constant 0 : index
    %c0_36 = arith.constant 0 : index
    %105 = vector.load %arg2[%c1, %c0_35, %c0_36] : memref<2x32x8xf32, #tpu.memory_space<vmem>>, vector<1x32x8xf32>
    %106 = vector.shape_cast %105 : vector<1x32x8xf32> to vector<32x8xf32>
    %c1_37 = arith.constant 1 : index
    %c0_38 = arith.constant 0 : index
    %c0_39 = arith.constant 0 : index
    %107 = vector.load %arg3[%c1_37, %c0_38, %c0_39] : memref<2x32x8xf32, #tpu.memory_space<vmem>>, vector<1x32x8xf32>
    %108 = vector.shape_cast %107 : vector<1x32x8xf32> to vector<32x8xf32>
    %109 = vector.extract_strided_slice %92 {offsets = [0, 0], sizes = [32, 8], strides = [1, 1]} : vector<32x16xf32> to vector<32x8xf32>
    %110 = vector.extract_strided_slice %92 {offsets = [0, 8], sizes = [32, 8], strides = [1, 1]} : vector<32x16xf32> to vector<32x8xf32>
    %111 = arith.mulf %109, %106 : vector<32x8xf32>
    %112 = arith.mulf %110, %108 : vector<32x8xf32>
    %113 = arith.subf %111, %112 : vector<32x8xf32>
    %114 = arith.mulf %109, %108 : vector<32x8xf32>
    %115 = arith.mulf %110, %106 : vector<32x8xf32>
    %116 = arith.addf %114, %115 : vector<32x8xf32>
    %117 = tpu.concatenate %113, %116 in 1 : vector<32x8xf32>, vector<32x8xf32> -> vector<32x16xf32>
    %cst_40 = arith.constant 2.500000e-01 : f32
    %118 = vector.broadcast %cst_40 : f32 to vector<32x16xf32>
    %119 = arith.mulf %117, %118 : vector<32x16xf32>
    %120 = vector.extract_strided_slice %103 {offsets = [0, 0], sizes = [32, 8], strides = [1, 1]} : vector<32x16xf32> to vector<32x8xf32>
    %121 = vector.extract_strided_slice %103 {offsets = [0, 8], sizes = [32, 8], strides = [1, 1]} : vector<32x16xf32> to vector<32x8xf32>
    %122 = arith.mulf %120, %106 : vector<32x8xf32>
    %123 = arith.mulf %121, %108 : vector<32x8xf32>
    %124 = arith.subf %122, %123 : vector<32x8xf32>
    %125 = arith.mulf %120, %108 : vector<32x8xf32>
    %126 = arith.mulf %121, %106 : vector<32x8xf32>
    %127 = arith.addf %125, %126 : vector<32x8xf32>
    %128 = tpu.concatenate %124, %127 in 1 : vector<32x8xf32>, vector<32x8xf32> -> vector<32x16xf32>
    %129 = arith.truncf %119 : vector<32x16xf32> to vector<32x16xbf16>
    %130 = arith.truncf %128 : vector<32x16xf32> to vector<32x16xbf16>
    %cst_41 = arith.constant dense<0.000000e+00> : vector<32x32xf32>
    %131 = tpu.matmul %129, %130, %cst_41 {dimension_numbers = #tpu.dot_dimension_numbers<[1], [1], [0], [0], [0, 0, 1, 0], [], []>} : vector<32x16xbf16>, vector<32x16xbf16>, vector<32x32xf32> -> vector<32x32xf32>
    %132 = arith.addf %131, %3 : vector<32x32xf32>
    %cst_42 = arith.constant dense<0xFF800000> : vector<32xf32>
    %133 = vector.multi_reduction <maximumf>, %132, %cst_42 [1] : vector<32x32xf32> to vector<32xf32>
    %134 = vector.shape_cast %133 : vector<32xf32> to vector<32x1xf32>
    %135 = vector.broadcast %134 : vector<32x1xf32> to vector<32x32xf32>
    %136 = arith.subf %132, %135 : vector<32x32xf32>
    %137 = math.exp %136 : vector<32x32xf32>
    %cst_43 = arith.constant dense<0.000000e+00> : vector<32xf32>
    %138 = vector.multi_reduction <add>, %137, %cst_43 [1] : vector<32x32xf32> to vector<32xf32>
    %139 = vector.shape_cast %138 : vector<32xf32> to vector<32x1xf32>
    %140 = tpu.reciprocal %139 {approx = true} : vector<32x1xf32> -> vector<32x1xf32>
    %141 = vector.broadcast %140 : vector<32x1xf32> to vector<32x32xf32>
    %142 = arith.mulf %137, %141 : vector<32x32xf32>
    %143 = arith.truncf %142 : vector<32x32xf32> to vector<32x32xbf16>
    %144 = arith.truncf %104 : vector<32x16xf32> to vector<32x16xbf16>
    %cst_44 = arith.constant dense<0.000000e+00> : vector<32x16xf32>
    %145 = tpu.matmul %143, %144, %cst_44 {dimension_numbers = #tpu.dot_dimension_numbers<[1], [0], [0], [1], [0, 0, 1, 1], [], []>} : vector<32x32xbf16>, vector<32x16xbf16>, vector<32x16xf32> -> vector<32x16xf32>
    %146 = tpu.concatenate %81, %145 in 1 : vector<32x16xf32>, vector<32x16xf32> -> vector<32x32xf32>
    %147 = arith.truncf %146 : vector<32x32xf32> to vector<32x32xbf16>
    %c0_45 = arith.constant 0 : index
    %c0_46 = arith.constant 0 : index
    %c0_47 = arith.constant 0 : index
    %148 = vector.load %arg8[%c0_45, %c0_46, %c0_47] : memref<2x32x32xbf16, #tpu.memory_space<vmem>>, vector<1x32x32xbf16>
    %149 = vector.shape_cast %148 : vector<1x32x32xbf16> to vector<32x32xbf16>
    %cst_48 = arith.constant dense<0.000000e+00> : vector<32x32xf32>
    %150 = tpu.matmul %147, %149, %cst_48 {dimension_numbers = #tpu.dot_dimension_numbers<[1], [0], [0], [1], [0, 0, 1, 1], [], []>} : vector<32x32xbf16>, vector<32x32xbf16>, vector<32x32xf32> -> vector<32x32xf32>
    %151 = arith.addf %2, %150 : vector<32x32xf32>
    %152 = arith.mulf %151, %151 : vector<32x32xf32>
    %cst_49 = arith.constant dense<0.000000e+00> : vector<32xf32>
    %153 = vector.multi_reduction <add>, %152, %cst_49 [1] : vector<32x32xf32> to vector<32xf32>
    %154 = vector.shape_cast %153 : vector<32xf32> to vector<32x1xf32>
    %cst_50 = arith.constant 3.200000e+01 : f32
    %155 = vector.broadcast %cst_50 : f32 to vector<32x1xf32>
    %156 = arith.divf %154, %155 : vector<32x1xf32>
    %cst_51 = arith.constant 9.99999997E-7 : f32
    %157 = vector.broadcast %cst_51 : f32 to vector<32x1xf32>
    %158 = arith.addf %156, %157 : vector<32x1xf32>
    %159 = math.rsqrt %158 : vector<32x1xf32>
    %160 = vector.broadcast %159 : vector<32x1xf32> to vector<32x32xf32>
    %161 = arith.mulf %151, %160 : vector<32x32xf32>
    %162 = arith.truncf %161 : vector<32x32xf32> to vector<32x32xbf16>
    %c0_52 = arith.constant 0 : index
    %c0_53 = arith.constant 0 : index
    %c0_54 = arith.constant 0 : index
    %163 = vector.load %arg9[%c0_52, %c0_53, %c0_54] : memref<2x32x64xbf16, #tpu.memory_space<vmem>>, vector<1x32x64xbf16>
    %164 = vector.shape_cast %163 : vector<1x32x64xbf16> to vector<32x64xbf16>
    %cst_55 = arith.constant dense<0.000000e+00> : vector<32x64xf32>
    %165 = tpu.matmul %162, %164, %cst_55 {dimension_numbers = #tpu.dot_dimension_numbers<[1], [0], [0], [1], [0, 0, 1, 1], [], []>} : vector<32x32xbf16>, vector<32x64xbf16>, vector<32x64xf32> -> vector<32x64xf32>
    %cst_56 = arith.constant 0.000000e+00 : f32
    %166 = vector.broadcast %cst_56 : f32 to vector<32x64xf32>
    %167 = arith.maximumf %165, %166 : vector<32x64xf32>
    %168 = arith.mulf %167, %167 : vector<32x64xf32>
    %169 = arith.truncf %168 : vector<32x64xf32> to vector<32x64xbf16>
    %c0_57 = arith.constant 0 : index
    %c0_58 = arith.constant 0 : index
    %c0_59 = arith.constant 0 : index
    %170 = vector.load %arg10[%c0_57, %c0_58, %c0_59] : memref<2x64x32xbf16, #tpu.memory_space<vmem>>, vector<1x64x32xbf16>
    %171 = vector.shape_cast %170 : vector<1x64x32xbf16> to vector<64x32xbf16>
    %cst_60 = arith.constant dense<0.000000e+00> : vector<32x32xf32>
    %172 = tpu.matmul %169, %171, %cst_60 {dimension_numbers = #tpu.dot_dimension_numbers<[1], [0], [0], [1], [0, 0, 1, 1], [], []>} : vector<32x64xbf16>, vector<64x32xbf16>, vector<32x32xf32> -> vector<32x32xf32>
    %173 = arith.addf %151, %172 : vector<32x32xf32>
    %174 = arith.mulf %173, %173 : vector<32x32xf32>
    %cst_61 = arith.constant dense<0.000000e+00> : vector<32xf32>
    %175 = vector.multi_reduction <add>, %174, %cst_61 [1] : vector<32x32xf32> to vector<32xf32>
    %176 = vector.shape_cast %175 : vector<32xf32> to vector<32x1xf32>
    %cst_62 = arith.constant 3.200000e+01 : f32
    %177 = vector.broadcast %cst_62 : f32 to vector<32x1xf32>
    %178 = arith.divf %176, %177 : vector<32x1xf32>
    %cst_63 = arith.constant 9.99999997E-7 : f32
    %179 = vector.broadcast %cst_63 : f32 to vector<32x1xf32>
    %180 = arith.addf %178, %179 : vector<32x1xf32>
    %181 = math.rsqrt %180 : vector<32x1xf32>
    %182 = vector.broadcast %181 : vector<32x1xf32> to vector<32x32xf32>
    %183 = arith.mulf %173, %182 : vector<32x32xf32>
    %184 = arith.truncf %183 : vector<32x32xf32> to vector<32x32xbf16>
    %c1_64 = arith.constant 1 : index
    %c0_65 = arith.constant 0 : index
    %c0_66 = arith.constant 0 : index
    %185 = vector.load %arg7[%c1_64, %c0_65, %c0_66] : memref<2x32x96xbf16, #tpu.memory_space<vmem>>, vector<1x32x96xbf16>
    %186 = vector.shape_cast %185 : vector<1x32x96xbf16> to vector<32x96xbf16>
    %cst_67 = arith.constant dense<0.000000e+00> : vector<32x96xf32>
    %187 = tpu.matmul %184, %186, %cst_67 {dimension_numbers = #tpu.dot_dimension_numbers<[1], [0], [0], [1], [0, 0, 1, 1], [], []>} : vector<32x32xbf16>, vector<32x96xbf16>, vector<32x96xf32> -> vector<32x96xf32>
    %188 = vector.extract_strided_slice %187 {offsets = [0, 0], sizes = [32, 16], strides = [1, 1]} : vector<32x96xf32> to vector<32x16xf32>
    %189 = arith.mulf %188, %188 : vector<32x16xf32>
    %cst_68 = arith.constant dense<0.000000e+00> : vector<32xf32>
    %190 = vector.multi_reduction <add>, %189, %cst_68 [1] : vector<32x16xf32> to vector<32xf32>
    %191 = vector.shape_cast %190 : vector<32xf32> to vector<32x1xf32>
    %cst_69 = arith.constant 1.600000e+01 : f32
    %192 = vector.broadcast %cst_69 : f32 to vector<32x1xf32>
    %193 = arith.divf %191, %192 : vector<32x1xf32>
    %cst_70 = arith.constant 9.99999997E-7 : f32
    %194 = vector.broadcast %cst_70 : f32 to vector<32x1xf32>
    %195 = arith.addf %193, %194 : vector<32x1xf32>
    %196 = math.rsqrt %195 : vector<32x1xf32>
    %197 = vector.broadcast %196 : vector<32x1xf32> to vector<32x16xf32>
    %198 = arith.mulf %188, %197 : vector<32x16xf32>
    %199 = vector.extract_strided_slice %187 {offsets = [0, 32], sizes = [32, 16], strides = [1, 1]} : vector<32x96xf32> to vector<32x16xf32>
    %200 = arith.mulf %199, %199 : vector<32x16xf32>
    %cst_71 = arith.constant dense<0.000000e+00> : vector<32xf32>
    %201 = vector.multi_reduction <add>, %200, %cst_71 [1] : vector<32x16xf32> to vector<32xf32>
    %202 = vector.shape_cast %201 : vector<32xf32> to vector<32x1xf32>
    %cst_72 = arith.constant 1.600000e+01 : f32
    %203 = vector.broadcast %cst_72 : f32 to vector<32x1xf32>
    %204 = arith.divf %202, %203 : vector<32x1xf32>
    %cst_73 = arith.constant 9.99999997E-7 : f32
    %205 = vector.broadcast %cst_73 : f32 to vector<32x1xf32>
    %206 = arith.addf %204, %205 : vector<32x1xf32>
    %207 = math.rsqrt %206 : vector<32x1xf32>
    %208 = vector.broadcast %207 : vector<32x1xf32> to vector<32x16xf32>
    %209 = arith.mulf %199, %208 : vector<32x16xf32>
    %210 = vector.extract_strided_slice %187 {offsets = [0, 64], sizes = [32, 16], strides = [1, 1]} : vector<32x96xf32> to vector<32x16xf32>
    %c0_74 = arith.constant 0 : index
    %c0_75 = arith.constant 0 : index
    %c0_76 = arith.constant 0 : index
    %211 = vector.load %arg2[%c0_74, %c0_75, %c0_76] : memref<2x32x8xf32, #tpu.memory_space<vmem>>, vector<1x32x8xf32>
    %212 = vector.shape_cast %211 : vector<1x32x8xf32> to vector<32x8xf32>
    %c0_77 = arith.constant 0 : index
    %c0_78 = arith.constant 0 : index
    %c0_79 = arith.constant 0 : index
    %213 = vector.load %arg3[%c0_77, %c0_78, %c0_79] : memref<2x32x8xf32, #tpu.memory_space<vmem>>, vector<1x32x8xf32>
    %214 = vector.shape_cast %213 : vector<1x32x8xf32> to vector<32x8xf32>
    %215 = vector.extract_strided_slice %198 {offsets = [0, 0], sizes = [32, 8], strides = [1, 1]} : vector<32x16xf32> to vector<32x8xf32>
    %216 = vector.extract_strided_slice %198 {offsets = [0, 8], sizes = [32, 8], strides = [1, 1]} : vector<32x16xf32> to vector<32x8xf32>
    %217 = arith.mulf %215, %212 : vector<32x8xf32>
    %218 = arith.mulf %216, %214 : vector<32x8xf32>
    %219 = arith.subf %217, %218 : vector<32x8xf32>
    %220 = arith.mulf %215, %214 : vector<32x8xf32>
    %221 = arith.mulf %216, %212 : vector<32x8xf32>
    %222 = arith.addf %220, %221 : vector<32x8xf32>
    %223 = tpu.concatenate %219, %222 in 1 : vector<32x8xf32>, vector<32x8xf32> -> vector<32x16xf32>
    %cst_80 = arith.constant 2.500000e-01 : f32
    %224 = vector.broadcast %cst_80 : f32 to vector<32x16xf32>
    %225 = arith.mulf %223, %224 : vector<32x16xf32>
    %226 = vector.extract_strided_slice %209 {offsets = [0, 0], sizes = [32, 8], strides = [1, 1]} : vector<32x16xf32> to vector<32x8xf32>
    %227 = vector.extract_strided_slice %209 {offsets = [0, 8], sizes = [32, 8], strides = [1, 1]} : vector<32x16xf32> to vector<32x8xf32>
    %228 = arith.mulf %226, %212 : vector<32x8xf32>
    %229 = arith.mulf %227, %214 : vector<32x8xf32>
    %230 = arith.subf %228, %229 : vector<32x8xf32>
    %231 = arith.mulf %226, %214 : vector<32x8xf32>
    %232 = arith.mulf %227, %212 : vector<32x8xf32>
    %233 = arith.addf %231, %232 : vector<32x8xf32>
    %234 = tpu.concatenate %230, %233 in 1 : vector<32x8xf32>, vector<32x8xf32> -> vector<32x16xf32>
    %235 = arith.truncf %225 : vector<32x16xf32> to vector<32x16xbf16>
    %236 = arith.truncf %234 : vector<32x16xf32> to vector<32x16xbf16>
    %cst_81 = arith.constant dense<0.000000e+00> : vector<32x32xf32>
    %237 = tpu.matmul %235, %236, %cst_81 {dimension_numbers = #tpu.dot_dimension_numbers<[1], [1], [0], [0], [0, 0, 1, 0], [], []>} : vector<32x16xbf16>, vector<32x16xbf16>, vector<32x32xf32> -> vector<32x32xf32>
    %238 = arith.addf %237, %3 : vector<32x32xf32>
    %cst_82 = arith.constant dense<0xFF800000> : vector<32xf32>
    %239 = vector.multi_reduction <maximumf>, %238, %cst_82 [1] : vector<32x32xf32> to vector<32xf32>
    %240 = vector.shape_cast %239 : vector<32xf32> to vector<32x1xf32>
    %241 = vector.broadcast %240 : vector<32x1xf32> to vector<32x32xf32>
    %242 = arith.subf %238, %241 : vector<32x32xf32>
    %243 = math.exp %242 : vector<32x32xf32>
    %cst_83 = arith.constant dense<0.000000e+00> : vector<32xf32>
    %244 = vector.multi_reduction <add>, %243, %cst_83 [1] : vector<32x32xf32> to vector<32xf32>
    %245 = vector.shape_cast %244 : vector<32xf32> to vector<32x1xf32>
    %246 = tpu.reciprocal %245 {approx = true} : vector<32x1xf32> -> vector<32x1xf32>
    %247 = vector.broadcast %246 : vector<32x1xf32> to vector<32x32xf32>
    %248 = arith.mulf %243, %247 : vector<32x32xf32>
    %249 = arith.truncf %248 : vector<32x32xf32> to vector<32x32xbf16>
    %250 = arith.truncf %210 : vector<32x16xf32> to vector<32x16xbf16>
    %cst_84 = arith.constant dense<0.000000e+00> : vector<32x16xf32>
    %251 = tpu.matmul %249, %250, %cst_84 {dimension_numbers = #tpu.dot_dimension_numbers<[1], [0], [0], [1], [0, 0, 1, 1], [], []>} : vector<32x32xbf16>, vector<32x16xbf16>, vector<32x16xf32> -> vector<32x16xf32>
    %252 = vector.extract_strided_slice %187 {offsets = [0, 16], sizes = [32, 16], strides = [1, 1]} : vector<32x96xf32> to vector<32x16xf32>
    %253 = arith.mulf %252, %252 : vector<32x16xf32>
    %cst_85 = arith.constant dense<0.000000e+00> : vector<32xf32>
    %254 = vector.multi_reduction <add>, %253, %cst_85 [1] : vector<32x16xf32> to vector<32xf32>
    %255 = vector.shape_cast %254 : vector<32xf32> to vector<32x1xf32>
    %cst_86 = arith.constant 1.600000e+01 : f32
    %256 = vector.broadcast %cst_86 : f32 to vector<32x1xf32>
    %257 = arith.divf %255, %256 : vector<32x1xf32>
    %cst_87 = arith.constant 9.99999997E-7 : f32
    %258 = vector.broadcast %cst_87 : f32 to vector<32x1xf32>
    %259 = arith.addf %257, %258 : vector<32x1xf32>
    %260 = math.rsqrt %259 : vector<32x1xf32>
    %261 = vector.broadcast %260 : vector<32x1xf32> to vector<32x16xf32>
    %262 = arith.mulf %252, %261 : vector<32x16xf32>
    %263 = vector.extract_strided_slice %187 {offsets = [0, 48], sizes = [32, 16], strides = [1, 1]} : vector<32x96xf32> to vector<32x16xf32>
    %264 = arith.mulf %263, %263 : vector<32x16xf32>
    %cst_88 = arith.constant dense<0.000000e+00> : vector<32xf32>
    %265 = vector.multi_reduction <add>, %264, %cst_88 [1] : vector<32x16xf32> to vector<32xf32>
    %266 = vector.shape_cast %265 : vector<32xf32> to vector<32x1xf32>
    %cst_89 = arith.constant 1.600000e+01 : f32
    %267 = vector.broadcast %cst_89 : f32 to vector<32x1xf32>
    %268 = arith.divf %266, %267 : vector<32x1xf32>
    %cst_90 = arith.constant 9.99999997E-7 : f32
    %269 = vector.broadcast %cst_90 : f32 to vector<32x1xf32>
    %270 = arith.addf %268, %269 : vector<32x1xf32>
    %271 = math.rsqrt %270 : vector<32x1xf32>
    %272 = vector.broadcast %271 : vector<32x1xf32> to vector<32x16xf32>
    %273 = arith.mulf %263, %272 : vector<32x16xf32>
    %274 = vector.extract_strided_slice %187 {offsets = [0, 80], sizes = [32, 16], strides = [1, 1]} : vector<32x96xf32> to vector<32x16xf32>
    %c1_91 = arith.constant 1 : index
    %c0_92 = arith.constant 0 : index
    %c0_93 = arith.constant 0 : index
    %275 = vector.load %arg2[%c1_91, %c0_92, %c0_93] : memref<2x32x8xf32, #tpu.memory_space<vmem>>, vector<1x32x8xf32>
    %276 = vector.shape_cast %275 : vector<1x32x8xf32> to vector<32x8xf32>
    %c1_94 = arith.constant 1 : index
    %c0_95 = arith.constant 0 : index
    %c0_96 = arith.constant 0 : index
    %277 = vector.load %arg3[%c1_94, %c0_95, %c0_96] : memref<2x32x8xf32, #tpu.memory_space<vmem>>, vector<1x32x8xf32>
    %278 = vector.shape_cast %277 : vector<1x32x8xf32> to vector<32x8xf32>
    %279 = vector.extract_strided_slice %262 {offsets = [0, 0], sizes = [32, 8], strides = [1, 1]} : vector<32x16xf32> to vector<32x8xf32>
    %280 = vector.extract_strided_slice %262 {offsets = [0, 8], sizes = [32, 8], strides = [1, 1]} : vector<32x16xf32> to vector<32x8xf32>
    %281 = arith.mulf %279, %276 : vector<32x8xf32>
    %282 = arith.mulf %280, %278 : vector<32x8xf32>
    %283 = arith.subf %281, %282 : vector<32x8xf32>
    %284 = arith.mulf %279, %278 : vector<32x8xf32>
    %285 = arith.mulf %280, %276 : vector<32x8xf32>
    %286 = arith.addf %284, %285 : vector<32x8xf32>
    %287 = tpu.concatenate %283, %286 in 1 : vector<32x8xf32>, vector<32x8xf32> -> vector<32x16xf32>
    %cst_97 = arith.constant 2.500000e-01 : f32
    %288 = vector.broadcast %cst_97 : f32 to vector<32x16xf32>
    %289 = arith.mulf %287, %288 : vector<32x16xf32>
    %290 = vector.extract_strided_slice %273 {offsets = [0, 0], sizes = [32, 8], strides = [1, 1]} : vector<32x16xf32> to vector<32x8xf32>
    %291 = vector.extract_strided_slice %273 {offsets = [0, 8], sizes = [32, 8], strides = [1, 1]} : vector<32x16xf32> to vector<32x8xf32>
    %292 = arith.mulf %290, %276 : vector<32x8xf32>
    %293 = arith.mulf %291, %278 : vector<32x8xf32>
    %294 = arith.subf %292, %293 : vector<32x8xf32>
    %295 = arith.mulf %290, %278 : vector<32x8xf32>
    %296 = arith.mulf %291, %276 : vector<32x8xf32>
    %297 = arith.addf %295, %296 : vector<32x8xf32>
    %298 = tpu.concatenate %294, %297 in 1 : vector<32x8xf32>, vector<32x8xf32> -> vector<32x16xf32>
    %299 = arith.truncf %289 : vector<32x16xf32> to vector<32x16xbf16>
    %300 = arith.truncf %298 : vector<32x16xf32> to vector<32x16xbf16>
    %cst_98 = arith.constant dense<0.000000e+00> : vector<32x32xf32>
    %301 = tpu.matmul %299, %300, %cst_98 {dimension_numbers = #tpu.dot_dimension_numbers<[1], [1], [0], [0], [0, 0, 1, 0], [], []>} : vector<32x16xbf16>, vector<32x16xbf16>, vector<32x32xf32> -> vector<32x32xf32>
    %302 = arith.addf %301, %3 : vector<32x32xf32>
    %cst_99 = arith.constant dense<0xFF800000> : vector<32xf32>
    %303 = vector.multi_reduction <maximumf>, %302, %cst_99 [1] : vector<32x32xf32> to vector<32xf32>
    %304 = vector.shape_cast %303 : vector<32xf32> to vector<32x1xf32>
    %305 = vector.broadcast %304 : vector<32x1xf32> to vector<32x32xf32>
    %306 = arith.subf %302, %305 : vector<32x32xf32>
    %307 = math.exp %306 : vector<32x32xf32>
    %cst_100 = arith.constant dense<0.000000e+00> : vector<32xf32>
    %308 = vector.multi_reduction <add>, %307, %cst_100 [1] : vector<32x32xf32> to vector<32xf32>
    %309 = vector.shape_cast %308 : vector<32xf32> to vector<32x1xf32>
    %310 = tpu.reciprocal %309 {approx = true} : vector<32x1xf32> -> vector<32x1xf32>
    %311 = vector.broadcast %310 : vector<32x1xf32> to vector<32x32xf32>
    %312 = arith.mulf %307, %311 : vector<32x32xf32>
    %313 = arith.truncf %312 : vector<32x32xf32> to vector<32x32xbf16>
    %314 = arith.truncf %274 : vector<32x16xf32> to vector<32x16xbf16>
    %cst_101 = arith.constant dense<0.000000e+00> : vector<32x16xf32>
    %315 = tpu.matmul %313, %314, %cst_101 {dimension_numbers = #tpu.dot_dimension_numbers<[1], [0], [0], [1], [0, 0, 1, 1], [], []>} : vector<32x32xbf16>, vector<32x16xbf16>, vector<32x16xf32> -> vector<32x16xf32>
    %316 = tpu.concatenate %251, %315 in 1 : vector<32x16xf32>, vector<32x16xf32> -> vector<32x32xf32>
    %317 = arith.truncf %316 : vector<32x32xf32> to vector<32x32xbf16>
    %c1_102 = arith.constant 1 : index
    %c0_103 = arith.constant 0 : index
    %c0_104 = arith.constant 0 : index
    %318 = vector.load %arg8[%c1_102, %c0_103, %c0_104] : memref<2x32x32xbf16, #tpu.memory_space<vmem>>, vector<1x32x32xbf16>
    %319 = vector.shape_cast %318 : vector<1x32x32xbf16> to vector<32x32xbf16>
    %cst_105 = arith.constant dense<0.000000e+00> : vector<32x32xf32>
    %320 = tpu.matmul %317, %319, %cst_105 {dimension_numbers = #tpu.dot_dimension_numbers<[1], [0], [0], [1], [0, 0, 1, 1], [], []>} : vector<32x32xbf16>, vector<32x32xbf16>, vector<32x32xf32> -> vector<32x32xf32>
    %321 = arith.addf %173, %320 : vector<32x32xf32>
    %322 = arith.mulf %321, %321 : vector<32x32xf32>
    %cst_106 = arith.constant dense<0.000000e+00> : vector<32xf32>
    %323 = vector.multi_reduction <add>, %322, %cst_106 [1] : vector<32x32xf32> to vector<32xf32>
    %324 = vector.shape_cast %323 : vector<32xf32> to vector<32x1xf32>
    %cst_107 = arith.constant 3.200000e+01 : f32
    %325 = vector.broadcast %cst_107 : f32 to vector<32x1xf32>
    %326 = arith.divf %324, %325 : vector<32x1xf32>
    %cst_108 = arith.constant 9.99999997E-7 : f32
    %327 = vector.broadcast %cst_108 : f32 to vector<32x1xf32>
    %328 = arith.addf %326, %327 : vector<32x1xf32>
    %329 = math.rsqrt %328 : vector<32x1xf32>
    %330 = vector.broadcast %329 : vector<32x1xf32> to vector<32x32xf32>
    %331 = arith.mulf %321, %330 : vector<32x32xf32>
    %332 = arith.truncf %331 : vector<32x32xf32> to vector<32x32xbf16>
    %c1_109 = arith.constant 1 : index
    %c0_110 = arith.constant 0 : index
    %c0_111 = arith.constant 0 : index
    %333 = vector.load %arg9[%c1_109, %c0_110, %c0_111] : memref<2x32x64xbf16, #tpu.memory_space<vmem>>, vector<1x32x64xbf16>
    %334 = vector.shape_cast %333 : vector<1x32x64xbf16> to vector<32x64xbf16>
    %cst_112 = arith.constant dense<0.000000e+00> : vector<32x64xf32>
    %335 = tpu.matmul %332, %334, %cst_112 {dimension_numbers = #tpu.dot_dimension_numbers<[1], [0], [0], [1], [0, 0, 1, 1], [], []>} : vector<32x32xbf16>, vector<32x64xbf16>, vector<32x64xf32> -> vector<32x64xf32>
    %cst_113 = arith.constant 0.000000e+00 : f32
    %336 = vector.broadcast %cst_113 : f32 to vector<32x64xf32>
    %337 = arith.maximumf %335, %336 : vector<32x64xf32>
    %338 = arith.mulf %337, %337 : vector<32x64xf32>
    %339 = arith.truncf %338 : vector<32x64xf32> to vector<32x64xbf16>
    %c1_114 = arith.constant 1 : index
    %c0_115 = arith.constant 0 : index
    %c0_116 = arith.constant 0 : index
    %340 = vector.load %arg10[%c1_114, %c0_115, %c0_116] : memref<2x64x32xbf16, #tpu.memory_space<vmem>>, vector<1x64x32xbf16>
    %341 = vector.shape_cast %340 : vector<1x64x32xbf16> to vector<64x32xbf16>
    %cst_117 = arith.constant dense<0.000000e+00> : vector<32x32xf32>
    %342 = tpu.matmul %339, %341, %cst_117 {dimension_numbers = #tpu.dot_dimension_numbers<[1], [0], [0], [1], [0, 0, 1, 1], [], []>} : vector<32x64xbf16>, vector<64x32xbf16>, vector<32x32xf32> -> vector<32x32xf32>
    %343 = arith.addf %321, %342 : vector<32x32xf32>
    %c0_118 = arith.constant 0 : index
    %c0_119 = arith.constant 0 : index
    %344 = vector.load %arg5[%c0_118, %c0_119] : memref<2x32xbf16, #tpu.memory_space<vmem>>, vector<2x32xbf16>
    %345 = arith.truncf %343 : vector<32x32xf32> to vector<32x32xbf16>
    %cst_120 = arith.constant dense<0.000000e+00> : vector<2x32xf32>
    %346 = tpu.matmul %344, %345, %cst_120 {dimension_numbers = #tpu.dot_dimension_numbers<[1], [0], [0], [1], [0, 0, 1, 1], [], []>} : vector<2x32xbf16>, vector<32x32xbf16>, vector<2x32xf32> -> vector<2x32xf32>
    %347 = arith.mulf %346, %346 : vector<2x32xf32>
    %cst_121 = arith.constant dense<0.000000e+00> : vector<2xf32>
    %348 = vector.multi_reduction <add>, %347, %cst_121 [1] : vector<2x32xf32> to vector<2xf32>
    %349 = vector.shape_cast %348 : vector<2xf32> to vector<2x1xf32>
    %cst_122 = arith.constant 3.200000e+01 : f32
    %350 = vector.broadcast %cst_122 : f32 to vector<2x1xf32>
    %351 = arith.divf %349, %350 : vector<2x1xf32>
    %cst_123 = arith.constant 9.99999997E-7 : f32
    %352 = vector.broadcast %cst_123 : f32 to vector<2x1xf32>
    %353 = arith.addf %351, %352 : vector<2x1xf32>
    %354 = math.rsqrt %353 : vector<2x1xf32>
    %355 = vector.broadcast %354 : vector<2x1xf32> to vector<2x32xf32>
    %356 = arith.mulf %346, %355 : vector<2x32xf32>
    %357 = arith.truncf %356 : vector<2x32xf32> to vector<2x32xbf16>
    %c0_124 = arith.constant 0 : index
    %c0_125 = arith.constant 0 : index
    %358 = vector.load %arg11[%c0_124, %c0_125] : memref<32x128xbf16, #tpu.memory_space<vmem>>, vector<32x128xbf16>
    %cst_126 = arith.constant dense<0.000000e+00> : vector<2x128xf32>
    %359 = tpu.matmul %357, %358, %cst_126 {dimension_numbers = #tpu.dot_dimension_numbers<[1], [0], [0], [1], [0, 0, 1, 1], [], []>} : vector<2x32xbf16>, vector<32x128xbf16>, vector<2x128xf32> -> vector<2x128xf32>
    %c0_127 = arith.constant 0 : index
    %c0_128 = arith.constant 0 : index
    %360 = vector.load %arg12[%c0_127, %c0_128] : memref<2x128xf32, #tpu.memory_space<vmem>>, vector<2x128xf32>
    tpu.vector_store %arg12[%c0_127, %c0_128], %359 {strides = array<i32>} : memref<2x128xf32, #tpu.memory_space<vmem>>, vector<2x128xf32>,
    return
  }
  func.func @transform_0(%arg0: i32) -> (i32, i32) {
    %c0_i32 = arith.constant 0 : i32
    %c0_i32_0 = arith.constant 0 : i32
    return %arg0, %c0_i32 : i32, i32
  }
  func.func @transform_1(%arg0: i32) -> (i32, i32, i32) {
    %c0_i32 = arith.constant 0 : i32
    %c0_i32_0 = arith.constant 0 : i32
    %c0_i32_1 = arith.constant 0 : i32
    %c0_i32_2 = arith.constant 0 : i32
    return %c0_i32, %c0_i32_0, %c0_i32_1 : i32, i32, i32
  }
  func.func @transform_2(%arg0: i32) -> (i32, i32, i32) {
    %c0_i32 = arith.constant 0 : i32
    %c0_i32_0 = arith.constant 0 : i32
    %c0_i32_1 = arith.constant 0 : i32
    %c0_i32_2 = arith.constant 0 : i32
    return %c0_i32, %c0_i32_0, %c0_i32_1 : i32, i32, i32
  }
  func.func @transform_3(%arg0: i32) -> (i32, i32) {
    %c0_i32 = arith.constant 0 : i32
    %c0_i32_0 = arith.constant 0 : i32
    %c0_i32_1 = arith.constant 0 : i32
    return %c0_i32, %c0_i32_0 : i32, i32
  }
  func.func @transform_4(%arg0: i32) -> (i32, i32) {
    %c0_i32 = arith.constant 0 : i32
    %c0_i32_0 = arith.constant 0 : i32
    %c0_i32_1 = arith.constant 0 : i32
    return %c0_i32, %c0_i32_0 : i32, i32
  }
  func.func @transform_5(%arg0: i32) -> (i32, i32) {
    %c0_i32 = arith.constant 0 : i32
    %c0_i32_0 = arith.constant 0 : i32
    %c0_i32_1 = arith.constant 0 : i32
    return %c0_i32, %c0_i32_0 : i32, i32
  }
  func.func @transform_6(%arg0: i32) -> (i32, i32, i32) {
    %c0_i32 = arith.constant 0 : i32
    %c0_i32_0 = arith.constant 0 : i32
    %c0_i32_1 = arith.constant 0 : i32
    %c0_i32_2 = arith.constant 0 : i32
    return %c0_i32, %c0_i32_0, %c0_i32_1 : i32, i32, i32
  }
  func.func @transform_7(%arg0: i32) -> (i32, i32, i32) {
    %c0_i32 = arith.constant 0 : i32
    %c0_i32_0 = arith.constant 0 : i32
    %c0_i32_1 = arith.constant 0 : i32
    %c0_i32_2 = arith.constant 0 : i32
    return %c0_i32, %c0_i32_0, %c0_i32_1 : i32, i32, i32
  }
  func.func @transform_8(%arg0: i32) -> (i32, i32, i32) {
    %c0_i32 = arith.constant 0 : i32
    %c0_i32_0 = arith.constant 0 : i32
    %c0_i32_1 = arith.constant 0 : i32
    %c0_i32_2 = arith.constant 0 : i32
    return %c0_i32, %c0_i32_0, %c0_i32_1 : i32, i32, i32
  }
  func.func @transform_9(%arg0: i32) -> (i32, i32, i32) {
    %c0_i32 = arith.constant 0 : i32
    %c0_i32_0 = arith.constant 0 : i32
    %c0_i32_1 = arith.constant 0 : i32
    %c0_i32_2 = arith.constant 0 : i32
    return %c0_i32, %c0_i32_0, %c0_i32_1 : i32, i32, i32
  }
  func.func @transform_10(%arg0: i32) -> (i32, i32) {
    %c0_i32 = arith.constant 0 : i32
    %c0_i32_0 = arith.constant 0 : i32
    %c0_i32_1 = arith.constant 0 : i32
    return %c0_i32, %c0_i32_0 : i32, i32
  }
  func.func @transform_11(%arg0: i32) -> (i32, i32) {
    %c0_i32 = arith.constant 0 : i32
    %c0_i32_0 = arith.constant 0 : i32
    return %arg0, %c0_i32 : i32, i32
  }
}

</mosaic_0001>

<llo_original>
// kernel: tpu_custom_call.1
$region0: #{tpu_custom_call.1}
  #allocation0 [shape = 'u32[]', space=smem, size = 0x4, offset = 0x4, fixed_abs, tag = 'smem constant byte address 0x4 - core index']
  #allocation1 [shape = 'u32[144,128]{1,0:T(1,128)}', space=vmem, size = 0x12000, scoped, tag = 'internal scratch']
  %s0 = inlined_call_operand.vmem [shape: bf16[32,48], index: 0, kind: input, shape index: {}]
  %s1 = inlined_call_operand.vmem [shape: f32[2,32,8], index: 1, kind: input, shape index: {}]
  %s2 = inlined_call_operand.vmem [shape: f32[2,32,8], index: 2, kind: input, shape index: {}]
  %s3 = inlined_call_operand.vmem [shape: f32[32,32], index: 3, kind: input, shape index: {}]
  %s4 = inlined_call_operand.vmem [shape: bf16[2,32], index: 4, kind: input, shape index: {}]
  %s5 = inlined_call_operand.vmem [shape: bf16[48,32], index: 5, kind: input, shape index: {}]
  %s6 = inlined_call_operand.vmem [shape: bf16[2,32,96], index: 6, kind: input, shape index: {}]
  %s7 = inlined_call_operand.vmem [shape: bf16[2,32,32], index: 7, kind: input, shape index: {}]
  %s8 = inlined_call_operand.vmem [shape: bf16[2,32,64], index: 8, kind: input, shape index: {}]
  %s9 = inlined_call_operand.vmem [shape: bf16[2,64,32], index: 9, kind: input, shape index: {}]
  %s10 = inlined_call_operand.vmem [shape: bf16[32,128], index: 10, kind: input, shape index: {}]
  %s11 = inlined_call_operand.hbm [shape: f32[2,128], index: 11, kind: output, shape index: {}]
  %s12 = sld [smem:[#allocation0]]
  $region54: #{tpu_custom_call.1} parent=0
    _
  %s14 = ssub.s32 1, %s12
  %s15 = scalar_select 0, %s14, %s12
  $region1: #{tpu_custom_call.1} parent=0
    #allocation2 [shape = 'u8[1024]{0}', space=vmem, size = 0x400, scoped, tag = 'output window, operand 0, single buffered']
    #allocation3 [shape = 's32[1]{0}', space=sflag, size = 0x4, scoped, tag = 'scoped memory for tpu_custom_call.1']
    %16 = vsyncpa [#allocation3], 0
    // Predicated region
    $region2: #{tpu_custom_call.1} parent=1 // pred_check
      _
    $region3: #{tpu_custom_call.1} parent=1 // pred_check_branch
      %18 = sbr.rel (0) target = $region5
    $region4: #{tpu_custom_call.1} parent=1 // pred_region
      _
    $region5: #{tpu_custom_call.1} parent=1 // pred_fallthru
      _
    // Predicated region
    $region6: #{tpu_custom_call.1} parent=1 // pred_check
      _
    $region7: #{tpu_custom_call.1} parent=1 // pred_check_branch
      %20 = sbr.rel (0) target = $region9
    $region8: #{tpu_custom_call.1} parent=1 // pred_region
      _
    $region9: #{tpu_custom_call.1} parent=1 // pred_fallthru
      _
    // Predicated region
    $region10: #{tpu_custom_call.1} parent=1 // pred_check
      _
    $region11: #{tpu_custom_call.1} parent=1 // pred_check_branch
      %22 = sbr.rel (0) target = $region13
    $region12: #{tpu_custom_call.1} parent=1 // pred_region
      _
    $region13: #{tpu_custom_call.1} parent=1 // pred_fallthru
      _
    // Predicated region
    $region14: #{tpu_custom_call.1} parent=1 // pred_check
      _
    $region15: #{tpu_custom_call.1} parent=1 // pred_check_branch
      %24 = sbr.rel (0) target = $region17
    $region16: #{tpu_custom_call.1} parent=1 // pred_region
      _
    $region17: #{tpu_custom_call.1} parent=1 // pred_fallthru
      _
    // Predicated region
    $region18: #{tpu_custom_call.1} parent=1 // pred_check
      _
    $region19: #{tpu_custom_call.1} parent=1 // pred_check_branch
      %26 = sbr.rel (0) target = $region21
    $region20: #{tpu_custom_call.1} parent=1 // pred_region
      _
    $region21: #{tpu_custom_call.1} parent=1 // pred_fallthru
      _
    // Predicated region
    $region22: #{tpu_custom_call.1} parent=1 // pred_check
      _
    $region23: #{tpu_custom_call.1} parent=1 // pred_check_branch
      %28 = sbr.rel (0) target = $region25
    $region24: #{tpu_custom_call.1} parent=1 // pred_region
      _
    $region25: #{tpu_custom_call.1} parent=1 // pred_fallthru
      _
    // Predicated region
    $region26: #{tpu_custom_call.1} parent=1 // pred_check
      _
    $region27: #{tpu_custom_call.1} parent=1 // pred_check_branch
      %30 = sbr.rel (0) target = $region29
    $region28: #{tpu_custom_call.1} parent=1 // pred_region
      _
    $region29: #{tpu_custom_call.1} parent=1 // pred_fallthru
      _
    // Predicated region
    $region30: #{tpu_custom_call.1} parent=1 // pred_check
      _
    $region31: #{tpu_custom_call.1} parent=1 // pred_check_branch
      %32 = sbr.rel (0) target = $region33
    $region32: #{tpu_custom_call.1} parent=1 // pred_region
      _
    $region33: #{tpu_custom_call.1} parent=1 // pred_fallthru
      _
    // Predicated region
    $region34: #{tpu_custom_call.1} parent=1 // pred_check
      _
    $region35: #{tpu_custom_call.1} parent=1 // pred_check_branch
      %34 = sbr.rel (0) target = $region37
    $region36: #{tpu_custom_call.1} parent=1 // pred_region
      _
    $region37: #{tpu_custom_call.1} parent=1 // pred_fallthru
      _
    // Predicated region
    $region38: #{tpu_custom_call.1} parent=1 // pred_check
      _
    $region39: #{tpu_custom_call.1} parent=1 // pred_check_branch
      %36 = sbr.rel (0) target = $region41
    $region40: #{tpu_custom_call.1} parent=1 // pred_region
      _
    $region41: #{tpu_custom_call.1} parent=1 // pred_fallthru
      _
    // Predicated region
    $region42: #{tpu_custom_call.1} parent=1 // pred_check
      _
    $region43: #{tpu_custom_call.1} parent=1 // pred_check_branch
      %38 = sbr.rel (0) target = $region45
    $region44: #{tpu_custom_call.1} parent=1 // pred_region
      _
    $region45: #{tpu_custom_call.1} parent=1 // pred_fallthru
      _
    %v40 = vld [vmem:[%s0] sm:$0xf]
    %v41 = vld [vmem:[%s0 + $0x4] sm:$0xf]
    %v42 = vld [vmem:[%s0 + $0x8] sm:$0xf]
    %v43 = vld [vmem:[%s0 + $0xc] sm:$0xf]
    %v44 = vld [vmem:[%s5] sm:$0xf]
    %v45 = vld [vmem:[%s5 + $0x4] sm:$0xf]
    %v46 = vld [vmem:[%s5 + $0x8] sm:$0xf]
    %v47 = vld [vmem:[%s5 + $0xc] sm:$0xf]
    %v48 = vld [vmem:[%s5 + $0x10] sm:$0xf]
    %v49 = vld [vmem:[%s5 + $0x14] sm:$0xf]
    %v54 = vunpack.c.l.b16 %v40
    %v55 = vunpack.c.l.b16 %v41
    %v56 = vunpack.c.l.b16 %v42
    %v57 = vunpack.c.l.b16 %v43
    %v58 = vpack.c.b16 %v55, %v54
    %v59 = vpack.c.b16 %v57, %v56
    %v66 = vunpack.c.l.b16 %v44
    %v67 = vunpack.c.l.b16 %v45
    %v68 = vunpack.c.l.b16 %v46
    %v69 = vunpack.c.l.b16 %v47
    %v70 = vunpack.c.l.b16 %v48
    %v71 = vunpack.c.l.b16 %v49
    %v72 = vpack.c.b16 %v67, %v66
    %v73 = vpack.c.b16 %v69, %v68
    %v74 = vpack.c.b16 %v71, %v70
    %vm78 = vcmask 392192
    %v80 = vsel %vm78, %v58, 0
    %v83 = vsel %vm78, %v59, 0
    %85 = vmatprep.subr.bf16.mxu0 0
    %86 = vmatpush1.bf16.msra.mxu0 %v72
    %87 = vmatprep.subr.bf16.mxu0 0
    %88 = vmatpush1.bf16.msra.mxu0 %v73
    %89 = vmatprep.subr.bf16.mxu0 0
    %90 = vmatpush1.bf16.msra.mxu0 %v74
    %91 = vmatprep.subr.bf16.mxu0 0
    %92 = vmatpush1.bf16.msra.mxu0 0
    %93 = vmatprep.subr.bf16.mxu0 0
    %94 = vmatpush1.bf16.msra.mxu0 0
    %95 = vmatprep.subr.bf16.mxu0 0
    %96 = vmatpush1.bf16.msra.mxu0 0
    %97 = vmatprep.subr.bf16.mxu0 0
    %98 = vmatpush1.bf16.msra.mxu0 0
    %99 = vmatprep.subr.bf16.mxu0 0
    %100 = vmatpush1.bf16.msra.mxu0 0
    %101 = vmatprep.subr.bf16.mxu0 0
    %102 = vmatpush1.bf16.msra.mxu0 0
    %103 = vmatprep.subr.bf16.mxu0 0
    %104 = vmatpush1.bf16.msra.mxu0 0
    %105 = vmatprep.subr.bf16.mxu0 0
    %106 = vmatpush1.bf16.msra.mxu0 0
    %107 = vmatprep.subr.bf16.mxu0 0
    %108 = vmatpush1.bf16.msra.mxu0 0
    %109 = vmatprep.subr.bf16.mxu0 0
    %110 = vmatpush1.bf16.msra.mxu0 0
    %111 = vmatprep.subr.bf16.mxu0 0
    %112 = vmatpush1.bf16.msra.mxu0 0
    %113 = vmatprep.subr.bf16.mxu0 0
    %114 = vmatpush1.bf16.msra.mxu0 0
    %115 = vmatprep.subr.bf16.mxu0 0
    %116 = vmatpush1.bf16.msra.mxu0 0
    %117 = vmatprep.mubr.bf16.mxu0 0
    %118 = vmatmul.mubr.bf16.gmra.mrb[0].mxu0 %v80
    %v119 = vpop.f32.mrb[0].mxu0
    %v120 = vadd.f32 0.0, %v119
    %v121 = vpop.f32.mrb[0].mxu0
    %v122 = vpop.f32.mrb[0].mxu0
    %v123 = vadd.f32 0.0, %v122
    %v124 = vpop.f32.mrb[0].mxu0
    %125 = vmatprep.mubr.bf16.mxu0 0
    %126 = vmatmul.mubr.bf16.gmra.mrb[0].mxu0 %v83
    %v127 = vpop.f32.mrb[0].mxu0
    %v128 = vadd.f32 0.0, %v127
    %v129 = vpop.f32.mrb[0].mxu0
    %v130 = vpop.f32.mrb[0].mxu0
    %v131 = vadd.f32 0.0, %v130
    %v132 = vpop.f32.mrb[0].mxu0
    %133 = vdwg.mxu0
    %v134 = vld [vmem:[%s3] sm:$0xff]
    %v135 = vld [vmem:[%s3 + $0x8] sm:$0xff]
    %v136 = vld [vmem:[%s3 + $0x10] sm:$0xff]
    %v137 = vld [vmem:[%s3 + $0x18] sm:$0xff]
    %v138 = vmul.f32 %v120, %v120
    %v139 = vmul.f32 %v123, %v123
    %v140 = vmul.f32 %v128, %v128
    %v141 = vmul.f32 %v131, %v131
    %vm142 = vcmask 261120
    %v143 = vsel %vm142, %v138, 0.0
    %144 = vadd.xlane.f32.xlu0 %v143
    %v145 = vpop.xlane.xlu0 %144
    %v146 = vsel %vm142, %v139, 0.0
    %147 = vadd.xlane.f32.xlu0 %v146
    %v148 = vpop.xlane.xlu0 %147
    %v149 = vsel %vm142, %v140, 0.0
    %150 = vadd.xlane.f32.xlu0 %v149
    %v151 = vpop.xlane.xlu0 %150
    %v152 = vsel %vm142, %v141, 0.0
    %153 = vadd.xlane.f32.xlu0 %v152
    %v154 = vpop.xlane.xlu0 %153
    %v155 = vrcp.pop 32.0
    %v156 = vmul.f32 %v145, %v155
    %v157 = vmul.f32 %v148, %v155
    %v158 = vmul.f32 %v151, %v155
    %v159 = vmul.f32 %v154, %v155
    %v160 = vadd.f32 %v156, 1e-06
    %v161 = vadd.f32 %v157, 1e-06
    %v162 = vadd.f32 %v158, 1e-06
    %v163 = vadd.f32 %v159, 1e-06
    %v164 = vrsqrt.pop %v160
    %v165 = vrsqrt.pop %v161
    %v166 = vrsqrt.pop %v162
    %v167 = vrsqrt.pop %v163
    %v168 = vmul.f32 %v120, %v164
    %v169 = vmul.f32 %v123, %v165
    %v170 = vmul.f32 %v128, %v166
    %v171 = vmul.f32 %v131, %v167
    %v172 = vpack.c.bf16 %v169, %v168
    %v173 = vpack.c.bf16 %v171, %v170
    %v174 = vld [vmem:[%s6] sm:$0xf]
    %v175 = vld [vmem:[%s6 + $0x4] sm:$0xf]
    %v176 = vld [vmem:[%s6 + $0x8] sm:$0xf]
    %v177 = vld [vmem:[%s6 + $0xc] sm:$0xf]
    %v182 = vunpack.c.l.b16 %v174
    %v183 = vunpack.c.l.b16 %v175
    %v184 = vunpack.c.l.b16 %v176
    %v185 = vunpack.c.l.b16 %v177
    %v186 = vpack.c.b16 %v183, %v182
    %v187 = vpack.c.b16 %v185, %v184
    %v191 = vsel %vm142, %v172, 0
    %v194 = vsel %vm142, %v173, 0
    %196 = vmatprep.subr.bf16.mxu0 0
    %197 = vmatpush1.bf16.msra.mxu0 %v186
    %198 = vmatprep.subr.bf16.mxu0 0
    %199 = vmatpush1.bf16.msra.mxu0 %v187
    %200 = vmatprep.subr.bf16.mxu0 0
    %201 = vmatpush1.bf16.msra.mxu0 0
    %202 = vmatprep.subr.bf16.mxu0 0
    %203 = vmatpush1.bf16.msra.mxu0 0
    %204 = vmatprep.subr.bf16.mxu0 0
    %205 = vmatpush1.bf16.msra.mxu0 0
    %206 = vmatprep.subr.bf16.mxu0 0
    %207 = vmatpush1.bf16.msra.mxu0 0
    %208 = vmatprep.subr.bf16.mxu0 0
    %209 = vmatpush1.bf16.msra.mxu0 0
    %210 = vmatprep.subr.bf16.mxu0 0
    %211 = vmatpush1.bf16.msra.mxu0 0
    %212 = vmatprep.subr.bf16.mxu0 0
    %213 = vmatpush1.bf16.msra.mxu0 0
    %214 = vmatprep.subr.bf16.mxu0 0
    %215 = vmatpush1.bf16.msra.mxu0 0
    %216 = vmatprep.subr.bf16.mxu0 0
    %217 = vmatpush1.bf16.msra.mxu0 0
    %218 = vmatprep.subr.bf16.mxu0 0
    %219 = vmatpush1.bf16.msra.mxu0 0
    %220 = vmatprep.subr.bf16.mxu0 0
    %221 = vmatpush1.bf16.msra.mxu0 0
    %222 = vmatprep.subr.bf16.mxu0 0
    %223 = vmatpush1.bf16.msra.mxu0 0
    %224 = vmatprep.subr.bf16.mxu0 0
    %225 = vmatpush1.bf16.msra.mxu0 0
    %226 = vmatprep.subr.bf16.mxu0 0
    %227 = vmatpush1.bf16.msra.mxu0 0
    %228 = vmatprep.mubr.bf16.mxu0 0
    %229 = vmatmul.mubr.bf16.gmra.mrb[0].mxu0 %v191
    %v230 = vpop.f32.mrb[0].mxu0
    %v231 = vadd.f32 0.0, %v230
    %v232 = vpop.f32.mrb[0].mxu0
    %v233 = vpop.f32.mrb[0].mxu0
    %v234 = vadd.f32 0.0, %v233
    %v235 = vpop.f32.mrb[0].mxu0
    %236 = vmatprep.mubr.bf16.mxu0 0
    %237 = vmatmul.mubr.bf16.gmra.mrb[0].mxu0 %v194
    %v238 = vpop.f32.mrb[0].mxu0
    %v239 = vadd.f32 0.0, %v238
    %v240 = vpop.f32.mrb[0].mxu0
    %v241 = vpop.f32.mrb[0].mxu0
    %v242 = vadd.f32 0.0, %v241
    %v243 = vpop.f32.mrb[0].mxu0
    %244 = vdwg.mxu0
    %v245 = vmul.f32 %v231, %v231
    %v246 = vmul.f32 %v234, %v234
    %v247 = vmul.f32 %v239, %v239
    %v248 = vmul.f32 %v242, %v242
    %vm249 = vcmask 130048
    %v250 = vsel %vm249, %v245, 0.0
    %251 = vadd.xlane.f32.xlu0 %v250
    %v252 = vpop.xlane.xlu0 %251
    %v253 = vsel %vm249, %v246, 0.0
    %254 = vadd.xlane.f32.xlu0 %v253
    %v255 = vpop.xlane.xlu0 %254
    %v256 = vsel %vm249, %v247, 0.0
    %257 = vadd.xlane.f32.xlu0 %v256
    %v258 = vpop.xlane.xlu0 %257
    %v259 = vsel %vm249, %v248, 0.0
    %260 = vadd.xlane.f32.xlu0 %v259
    %v261 = vpop.xlane.xlu0 %260
    %v262 = vrcp.pop 16.0
    %v263 = vmul.f32 %v252, %v262
    %v264 = vmul.f32 %v255, %v262
    %v265 = vmul.f32 %v258, %v262
    %v266 = vmul.f32 %v261, %v262
    %v267 = vadd.f32 %v263, 1e-06
    %v268 = vadd.f32 %v264, 1e-06
    %v269 = vadd.f32 %v265, 1e-06
    %v270 = vadd.f32 %v266, 1e-06
    %v271 = vrsqrt.pop %v267
    %v272 = vrsqrt.pop %v268
    %v273 = vrsqrt.pop %v269
    %v274 = vrsqrt.pop %v270
    %v275 = vmul.f32 %v231, %v271
    %v276 = vmul.f32 %v234, %v272
    %v277 = vmul.f32 %v239, %v273
    %v278 = vmul.f32 %v242, %v274
    %283 = vrot.lane.b32.xlu0 %v245, 96
    %v284 = vpop.permute.xlu0 %283
    %285 = vrot.lane.b32.xlu0 %v246, 96
    %v286 = vpop.permute.xlu0 %285
    %287 = vrot.lane.b32.xlu0 %v247, 96
    %v288 = vpop.permute.xlu0 %287
    %289 = vrot.lane.b32.xlu0 %v248, 96
    %v290 = vpop.permute.xlu0 %289
    %v295 = vsel %vm249, %v284, 0.0
    %296 = vadd.xlane.f32.xlu0 %v295
    %v297 = vpop.xlane.xlu0 %296
    %v298 = vsel %vm249, %v286, 0.0
    %299 = vadd.xlane.f32.xlu0 %v298
    %v300 = vpop.xlane.xlu0 %299
    %v301 = vsel %vm249, %v288, 0.0
    %302 = vadd.xlane.f32.xlu0 %v301
    %v303 = vpop.xlane.xlu0 %302
    %v304 = vsel %vm249, %v290, 0.0
    %305 = vadd.xlane.f32.xlu0 %v304
    %v306 = vpop.xlane.xlu0 %305
    %v307 = vmul.f32 %v297, %v262
    %v308 = vmul.f32 %v300, %v262
    %v309 = vmul.f32 %v303, %v262
    %v310 = vmul.f32 %v306, %v262
    %v311 = vadd.f32 %v307, 1e-06
    %v312 = vadd.f32 %v308, 1e-06
    %v313 = vadd.f32 %v309, 1e-06
    %v314 = vadd.f32 %v310, 1e-06
    %v315 = vrsqrt.pop %v311
    %v316 = vrsqrt.pop %v312
    %v317 = vrsqrt.pop %v313
    %v318 = vrsqrt.pop %v314
    %v319 = vmul.f32 %v231, %v315
    %v320 = vmul.f32 %v234, %v316
    %v321 = vmul.f32 %v239, %v317
    %v322 = vmul.f32 %v242, %v318
    %v323 = vld [vmem:[%s1] sm:$0xff]
    %v324 = vld [vmem:[%s1 + $0x8] sm:$0xff]
    %v325 = vld [vmem:[%s1 + $0x10] sm:$0xff]
    %v326 = vld [vmem:[%s1 + $0x18] sm:$0xff]
    %v327 = vld [vmem:[%s2] sm:$0xff]
    %v328 = vld [vmem:[%s2 + $0x8] sm:$0xff]
    %v329 = vld [vmem:[%s2 + $0x10] sm:$0xff]
    %v330 = vld [vmem:[%s2 + $0x18] sm:$0xff]
    %v331 = vmul.f32 %v275, %v323
    %v332 = vmul.f32 %v276, %v324
    %v333 = vmul.f32 %v277, %v325
    %v334 = vmul.f32 %v278, %v326
    %339 = vrot.lane.b32.xlu0 %v327, 8
    %v340 = vpop.permute.xlu0 %339
    %341 = vrot.lane.b32.xlu0 %v328, 8
    %v342 = vpop.permute.xlu0 %341
    %343 = vrot.lane.b32.xlu0 %v329, 8
    %v344 = vpop.permute.xlu0 %343
    %345 = vrot.lane.b32.xlu0 %v330, 8
    %v346 = vpop.permute.xlu0 %345
    %v351 = vmul.f32 %v275, %v340
    %v352 = vmul.f32 %v276, %v342
    %v353 = vmul.f32 %v277, %v344
    %v354 = vmul.f32 %v278, %v346
    %359 = vrot.lane.b32.xlu0 %v351, 120
    %v360 = vpop.permute.xlu0 %359
    %361 = vrot.lane.b32.xlu0 %v352, 120
    %v362 = vpop.permute.xlu0 %361
    %363 = vrot.lane.b32.xlu0 %v353, 120
    %v364 = vpop.permute.xlu0 %363
    %365 = vrot.lane.b32.xlu0 %v354, 120
    %v366 = vpop.permute.xlu0 %365
    %v371 = vsub.f32 %v331, %v360
    %v372 = vsub.f32 %v332, %v362
    %v373 = vsub.f32 %v333, %v364
    %v374 = vsub.f32 %v334, %v366
    %v375 = vmul.f32 %v275, %v327
    %v376 = vmul.f32 %v276, %v328
    %v377 = vmul.f32 %v277, %v329
    %v378 = vmul.f32 %v278, %v330
    %383 = vrot.lane.b32.xlu0 %v323, 8
    %v384 = vpop.permute.xlu0 %383
    %385 = vrot.lane.b32.xlu0 %v324, 8
    %v386 = vpop.permute.xlu0 %385
    %387 = vrot.lane.b32.xlu0 %v325, 8
    %v388 = vpop.permute.xlu0 %387
    %389 = vrot.lane.b32.xlu0 %v326, 8
    %v390 = vpop.permute.xlu0 %389
    %v395 = vmul.f32 %v275, %v384
    %v396 = vmul.f32 %v276, %v386
    %v397 = vmul.f32 %v277, %v388
    %v398 = vmul.f32 %v278, %v390
    %403 = vrot.lane.b32.xlu0 %v395, 120
    %v404 = vpop.permute.xlu0 %403
    %405 = vrot.lane.b32.xlu0 %v396, 120
    %v406 = vpop.permute.xlu0 %405
    %407 = vrot.lane.b32.xlu0 %v397, 120
    %v408 = vpop.permute.xlu0 %407
    %409 = vrot.lane.b32.xlu0 %v398, 120
    %v410 = vpop.permute.xlu0 %409
    %v415 = vadd.f32 %v375, %v404
    %v416 = vadd.f32 %v376, %v406
    %v417 = vadd.f32 %v377, %v408
    %v418 = vadd.f32 %v378, %v410
    %423 = vrot.lane.b32.xlu0 %v415, 8
    %v424 = vpop.permute.xlu0 %423
    %425 = vrot.lane.b32.xlu0 %v416, 8
    %v426 = vpop.permute.xlu0 %425
    %427 = vrot.lane.b32.xlu0 %v417, 8
    %v428 = vpop.permute.xlu0 %427
    %429 = vrot.lane.b32.xlu0 %v418, 8
    %v430 = vpop.permute.xlu0 %429
    %vm435 = vcmask 64512
    %v436 = vsel %vm435, %v371, %v424
    %v437 = vsel %vm435, %v372, %v426
    %v438 = vsel %vm435, %v373, %v428
    %v439 = vsel %vm435, %v374, %v430
    %v440 = vmul.f32 %v436, 0.25
    %v441 = vmul.f32 %v437, 0.25
    %v442 = vmul.f32 %v438, 0.25
    %v443 = vmul.f32 %v439, 0.25
    %444 = vrot.lane.b32.xlu0 %v323, 32
    %v445 = vpop.permute.xlu0 %444
    %446 = vrot.lane.b32.xlu0 %v324, 32
    %v447 = vpop.permute.xlu0 %446
    %448 = vrot.lane.b32.xlu0 %v325, 32
    %v449 = vpop.permute.xlu0 %448
    %450 = vrot.lane.b32.xlu0 %v326, 32
    %v451 = vpop.permute.xlu0 %450
    %v456 = vmul.f32 %v319, %v445
    %v457 = vmul.f32 %v320, %v447
    %v458 = vmul.f32 %v321, %v449
    %v459 = vmul.f32 %v322, %v451
    %460 = vrot.lane.b32.xlu0 %v327, 40
    %v461 = vpop.permute.xlu0 %460
    %462 = vrot.lane.b32.xlu0 %v328, 40
    %v463 = vpop.permute.xlu0 %462
    %464 = vrot.lane.b32.xlu0 %v329, 40
    %v465 = vpop.permute.xlu0 %464
    %466 = vrot.lane.b32.xlu0 %v330, 40
    %v467 = vpop.permute.xlu0 %466
    %v472 = vmul.f32 %v319, %v461
    %v473 = vmul.f32 %v320, %v463
    %v474 = vmul.f32 %v321, %v465
    %v475 = vmul.f32 %v322, %v467
    %480 = vrot.lane.b32.xlu0 %v472, 120
    %v481 = vpop.permute.xlu0 %480
    %482 = vrot.lane.b32.xlu0 %v473, 120
    %v483 = vpop.permute.xlu0 %482
    %484 = vrot.lane.b32.xlu0 %v474, 120
    %v485 = vpop.permute.xlu0 %484
    %486 = vrot.lane.b32.xlu0 %v475, 120
    %v487 = vpop.permute.xlu0 %486
    %v492 = vsub.f32 %v456, %v481
    %v493 = vsub.f32 %v457, %v483
    %v494 = vsub.f32 %v458, %v485
    %v495 = vsub.f32 %v459, %v487
    %496 = vrot.lane.b32.xlu0 %v327, 32
    %v497 = vpop.permute.xlu0 %496
    %498 = vrot.lane.b32.xlu0 %v328, 32
    %v499 = vpop.permute.xlu0 %498
    %500 = vrot.lane.b32.xlu0 %v329, 32
    %v501 = vpop.permute.xlu0 %500
    %502 = vrot.lane.b32.xlu0 %v330, 32
    %v503 = vpop.permute.xlu0 %502
    %v508 = vmul.f32 %v319, %v497
    %v509 = vmul.f32 %v320, %v499
    %v510 = vmul.f32 %v321, %v501
    %v511 = vmul.f32 %v322, %v503
    %512 = vrot.lane.b32.xlu0 %v323, 40
    %v513 = vpop.permute.xlu0 %512
    %514 = vrot.lane.b32.xlu0 %v324, 40
    %v515 = vpop.permute.xlu0 %514
    %516 = vrot.lane.b32.xlu0 %v325, 40
    %v517 = vpop.permute.xlu0 %516
    %518 = vrot.lane.b32.xlu0 %v326, 40
    %v519 = vpop.permute.xlu0 %518
    %v524 = vmul.f32 %v319, %v513
    %v525 = vmul.f32 %v320, %v515
    %v526 = vmul.f32 %v321, %v517
    %v527 = vmul.f32 %v322, %v519
    %532 = vrot.lane.b32.xlu0 %v524, 120
    %v533 = vpop.permute.xlu0 %532
    %534 = vrot.lane.b32.xlu0 %v525, 120
    %v535 = vpop.permute.xlu0 %534
    %536 = vrot.lane.b32.xlu0 %v526, 120
    %v537 = vpop.permute.xlu0 %536
    %538 = vrot.lane.b32.xlu0 %v527, 120
    %v539 = vpop.permute.xlu0 %538
    %v544 = vadd.f32 %v508, %v533
    %v545 = vadd.f32 %v509, %v535
    %v546 = vadd.f32 %v510, %v537
    %v547 = vadd.f32 %v511, %v539
    %552 = vrot.lane.b32.xlu0 %v492, 96
    %v553 = vpop.permute.xlu0 %552
    %554 = vrot.lane.b32.xlu0 %v493, 96
    %v555 = vpop.permute.xlu0 %554
    %556 = vrot.lane.b32.xlu0 %v494, 96
    %v557 = vpop.permute.xlu0 %556
    %558 = vrot.lane.b32.xlu0 %v495, 96
    %v559 = vpop.permute.xlu0 %558
    %568 = vrot.lane.b32.xlu0 %v544, 104
    %v569 = vpop.permute.xlu0 %568
    %570 = vrot.lane.b32.xlu0 %v545, 104
    %v571 = vpop.permute.xlu0 %570
    %572 = vrot.lane.b32.xlu0 %v546, 104
    %v573 = vpop.permute.xlu0 %572
    %574 = vrot.lane.b32.xlu0 %v547, 104
    %v575 = vpop.permute.xlu0 %574
    %v580 = vsel %vm435, %v553, %v569
    %v581 = vsel %vm435, %v555, %v571
    %v582 = vsel %vm435, %v557, %v573
    %v583 = vsel %vm435, %v559, %v575
    %v584 = vpack.c.bf16 %v441, %v440
    %v585 = vpack.c.bf16 %v443, %v442
    %v586 = vpack.c.bf16 %v581, %v580
    %v587 = vpack.c.bf16 %v583, %v582
    %v589 = vsel %vm249, %v584, 0
    %v592 = vsel %vm249, %v585, 0
    %v595 = vsel %vm249, %v586, 0
    %v598 = vsel %vm249, %v587, 0
    %600 = vmatprep.subr.bf16.mxu0 0
    %601 = vmatpush1.bf16.xpose.msra.mxu0 %v595
    %602 = vmatprep.subr.bf16.mxu0 0
    %603 = vmatpush1.bf16.xpose.msra.mxu0 %v598
    %604 = vmatprep.subr.bf16.mxu0 0
    %605 = vmatpush1.bf16.xpose.msra.mxu0 0
    %606 = vmatprep.subr.bf16.mxu0 0
    %607 = vmatpush1.bf16.xpose.msra.mxu0 0
    %608 = vmatprep.subr.bf16.mxu0 0
    %609 = vmatpush1.bf16.xpose.msra.mxu0 0
    %610 = vmatprep.subr.bf16.mxu0 0
    %611 = vmatpush1.bf16.xpose.msra.mxu0 0
    %612 = vmatprep.subr.bf16.mxu0 0
    %613 = vmatpush1.bf16.xpose.msra.mxu0 0
    %614 = vmatprep.subr.bf16.mxu0 0
    %615 = vmatpush1.bf16.xpose.msra.mxu0 0
    %616 = vmatprep.subr.bf16.mxu0 0
    %617 = vmatpush1.bf16.xpose.msra.mxu0 0
    %618 = vmatprep.subr.bf16.mxu0 0
    %619 = vmatpush1.bf16.xpose.msra.mxu0 0
    %620 = vmatprep.subr.bf16.mxu0 0
    %621 = vmatpush1.bf16.xpose.msra.mxu0 0
    %622 = vmatprep.subr.bf16.mxu0 0
    %623 = vmatpush1.bf16.xpose.msra.mxu0 0
    %624 = vmatprep.subr.bf16.mxu0 0
    %625 = vmatpush1.bf16.xpose.msra.mxu0 0
    %626 = vmatprep.subr.bf16.mxu0 0
    %627 = vmatpush1.bf16.xpose.msra.mxu0 0
    %628 = vmatprep.subr.bf16.mxu0 0
    %629 = vmatpush1.bf16.xpose.msra.mxu0 0
    %630 = vmatprep.subr.bf16.mxu0 0
    %631 = vmatpush1.bf16.xpose.msra.mxu0 0
    %632 = vmatprep.mubr.bf16.mxu0 0
    %633 = vmatmul.mubr.bf16.gmra.mrb[0].mxu0 %v589
    %v634 = vpop.f32.mrb[0].mxu0
    %v635 = vadd.f32 %v134, %v634
    %v636 = vpop.f32.mrb[0].mxu0
    %v637 = vpop.f32.mrb[0].mxu0
    %v638 = vadd.f32 %v135, %v637
    %v639 = vpop.f32.mrb[0].mxu0
    %640 = vmatprep.mubr.bf16.mxu0 0
    %641 = vmatmul.mubr.bf16.gmra.mrb[0].mxu0 %v592
    %v642 = vpop.f32.mrb[0].mxu0
    %v643 = vadd.f32 %v136, %v642
    %v644 = vpop.f32.mrb[0].mxu0
    %v645 = vpop.f32.mrb[0].mxu0
    %v646 = vadd.f32 %v137, %v645
    %v647 = vpop.f32.mrb[0].mxu0
    %648 = vdwg.mxu0
    %v649 = vsel %vm142, %v635, -inf
    %650 = vmax.xlane.f32.xlu0 %v649
    %v651 = vpop.xlane.xlu0 %650
    %v652 = vsel %vm142, %v638, -inf
    %653 = vmax.xlane.f32.xlu0 %v652
    %v654 = vpop.xlane.xlu0 %653
    %v655 = vsel %vm142, %v643, -inf
    %656 = vmax.xlane.f32.xlu0 %v655
    %v657 = vpop.xlane.xlu0 %656
    %v658 = vsel %vm142, %v646, -inf
    %659 = vmax.xlane.f32.xlu0 %v658
    %v660 = vpop.xlane.xlu0 %659
    %v661 = vsub.f32 %v635, %v651
    %v662 = vsub.f32 %v638, %v654
    %v663 = vsub.f32 %v643, %v657
    %v664 = vsub.f32 %v646, %v660
    %v665 = vmul.f32 %v661, 1.442695
    %v666 = vpow.pop %v665
    %v667 = vmul.f32 %v662, 1.442695
    %v668 = vpow.pop %v667
    %v669 = vmul.f32 %v663, 1.442695
    %v670 = vpow.pop %v669
    %v671 = vmul.f32 %v664, 1.442695
    %v672 = vpow.pop %v671
    %v673 = vsel %vm142, %v666, 0.0
    %674 = vadd.xlane.f32.xlu0 %v673
    %v675 = vpop.xlane.xlu0 %674
    %v676 = vsel %vm142, %v668, 0.0
    %677 = vadd.xlane.f32.xlu0 %v676
    %v678 = vpop.xlane.xlu0 %677
    %v679 = vsel %vm142, %v670, 0.0
    %680 = vadd.xlane.f32.xlu0 %v679
    %v681 = vpop.xlane.xlu0 %680
    %v682 = vsel %vm142, %v672, 0.0
    %683 = vadd.xlane.f32.xlu0 %v682
    %v684 = vpop.xlane.xlu0 %683
    %v685 = vrcp.pop %v675
    %v686 = vrcp.pop %v678
    %v687 = vrcp.pop %v681
    %v688 = vrcp.pop %v684
    %v689 = vmul.f32 %v666, %v685
    %v690 = vmul.f32 %v668, %v686
    %v691 = vmul.f32 %v670, %v687
    %v692 = vmul.f32 %v672, %v688
    %v693 = vpack.c.bf16 %v690, %v689
    %v694 = vpack.c.bf16 %v692, %v691
    %v695 = vpack.c.bf16 %v234, %v231
    %v696 = vpack.c.bf16 %v242, %v239
    %699 = vrot.lane.b32.xlu0 %v695, 64
    %v700 = vpop.permute.xlu0 %699
    %701 = vrot.lane.b32.xlu0 %v696, 64
    %v702 = vpop.permute.xlu0 %701
    %v706 = vsel %vm142, %v693, 0
    %v709 = vsel %vm142, %v694, 0
    %711 = vmatprep.subr.bf16.mxu0 0
    %712 = vmatpush1.bf16.msra.mxu0 %v700
    %713 = vmatprep.subr.bf16.mxu0 0
    %714 = vmatpush1.bf16.msra.mxu0 %v702
    %715 = vmatprep.subr.bf16.mxu0 0
    %716 = vmatpush1.bf16.msra.mxu0 0
    %717 = vmatprep.subr.bf16.mxu0 0
    %718 = vmatpush1.bf16.msra.mxu0 0
    %719 = vmatprep.subr.bf16.mxu0 0
    %720 = vmatpush1.bf16.msra.mxu0 0
    %721 = vmatprep.subr.bf16.mxu0 0
    %722 = vmatpush1.bf16.msra.mxu0 0
    %723 = vmatprep.subr.bf16.mxu0 0
    %724 = vmatpush1.bf16.msra.mxu0 0
    %725 = vmatprep.subr.bf16.mxu0 0
    %726 = vmatpush1.bf16.msra.mxu0 0
    %727 = vmatprep.subr.bf16.mxu0 0
    %728 = vmatpush1.bf16.msra.mxu0 0
    %729 = vmatprep.subr.bf16.mxu0 0
    %730 = vmatpush1.bf16.msra.mxu0 0
    %731 = vmatprep.subr.bf16.mxu0 0
    %732 = vmatpush1.bf16.msra.mxu0 0
    %733 = vmatprep.subr.bf16.mxu0 0
    %734 = vmatpush1.bf16.msra.mxu0 0
    %735 = vmatprep.subr.bf16.mxu0 0
    %736 = vmatpush1.bf16.msra.mxu0 0
    %737 = vmatprep.subr.bf16.mxu0 0
    %738 = vmatpush1.bf16.msra.mxu0 0
    %739 = vmatprep.subr.bf16.mxu0 0
    %740 = vmatpush1.bf16.msra.mxu0 0
    %741 = vmatprep.subr.bf16.mxu0 0
    %742 = vmatpush1.bf16.msra.mxu0 0
    %743 = vmatprep.mubr.bf16.mxu0 0
    %744 = vmatmul.mubr.bf16.gmra.mrb[0].mxu0 %v706
    %v745 = vpop.f32.mrb[0].mxu0
    %v746 = vadd.f32 0.0, %v745
    %v747 = vpop.f32.mrb[0].mxu0
    %v748 = vpop.f32.mrb[0].mxu0
    %v749 = vadd.f32 0.0, %v748
    %v750 = vpop.f32.mrb[0].mxu0
    %751 = vmatprep.mubr.bf16.mxu0 0
    %752 = vmatmul.mubr.bf16.gmra.mrb[0].mxu0 %v709
    %v753 = vpop.f32.mrb[0].mxu0
    %v754 = vadd.f32 0.0, %v753
    %v755 = vpop.f32.mrb[0].mxu0
    %v756 = vpop.f32.mrb[0].mxu0
    %v757 = vadd.f32 0.0, %v756
    %v758 = vpop.f32.mrb[0].mxu0
    %759 = vdwg.mxu0
    %760 = vrot.lane.b32.xlu0 %v245, 112
    %v761 = vpop.permute.xlu0 %760
    %762 = vrot.lane.b32.xlu0 %v246, 112
    %v763 = vpop.permute.xlu0 %762
    %764 = vrot.lane.b32.xlu0 %v247, 112
    %v765 = vpop.permute.xlu0 %764
    %766 = vrot.lane.b32.xlu0 %v248, 112
    %v767 = vpop.permute.xlu0 %766
    %v772 = vsel %vm249, %v761, 0.0
    %773 = vadd.xlane.f32.xlu0 %v772
    %v774 = vpop.xlane.xlu0 %773
    %v775 = vsel %vm249, %v763, 0.0
    %776 = vadd.xlane.f32.xlu0 %v775
    %v777 = vpop.xlane.xlu0 %776
    %v778 = vsel %vm249, %v765, 0.0
    %779 = vadd.xlane.f32.xlu0 %v778
    %v780 = vpop.xlane.xlu0 %779
    %v781 = vsel %vm249, %v767, 0.0
    %782 = vadd.xlane.f32.xlu0 %v781
    %v783 = vpop.xlane.xlu0 %782
    %v784 = vmul.f32 %v774, %v262
    %v785 = vmul.f32 %v777, %v262
    %v786 = vmul.f32 %v780, %v262
    %v787 = vmul.f32 %v783, %v262
    %v788 = vadd.f32 %v784, 1e-06
    %v789 = vadd.f32 %v785, 1e-06
    %v790 = vadd.f32 %v786, 1e-06
    %v791 = vadd.f32 %v787, 1e-06
    %v792 = vrsqrt.pop %v788
    %v793 = vrsqrt.pop %v789
    %v794 = vrsqrt.pop %v790
    %v795 = vrsqrt.pop %v791
    %v796 = vmul.f32 %v231, %v792
    %v797 = vmul.f32 %v234, %v793
    %v798 = vmul.f32 %v239, %v794
    %v799 = vmul.f32 %v242, %v795
    %800 = vrot.lane.b32.xlu0 %v245, 80
    %v801 = vpop.permute.xlu0 %800
    %802 = vrot.lane.b32.xlu0 %v246, 80
    %v803 = vpop.permute.xlu0 %802
    %804 = vrot.lane.b32.xlu0 %v247, 80
    %v805 = vpop.permute.xlu0 %804
    %806 = vrot.lane.b32.xlu0 %v248, 80
    %v807 = vpop.permute.xlu0 %806
    %v812 = vsel %vm249, %v801, 0.0
    %813 = vadd.xlane.f32.xlu0 %v812
    %v814 = vpop.xlane.xlu0 %813
    %v815 = vsel %vm249, %v803, 0.0
    %816 = vadd.xlane.f32.xlu0 %v815
    %v817 = vpop.xlane.xlu0 %816
    %v818 = vsel %vm249, %v805, 0.0
    %819 = vadd.xlane.f32.xlu0 %v818
    %v820 = vpop.xlane.xlu0 %819
    %v821 = vsel %vm249, %v807, 0.0
    %822 = vadd.xlane.f32.xlu0 %v821
    %v823 = vpop.xlane.xlu0 %822
    %v824 = vmul.f32 %v814, %v262
    %v825 = vmul.f32 %v817, %v262
    %v826 = vmul.f32 %v820, %v262
    %v827 = vmul.f32 %v823, %v262
    %v828 = vadd.f32 %v824, 1e-06
    %v829 = vadd.f32 %v825, 1e-06
    %v830 = vadd.f32 %v826, 1e-06
    %v831 = vadd.f32 %v827, 1e-06
    %v832 = vrsqrt.pop %v828
    %v833 = vrsqrt.pop %v829
    %v834 = vrsqrt.pop %v830
    %v835 = vrsqrt.pop %v831
    %v836 = vmul.f32 %v231, %v832
    %v837 = vmul.f32 %v234, %v833
    %v838 = vmul.f32 %v239, %v834
    %v839 = vmul.f32 %v242, %v835
    %s840 = scalar_lea.vmem %s1, 32
    %v841 = vld [vmem:[%s840] sm:$0xff]
    %v842 = vld [vmem:[%s840 + $0x8] sm:$0xff]
    %v843 = vld [vmem:[%s840 + $0x10] sm:$0xff]
    %v844 = vld [vmem:[%s840 + $0x18] sm:$0xff]
    %s845 = scalar_lea.vmem %s2, 32
    %v846 = vld [vmem:[%s845] sm:$0xff]
    %v847 = vld [vmem:[%s845 + $0x8] sm:$0xff]
    %v848 = vld [vmem:[%s845 + $0x10] sm:$0xff]
    %v849 = vld [vmem:[%s845 + $0x18] sm:$0xff]
    %854 = vrot.lane.b32.xlu0 %v841, 16
    %v855 = vpop.permute.xlu0 %854
    %856 = vrot.lane.b32.xlu0 %v842, 16
    %v857 = vpop.permute.xlu0 %856
    %858 = vrot.lane.b32.xlu0 %v843, 16
    %v859 = vpop.permute.xlu0 %858
    %860 = vrot.lane.b32.xlu0 %v844, 16
    %v861 = vpop.permute.xlu0 %860
    %v866 = vmul.f32 %v796, %v855
    %v867 = vmul.f32 %v797, %v857
    %v868 = vmul.f32 %v798, %v859
    %v869 = vmul.f32 %v799, %v861
    %874 = vrot.lane.b32.xlu0 %v846, 24
    %v875 = vpop.permute.xlu0 %874
    %876 = vrot.lane.b32.xlu0 %v847, 24
    %v877 = vpop.permute.xlu0 %876
    %878 = vrot.lane.b32.xlu0 %v848, 24
    %v879 = vpop.permute.xlu0 %878
    %880 = vrot.lane.b32.xlu0 %v849, 24
    %v881 = vpop.permute.xlu0 %880
    %v886 = vmul.f32 %v796, %v875
    %v887 = vmul.f32 %v797, %v877
    %v888 = vmul.f32 %v798, %v879
    %v889 = vmul.f32 %v799, %v881
    %894 = vrot.lane.b32.xlu0 %v886, 120
    %v895 = vpop.permute.xlu0 %894
    %896 = vrot.lane.b32.xlu0 %v887, 120
    %v897 = vpop.permute.xlu0 %896
    %898 = vrot.lane.b32.xlu0 %v888, 120
    %v899 = vpop.permute.xlu0 %898
    %900 = vrot.lane.b32.xlu0 %v889, 120
    %v901 = vpop.permute.xlu0 %900
    %v906 = vsub.f32 %v866, %v895
    %v907 = vsub.f32 %v867, %v897
    %v908 = vsub.f32 %v868, %v899
    %v909 = vsub.f32 %v869, %v901
    %910 = vrot.lane.b32.xlu0 %v846, 16
    %v911 = vpop.permute.xlu0 %910
    %912 = vrot.lane.b32.xlu0 %v847, 16
    %v913 = vpop.permute.xlu0 %912
    %914 = vrot.lane.b32.xlu0 %v848, 16
    %v915 = vpop.permute.xlu0 %914
    %916 = vrot.lane.b32.xlu0 %v849, 16
    %v917 = vpop.permute.xlu0 %916
    %v922 = vmul.f32 %v796, %v911
    %v923 = vmul.f32 %v797, %v913
    %v924 = vmul.f32 %v798, %v915
    %v925 = vmul.f32 %v799, %v917
    %926 = vrot.lane.b32.xlu0 %v841, 24
    %v927 = vpop.permute.xlu0 %926
    %928 = vrot.lane.b32.xlu0 %v842, 24
    %v929 = vpop.permute.xlu0 %928
    %930 = vrot.lane.b32.xlu0 %v843, 24
    %v931 = vpop.permute.xlu0 %930
    %932 = vrot.lane.b32.xlu0 %v844, 24
    %v933 = vpop.permute.xlu0 %932
    %v938 = vmul.f32 %v796, %v927
    %v939 = vmul.f32 %v797, %v929
    %v940 = vmul.f32 %v798, %v931
    %v941 = vmul.f32 %v799, %v933
    %946 = vrot.lane.b32.xlu0 %v938, 120
    %v947 = vpop.permute.xlu0 %946
    %948 = vrot.lane.b32.xlu0 %v939, 120
    %v949 = vpop.permute.xlu0 %948
    %950 = vrot.lane.b32.xlu0 %v940, 120
    %v951 = vpop.permute.xlu0 %950
    %952 = vrot.lane.b32.xlu0 %v941, 120
    %v953 = vpop.permute.xlu0 %952
    %v958 = vadd.f32 %v922, %v947
    %v959 = vadd.f32 %v923, %v949
    %v960 = vadd.f32 %v924, %v951
    %v961 = vadd.f32 %v925, %v953
    %966 = vrot.lane.b32.xlu0 %v906, 112
    %v967 = vpop.permute.xlu0 %966
    %968 = vrot.lane.b32.xlu0 %v907, 112
    %v969 = vpop.permute.xlu0 %968
    %970 = vrot.lane.b32.xlu0 %v908, 112
    %v971 = vpop.permute.xlu0 %970
    %972 = vrot.lane.b32.xlu0 %v909, 112
    %v973 = vpop.permute.xlu0 %972
    %982 = vrot.lane.b32.xlu0 %v958, 120
    %v983 = vpop.permute.xlu0 %982
    %984 = vrot.lane.b32.xlu0 %v959, 120
    %v985 = vpop.permute.xlu0 %984
    %986 = vrot.lane.b32.xlu0 %v960, 120
    %v987 = vpop.permute.xlu0 %986
    %988 = vrot.lane.b32.xlu0 %v961, 120
    %v989 = vpop.permute.xlu0 %988
    %v994 = vsel %vm435, %v967, %v983
    %v995 = vsel %vm435, %v969, %v985
    %v996 = vsel %vm435, %v971, %v987
    %v997 = vsel %vm435, %v973, %v989
    %v998 = vmul.f32 %v994, 0.25
    %v999 = vmul.f32 %v995, 0.25
    %v1000 = vmul.f32 %v996, 0.25
    %v1001 = vmul.f32 %v997, 0.25
    %1002 = vrot.lane.b32.xlu0 %v841, 48
    %v1003 = vpop.permute.xlu0 %1002
    %1004 = vrot.lane.b32.xlu0 %v842, 48
    %v1005 = vpop.permute.xlu0 %1004
    %1006 = vrot.lane.b32.xlu0 %v843, 48
    %v1007 = vpop.permute.xlu0 %1006
    %1008 = vrot.lane.b32.xlu0 %v844, 48
    %v1009 = vpop.permute.xlu0 %1008
    %v1014 = vmul.f32 %v836, %v1003
    %v1015 = vmul.f32 %v837, %v1005
    %v1016 = vmul.f32 %v838, %v1007
    %v1017 = vmul.f32 %v839, %v1009
    %1018 = vrot.lane.b32.xlu0 %v846, 56
    %v1019 = vpop.permute.xlu0 %1018
    %1020 = vrot.lane.b32.xlu0 %v847, 56
    %v1021 = vpop.permute.xlu0 %1020
    %1022 = vrot.lane.b32.xlu0 %v848, 56
    %v1023 = vpop.permute.xlu0 %1022
    %1024 = vrot.lane.b32.xlu0 %v849, 56
    %v1025 = vpop.permute.xlu0 %1024
    %v1030 = vmul.f32 %v836, %v1019
    %v1031 = vmul.f32 %v837, %v1021
    %v1032 = vmul.f32 %v838, %v1023
    %v1033 = vmul.f32 %v839, %v1025
    %1038 = vrot.lane.b32.xlu0 %v1030, 120
    %v1039 = vpop.permute.xlu0 %1038
    %1040 = vrot.lane.b32.xlu0 %v1031, 120
    %v1041 = vpop.permute.xlu0 %1040
    %1042 = vrot.lane.b32.xlu0 %v1032, 120
    %v1043 = vpop.permute.xlu0 %1042
    %1044 = vrot.lane.b32.xlu0 %v1033, 120
    %v1045 = vpop.permute.xlu0 %1044
    %v1050 = vsub.f32 %v1014, %v1039
    %v1051 = vsub.f32 %v1015, %v1041
    %v1052 = vsub.f32 %v1016, %v1043
    %v1053 = vsub.f32 %v1017, %v1045
    %1054 = vrot.lane.b32.xlu0 %v846, 48
    %v1055 = vpop.permute.xlu0 %1054
    %1056 = vrot.lane.b32.xlu0 %v847, 48
    %v1057 = vpop.permute.xlu0 %1056
    %1058 = vrot.lane.b32.xlu0 %v848, 48
    %v1059 = vpop.permute.xlu0 %1058
    %1060 = vrot.lane.b32.xlu0 %v849, 48
    %v1061 = vpop.permute.xlu0 %1060
    %v1066 = vmul.f32 %v836, %v1055
    %v1067 = vmul.f32 %v837, %v1057
    %v1068 = vmul.f32 %v838, %v1059
    %v1069 = vmul.f32 %v839, %v1061
    %1070 = vrot.lane.b32.xlu0 %v841, 56
    %v1071 = vpop.permute.xlu0 %1070
    %1072 = vrot.lane.b32.xlu0 %v842, 56
    %v1073 = vpop.permute.xlu0 %1072
    %1074 = vrot.lane.b32.xlu0 %v843, 56
    %v1075 = vpop.permute.xlu0 %1074
    %1076 = vrot.lane.b32.xlu0 %v844, 56
    %v1077 = vpop.permute.xlu0 %1076
    %v1082 = vmul.f32 %v836, %v1071
    %v1083 = vmul.f32 %v837, %v1073
    %v1084 = vmul.f32 %v838, %v1075
    %v1085 = vmul.f32 %v839, %v1077
    %1090 = vrot.lane.b32.xlu0 %v1082, 120
    %v1091 = vpop.permute.xlu0 %1090
    %1092 = vrot.lane.b32.xlu0 %v1083, 120
    %v1093 = vpop.permute.xlu0 %1092
    %1094 = vrot.lane.b32.xlu0 %v1084, 120
    %v1095 = vpop.permute.xlu0 %1094
    %1096 = vrot.lane.b32.xlu0 %v1085, 120
    %v1097 = vpop.permute.xlu0 %1096
    %v1102 = vadd.f32 %v1066, %v1091
    %v1103 = vadd.f32 %v1067, %v1093
    %v1104 = vadd.f32 %v1068, %v1095
    %v1105 = vadd.f32 %v1069, %v1097
    %1110 = vrot.lane.b32.xlu0 %v1050, 80
    %v1111 = vpop.permute.xlu0 %1110
    %1112 = vrot.lane.b32.xlu0 %v1051, 80
    %v1113 = vpop.permute.xlu0 %1112
    %1114 = vrot.lane.b32.xlu0 %v1052, 80
    %v1115 = vpop.permute.xlu0 %1114
    %1116 = vrot.lane.b32.xlu0 %v1053, 80
    %v1117 = vpop.permute.xlu0 %1116
    %1126 = vrot.lane.b32.xlu0 %v1102, 88
    %v1127 = vpop.permute.xlu0 %1126
    %1128 = vrot.lane.b32.xlu0 %v1103, 88
    %v1129 = vpop.permute.xlu0 %1128
    %1130 = vrot.lane.b32.xlu0 %v1104, 88
    %v1131 = vpop.permute.xlu0 %1130
    %1132 = vrot.lane.b32.xlu0 %v1105, 88
    %v1133 = vpop.permute.xlu0 %1132
    %v1138 = vsel %vm435, %v1111, %v1127
    %v1139 = vsel %vm435, %v1113, %v1129
    %v1140 = vsel %vm435, %v1115, %v1131
    %v1141 = vsel %vm435, %v1117, %v1133
    %v1142 = vpack.c.bf16 %v999, %v998
    %v1143 = vpack.c.bf16 %v1001, %v1000
    %v1144 = vpack.c.bf16 %v1139, %v1138
    %v1145 = vpack.c.bf16 %v1141, %v1140
    %v1147 = vsel %vm249, %v1142, 0
    %v1150 = vsel %vm249, %v1143, 0
    %v1153 = vsel %vm249, %v1144, 0
    %v1156 = vsel %vm249, %v1145, 0
    %1158 = vmatprep.subr.bf16.mxu0 0
    %1159 = vmatpush1.bf16.xpose.msra.mxu0 %v1153
    %1160 = vmatprep.subr.bf16.mxu0 0
    %1161 = vmatpush1.bf16.xpose.msra.mxu0 %v1156
    %1162 = vmatprep.subr.bf16.mxu0 0
    %1163 = vmatpush1.bf16.xpose.msra.mxu0 0
    %1164 = vmatprep.subr.bf16.mxu0 0
    %1165 = vmatpush1.bf16.xpose.msra.mxu0 0
    %1166 = vmatprep.subr.bf16.mxu0 0
    %1167 = vmatpush1.bf16.xpose.msra.mxu0 0
    %1168 = vmatprep.subr.bf16.mxu0 0
    %1169 = vmatpush1.bf16.xpose.msra.mxu0 0
    %1170 = vmatprep.subr.bf16.mxu0 0
    %1171 = vmatpush1.bf16.xpose.msra.mxu0 0
    %1172 = vmatprep.subr.bf16.mxu0 0
    %1173 = vmatpush1.bf16.xpose.msra.mxu0 0
    %1174 = vmatprep.subr.bf16.mxu0 0
    %1175 = vmatpush1.bf16.xpose.msra.mxu0 0
    %1176 = vmatprep.subr.bf16.mxu0 0
    %1177 = vmatpush1.bf16.xpose.msra.mxu0 0
    %1178 = vmatprep.subr.bf16.mxu0 0
    %1179 = vmatpush1.bf16.xpose.msra.mxu0 0
    %1180 = vmatprep.subr.bf16.mxu0 0
    %1181 = vmatpush1.bf16.xpose.msra.mxu0 0
    %1182 = vmatprep.subr.bf16.mxu0 0
    %1183 = vmatpush1.bf16.xpose.msra.mxu0 0
    %1184 = vmatprep.subr.bf16.mxu0 0
    %1185 = vmatpush1.bf16.xpose.msra.mxu0 0
    %1186 = vmatprep.subr.bf16.mxu0 0
    %1187 = vmatpush1.bf16.xpose.msra.mxu0 0
    %1188 = vmatprep.subr.bf16.mxu0 0
    %1189 = vmatpush1.bf16.xpose.msra.mxu0 0
    %1190 = vmatprep.mubr.bf16.mxu0 0
    %1191 = vmatmul.mubr.bf16.gmra.mrb[0].mxu0 %v1147
    %v1192 = vpop.f32.mrb[0].mxu0
    %v1193 = vadd.f32 %v134, %v1192
    %v1194 = vpop.f32.mrb[0].mxu0
    %v1195 = vpop.f32.mrb[0].mxu0
    %v1196 = vadd.f32 %v135, %v1195
    %v1197 = vpop.f32.mrb[0].mxu0
    %1198 = vmatprep.mubr.bf16.mxu0 0
    %1199 = vmatmul.mubr.bf16.gmra.mrb[0].mxu0 %v1150
    %v1200 = vpop.f32.mrb[0].mxu0
    %v1201 = vadd.f32 %v136, %v1200
    %v1202 = vpop.f32.mrb[0].mxu0
    %v1203 = vpop.f32.mrb[0].mxu0
    %v1204 = vadd.f32 %v137, %v1203
    %v1205 = vpop.f32.mrb[0].mxu0
    %1206 = vdwg.mxu0
    %v1207 = vsel %vm142, %v1193, -inf
    %1208 = vmax.xlane.f32.xlu0 %v1207
    %v1209 = vpop.xlane.xlu0 %1208
    %v1210 = vsel %vm142, %v1196, -inf
    %1211 = vmax.xlane.f32.xlu0 %v1210
    %v1212 = vpop.xlane.xlu0 %1211
    %v1213 = vsel %vm142, %v1201, -inf
    %1214 = vmax.xlane.f32.xlu0 %v1213
    %v1215 = vpop.xlane.xlu0 %1214
    %v1216 = vsel %vm142, %v1204, -inf
    %1217 = vmax.xlane.f32.xlu0 %v1216
    %v1218 = vpop.xlane.xlu0 %1217
    %v1219 = vsub.f32 %v1193, %v1209
    %v1220 = vsub.f32 %v1196, %v1212
    %v1221 = vsub.f32 %v1201, %v1215
    %v1222 = vsub.f32 %v1204, %v1218
    %v1223 = vmul.f32 %v1219, 1.442695
    %v1224 = vpow.pop %v1223
    %v1225 = vmul.f32 %v1220, 1.442695
    %v1226 = vpow.pop %v1225
    %v1227 = vmul.f32 %v1221, 1.442695
    %v1228 = vpow.pop %v1227
    %v1229 = vmul.f32 %v1222, 1.442695
    %v1230 = vpow.pop %v1229
    %v1231 = vsel %vm142, %v1224, 0.0
    %1232 = vadd.xlane.f32.xlu0 %v1231
    %v1233 = vpop.xlane.xlu0 %1232
    %v1234 = vsel %vm142, %v1226, 0.0
    %1235 = vadd.xlane.f32.xlu0 %v1234
    %v1236 = vpop.xlane.xlu0 %1235
    %v1237 = vsel %vm142, %v1228, 0.0
    %1238 = vadd.xlane.f32.xlu0 %v1237
    %v1239 = vpop.xlane.xlu0 %1238
    %v1240 = vsel %vm142, %v1230, 0.0
    %1241 = vadd.xlane.f32.xlu0 %v1240
    %v1242 = vpop.xlane.xlu0 %1241
    %v1243 = vrcp.pop %v1233
    %v1244 = vrcp.pop %v1236
    %v1245 = vrcp.pop %v1239
    %v1246 = vrcp.pop %v1242
    %v1247 = vmul.f32 %v1224, %v1243
    %v1248 = vmul.f32 %v1226, %v1244
    %v1249 = vmul.f32 %v1228, %v1245
    %v1250 = vmul.f32 %v1230, %v1246
    %v1251 = vpack.c.bf16 %v1248, %v1247
    %v1252 = vpack.c.bf16 %v1250, %v1249
    %1253 = vrot.lane.b32.xlu0 %v695, 48
    %v1254 = vpop.permute.xlu0 %1253
    %1255 = vrot.lane.b32.xlu0 %v696, 48
    %v1256 = vpop.permute.xlu0 %1255
    %v1260 = vsel %vm142, %v1251, 0
    %v1263 = vsel %vm142, %v1252, 0
    %1265 = vmatprep.subr.bf16.mxu0 0
    %1266 = vmatpush1.bf16.msra.mxu0 %v1254
    %1267 = vmatprep.subr.bf16.mxu0 0
    %1268 = vmatpush1.bf16.msra.mxu0 %v1256
    %1269 = vmatprep.subr.bf16.mxu0 0
    %1270 = vmatpush1.bf16.msra.mxu0 0
    %1271 = vmatprep.subr.bf16.mxu0 0
    %1272 = vmatpush1.bf16.msra.mxu0 0
    %1273 = vmatprep.subr.bf16.mxu0 0
    %1274 = vmatpush1.bf16.msra.mxu0 0
    %1275 = vmatprep.subr.bf16.mxu0 0
    %1276 = vmatpush1.bf16.msra.mxu0 0
    %1277 = vmatprep.subr.bf16.mxu0 0
    %1278 = vmatpush1.bf16.msra.mxu0 0
    %1279 = vmatprep.subr.bf16.mxu0 0
    %1280 = vmatpush1.bf16.msra.mxu0 0
    %1281 = vmatprep.subr.bf16.mxu0 0
    %1282 = vmatpush1.bf16.msra.mxu0 0
    %1283 = vmatprep.subr.bf16.mxu0 0
    %1284 = vmatpush1.bf16.msra.mxu0 0
    %1285 = vmatprep.subr.bf16.mxu0 0
    %1286 = vmatpush1.bf16.msra.mxu0 0
    %1287 = vmatprep.subr.bf16.mxu0 0
    %1288 = vmatpush1.bf16.msra.mxu0 0
    %1289 = vmatprep.subr.bf16.mxu0 0
    %1290 = vmatpush1.bf16.msra.mxu0 0
    %1291 = vmatprep.subr.bf16.mxu0 0
    %1292 = vmatpush1.bf16.msra.mxu0 0
    %1293 = vmatprep.subr.bf16.mxu0 0
    %1294 = vmatpush1.bf16.msra.mxu0 0
    %1295 = vmatprep.subr.bf16.mxu0 0
    %1296 = vmatpush1.bf16.msra.mxu0 0
    %1297 = vmatprep.mubr.bf16.mxu0 0
    %1298 = vmatmul.mubr.bf16.gmra.mrb[0].mxu0 %v1260
    %v1299 = vpop.f32.mrb[0].mxu0
    %v1300 = vadd.f32 0.0, %v1299
    %v1301 = vpop.f32.mrb[0].mxu0
    %v1302 = vpop.f32.mrb[0].mxu0
    %v1303 = vadd.f32 0.0, %v1302
    %v1304 = vpop.f32.mrb[0].mxu0
    %1305 = vmatprep.mubr.bf16.mxu0 0
    %1306 = vmatmul.mubr.bf16.gmra.mrb[0].mxu0 %v1263
    %v1307 = vpop.f32.mrb[0].mxu0
    %v1308 = vadd.f32 0.0, %v1307
    %v1309 = vpop.f32.mrb[0].mxu0
    %v1310 = vpop.f32.mrb[0].mxu0
    %v1311 = vadd.f32 0.0, %v1310
    %v1312 = vpop.f32.mrb[0].mxu0
    %1313 = vdwg.mxu0
    %1318 = vrot.lane.b32.xlu0 %v1300, 16
    %v1319 = vpop.permute.xlu0 %1318
    %1320 = vrot.lane.b32.xlu0 %v1303, 16
    %v1321 = vpop.permute.xlu0 %1320
    %1322 = vrot.lane.b32.xlu0 %v1308, 16
    %v1323 = vpop.permute.xlu0 %1322
    %1324 = vrot.lane.b32.xlu0 %v1311, 16
    %v1325 = vpop.permute.xlu0 %1324
    %v1330 = vsel %vm249, %v746, %v1319
    %v1331 = vsel %vm249, %v749, %v1321
    %v1332 = vsel %vm249, %v754, %v1323
    %v1333 = vsel %vm249, %v757, %v1325
    %v1334 = vpack.c.bf16 %v1331, %v1330
    %v1335 = vpack.c.bf16 %v1333, %v1332
    %v1336 = vld [vmem:[%s7] sm:$0xf]
    %v1337 = vld [vmem:[%s7 + $0x4] sm:$0xf]
    %v1338 = vld [vmem:[%s7 + $0x8] sm:$0xf]
    %v1339 = vld [vmem:[%s7 + $0xc] sm:$0xf]
    %v1344 = vunpack.c.l.b16 %v1336
    %v1345 = vunpack.c.l.b16 %v1337
    %v1346 = vunpack.c.l.b16 %v1338
    %v1347 = vunpack.c.l.b16 %v1339
    %v1348 = vpack.c.b16 %v1345, %v1344
    %v1349 = vpack.c.b16 %v1347, %v1346
    %v1353 = vsel %vm142, %v1334, 0
    %v1356 = vsel %vm142, %v1335, 0
    %1358 = vmatprep.subr.bf16.mxu0 0
    %1359 = vmatpush1.bf16.msra.mxu0 %v1348
    %1360 = vmatprep.subr.bf16.mxu0 0
    %1361 = vmatpush1.bf16.msra.mxu0 %v1349
    %1362 = vmatprep.subr.bf16.mxu0 0
    %1363 = vmatpush1.bf16.msra.mxu0 0
    %1364 = vmatprep.subr.bf16.mxu0 0
    %1365 = vmatpush1.bf16.msra.mxu0 0
    %1366 = vmatprep.subr.bf16.mxu0 0
    %1367 = vmatpush1.bf16.msra.mxu0 0
    %1368 = vmatprep.subr.bf16.mxu0 0
    %1369 = vmatpush1.bf16.msra.mxu0 0
    %1370 = vmatprep.subr.bf16.mxu0 0
    %1371 = vmatpush1.bf16.msra.mxu0 0
    %1372 = vmatprep.subr.bf16.mxu0 0
    %1373 = vmatpush1.bf16.msra.mxu0 0
    %1374 = vmatprep.subr.bf16.mxu0 0
    %1375 = vmatpush1.bf16.msra.mxu0 0
    %1376 = vmatprep.subr.bf16.mxu0 0
    %1377 = vmatpush1.bf16.msra.mxu0 0
    %1378 = vmatprep.subr.bf16.mxu0 0
    %1379 = vmatpush1.bf16.msra.mxu0 0
    %1380 = vmatprep.subr.bf16.mxu0 0
    %1381 = vmatpush1.bf16.msra.mxu0 0
    %1382 = vmatprep.subr.bf16.mxu0 0
    %1383 = vmatpush1.bf16.msra.mxu0 0
    %1384 = vmatprep.subr.bf16.mxu0 0
    %1385 = vmatpush1.bf16.msra.mxu0 0
    %1386 = vmatprep.subr.bf16.mxu0 0
    %1387 = vmatpush1.bf16.msra.mxu0 0
    %1388 = vmatprep.subr.bf16.mxu0 0
    %1389 = vmatpush1.bf16.msra.mxu0 0
    %1390 = vmatprep.mubr.bf16.mxu0 0
    %1391 = vmatmul.mubr.bf16.gmra.mrb[0].mxu0 %v1353
    %v1392 = vpop.f32.mrb[0].mxu0
    %v1393 = vadd.f32 0.0, %v1392
    %v1394 = vpop.f32.mrb[0].mxu0
    %v1395 = vpop.f32.mrb[0].mxu0
    %v1396 = vadd.f32 0.0, %v1395
    %v1397 = vpop.f32.mrb[0].mxu0
    %1398 = vmatprep.mubr.bf16.mxu0 0
    %1399 = vmatmul.mubr.bf16.gmra.mrb[0].mxu0 %v1356
    %v1400 = vpop.f32.mrb[0].mxu0
    %v1401 = vadd.f32 0.0, %v1400
    %v1402 = vpop.f32.mrb[0].mxu0
    %v1403 = vpop.f32.mrb[0].mxu0
    %v1404 = vadd.f32 0.0, %v1403
    %v1405 = vpop.f32.mrb[0].mxu0
    %1406 = vdwg.mxu0
    %v1407 = vadd.f32 %v120, %v1393
    %v1408 = vadd.f32 %v123, %v1396
    %v1409 = vadd.f32 %v128, %v1401
    %v1410 = vadd.f32 %v131, %v1404
    %v1411 = vmul.f32 %v1407, %v1407
    %v1412 = vmul.f32 %v1408, %v1408
    %v1413 = vmul.f32 %v1409, %v1409
    %v1414 = vmul.f32 %v1410, %v1410
    %v1415 = vsel %vm142, %v1411, 0.0
    %1416 = vadd.xlane.f32.xlu0 %v1415
    %v1417 = vpop.xlane.xlu0 %1416
    %v1418 = vsel %vm142, %v1412, 0.0
    %1419 = vadd.xlane.f32.xlu0 %v1418
    %v1420 = vpop.xlane.xlu0 %1419
    %v1421 = vsel %vm142, %v1413, 0.0
    %1422 = vadd.xlane.f32.xlu0 %v1421
    %v1423 = vpop.xlane.xlu0 %1422
    %v1424 = vsel %vm142, %v1414, 0.0
    %1425 = vadd.xlane.f32.xlu0 %v1424
    %v1426 = vpop.xlane.xlu0 %1425
    %v1427 = vmul.f32 %v1417, %v155
    %v1428 = vmul.f32 %v1420, %v155
    %v1429 = vmul.f32 %v1423, %v155
    %v1430 = vmul.f32 %v1426, %v155
    %v1431 = vadd.f32 %v1427, 1e-06
    %v1432 = vadd.f32 %v1428, 1e-06
    %v1433 = vadd.f32 %v1429, 1e-06
    %v1434 = vadd.f32 %v1430, 1e-06
    %v1435 = vrsqrt.pop %v1431
    %v1436 = vrsqrt.pop %v1432
    %v1437 = vrsqrt.pop %v1433
    %v1438 = vrsqrt.pop %v1434
    %v1439 = vmul.f32 %v1407, %v1435
    %v1440 = vmul.f32 %v1408, %v1436
    %v1441 = vmul.f32 %v1409, %v1437
    %v1442 = vmul.f32 %v1410, %v1438
    %v1443 = vpack.c.bf16 %v1440, %v1439
    %v1444 = vpack.c.bf16 %v1442, %v1441
    %v1445 = vld [vmem:[%s8] sm:$0xf]
    %v1446 = vld [vmem:[%s8 + $0x4] sm:$0xf]
    %v1447 = vld [vmem:[%s8 + $0x8] sm:$0xf]
    %v1448 = vld [vmem:[%s8 + $0xc] sm:$0xf]
    %v1453 = vunpack.c.l.b16 %v1445
    %v1454 = vunpack.c.l.b16 %v1446
    %v1455 = vunpack.c.l.b16 %v1447
    %v1456 = vunpack.c.l.b16 %v1448
    %v1457 = vpack.c.b16 %v1454, %v1453
    %v1458 = vpack.c.b16 %v1456, %v1455
    %v1462 = vsel %vm142, %v1443, 0
    %v1465 = vsel %vm142, %v1444, 0
    %1467 = vmatprep.subr.bf16.mxu0 0
    %1468 = vmatpush1.bf16.msra.mxu0 %v1457
    %1469 = vmatprep.subr.bf16.mxu0 0
    %1470 = vmatpush1.bf16.msra.mxu0 %v1458
    %1471 = vmatprep.subr.bf16.mxu0 0
    %1472 = vmatpush1.bf16.msra.mxu0 0
    %1473 = vmatprep.subr.bf16.mxu0 0
    %1474 = vmatpush1.bf16.msra.mxu0 0
    %1475 = vmatprep.subr.bf16.mxu0 0
    %1476 = vmatpush1.bf16.msra.mxu0 0
    %1477 = vmatprep.subr.bf16.mxu0 0
    %1478 = vmatpush1.bf16.msra.mxu0 0
    %1479 = vmatprep.subr.bf16.mxu0 0
    %1480 = vmatpush1.bf16.msra.mxu0 0
    %1481 = vmatprep.subr.bf16.mxu0 0
    %1482 = vmatpush1.bf16.msra.mxu0 0
    %1483 = vmatprep.subr.bf16.mxu0 0
    %1484 = vmatpush1.bf16.msra.mxu0 0
    %1485 = vmatprep.subr.bf16.mxu0 0
    %1486 = vmatpush1.bf16.msra.mxu0 0
    %1487 = vmatprep.subr.bf16.mxu0 0
    %1488 = vmatpush1.bf16.msra.mxu0 0
    %1489 = vmatprep.subr.bf16.mxu0 0
    %1490 = vmatpush1.bf16.msra.mxu0 0
    %1491 = vmatprep.subr.bf16.mxu0 0
    %1492 = vmatpush1.bf16.msra.mxu0 0
    %1493 = vmatprep.subr.bf16.mxu0 0
    %1494 = vmatpush1.bf16.msra.mxu0 0
    %1495 = vmatprep.subr.bf16.mxu0 0
    %1496 = vmatpush1.bf16.msra.mxu0 0
    %1497 = vmatprep.subr.bf16.mxu0 0
    %1498 = vmatpush1.bf16.msra.mxu0 0
    %1499 = vmatprep.mubr.bf16.mxu0 0
    %1500 = vmatmul.mubr.bf16.gmra.mrb[0].mxu0 %v1462
    %v1501 = vpop.f32.mrb[0].mxu0
    %v1502 = vadd.f32 0.0, %v1501
    %v1503 = vpop.f32.mrb[0].mxu0
    %v1504 = vpop.f32.mrb[0].mxu0
    %v1505 = vadd.f32 0.0, %v1504
    %v1506 = vpop.f32.mrb[0].mxu0
    %1507 = vmatprep.mubr.bf16.mxu0 0
    %1508 = vmatmul.mubr.bf16.gmra.mrb[0].mxu0 %v1465
    %v1509 = vpop.f32.mrb[0].mxu0
    %v1510 = vadd.f32 0.0, %v1509
    %v1511 = vpop.f32.mrb[0].mxu0
    %v1512 = vpop.f32.mrb[0].mxu0
    %v1513 = vadd.f32 0.0, %v1512
    %v1514 = vpop.f32.mrb[0].mxu0
    %1515 = vdwg.mxu0
    %v1516 = vmax.f32 %v1502, 0.0
    %v1517 = vmax.f32 %v1505, 0.0
    %v1518 = vmax.f32 %v1510, 0.0
    %v1519 = vmax.f32 %v1513, 0.0
    %v1520 = vmul.f32 %v1516, %v1516
    %v1521 = vmul.f32 %v1517, %v1517
    %v1522 = vmul.f32 %v1518, %v1518
    %v1523 = vmul.f32 %v1519, %v1519
    %v1524 = vpack.c.bf16 %v1521, %v1520
    %v1525 = vpack.c.bf16 %v1523, %v1522
    %v1526 = vld [vmem:[%s9] sm:$0xf]
    %v1527 = vld [vmem:[%s9 + $0x4] sm:$0xf]
    %v1528 = vld [vmem:[%s9 + $0x8] sm:$0xf]
    %v1529 = vld [vmem:[%s9 + $0xc] sm:$0xf]
    %v1530 = vld [vmem:[%s9 + $0x10] sm:$0xf]
    %v1531 = vld [vmem:[%s9 + $0x14] sm:$0xf]
    %v1532 = vld [vmem:[%s9 + $0x18] sm:$0xf]
    %v1533 = vld [vmem:[%s9 + $0x1c] sm:$0xf]
    %v1542 = vunpack.c.l.b16 %v1526
    %v1543 = vunpack.c.l.b16 %v1527
    %v1544 = vunpack.c.l.b16 %v1528
    %v1545 = vunpack.c.l.b16 %v1529
    %v1546 = vunpack.c.l.b16 %v1530
    %v1547 = vunpack.c.l.b16 %v1531
    %v1548 = vunpack.c.l.b16 %v1532
    %v1549 = vunpack.c.l.b16 %v1533
    %v1550 = vpack.c.b16 %v1543, %v1542
    %v1551 = vpack.c.b16 %v1545, %v1544
    %v1552 = vpack.c.b16 %v1547, %v1546
    %v1553 = vpack.c.b16 %v1549, %v1548
    %vm1558 = vcmask 523264
    %v1560 = vsel %vm1558, %v1524, 0
    %v1563 = vsel %vm1558, %v1525, 0
    %1565 = vmatprep.subr.bf16.mxu0 0
    %1566 = vmatpush1.bf16.msra.mxu0 %v1550
    %1567 = vmatprep.subr.bf16.mxu0 0
    %1568 = vmatpush1.bf16.msra.mxu0 %v1551
    %1569 = vmatprep.subr.bf16.mxu0 0
    %1570 = vmatpush1.bf16.msra.mxu0 %v1552
    %1571 = vmatprep.subr.bf16.mxu0 0
    %1572 = vmatpush1.bf16.msra.mxu0 %v1553
    %1573 = vmatprep.subr.bf16.mxu0 0
    %1574 = vmatpush1.bf16.msra.mxu0 0
    %1575 = vmatprep.subr.bf16.mxu0 0
    %1576 = vmatpush1.bf16.msra.mxu0 0
    %1577 = vmatprep.subr.bf16.mxu0 0
    %1578 = vmatpush1.bf16.msra.mxu0 0
    %1579 = vmatprep.subr.bf16.mxu0 0
    %1580 = vmatpush1.bf16.msra.mxu0 0
    %1581 = vmatprep.subr.bf16.mxu0 0
    %1582 = vmatpush1.bf16.msra.mxu0 0
    %1583 = vmatprep.subr.bf16.mxu0 0
    %1584 = vmatpush1.bf16.msra.mxu0 0
    %1585 = vmatprep.subr.bf16.mxu0 0
    %1586 = vmatpush1.bf16.msra.mxu0 0
    %1587 = vmatprep.subr.bf16.mxu0 0
    %1588 = vmatpush1.bf16.msra.mxu0 0
    %1589 = vmatprep.subr.bf16.mxu0 0
    %1590 = vmatpush1.bf16.msra.mxu0 0
    %1591 = vmatprep.subr.bf16.mxu0 0
    %1592 = vmatpush1.bf16.msra.mxu0 0
    %1593 = vmatprep.subr.bf16.mxu0 0
    %1594 = vmatpush1.bf16.msra.mxu0 0
    %1595 = vmatprep.subr.bf16.mxu0 0
    %1596 = vmatpush1.bf16.msra.mxu0 0
    %1597 = vmatprep.mubr.bf16.mxu0 0
    %1598 = vmatmul.mubr.bf16.gmra.mrb[0].mxu0 %v1560
    %v1599 = vpop.f32.mrb[0].mxu0
    %v1600 = vadd.f32 0.0, %v1599
    %v1601 = vpop.f32.mrb[0].mxu0
    %v1602 = vpop.f32.mrb[0].mxu0
    %v1603 = vadd.f32 0.0, %v1602
    %v1604 = vpop.f32.mrb[0].mxu0
    %1605 = vmatprep.mubr.bf16.mxu0 0
    %1606 = vmatmul.mubr.bf16.gmra.mrb[0].mxu0 %v1563
    %v1607 = vpop.f32.mrb[0].mxu0
    %v1608 = vadd.f32 0.0, %v1607
    %v1609 = vpop.f32.mrb[0].mxu0
    %v1610 = vpop.f32.mrb[0].mxu0
    %v1611 = vadd.f32 0.0, %v1610
    %v1612 = vpop.f32.mrb[0].mxu0
    %1613 = vdwg.mxu0
    %v1614 = vadd.f32 %v1407, %v1600
    %v1615 = vadd.f32 %v1408, %v1603
    %v1616 = vadd.f32 %v1409, %v1608
    %v1617 = vadd.f32 %v1410, %v1611
    %v1618 = vmul.f32 %v1614, %v1614
    %v1619 = vmul.f32 %v1615, %v1615
    %v1620 = vmul.f32 %v1616, %v1616
    %v1621 = vmul.f32 %v1617, %v1617
    %v1622 = vsel %vm142, %v1618, 0.0
    %1623 = vadd.xlane.f32.xlu0 %v1622
    %v1624 = vpop.xlane.xlu0 %1623
    %v1625 = vsel %vm142, %v1619, 0.0
    %1626 = vadd.xlane.f32.xlu0 %v1625
    %v1627 = vpop.xlane.xlu0 %1626
    %v1628 = vsel %vm142, %v1620, 0.0
    %1629 = vadd.xlane.f32.xlu0 %v1628
    %v1630 = vpop.xlane.xlu0 %1629
    %v1631 = vsel %vm142, %v1621, 0.0
    %1632 = vadd.xlane.f32.xlu0 %v1631
    %v1633 = vpop.xlane.xlu0 %1632
    %v1634 = vmul.f32 %v1624, %v155
    %v1635 = vmul.f32 %v1627, %v155
    %v1636 = vmul.f32 %v1630, %v155
    %v1637 = vmul.f32 %v1633, %v155
    %v1638 = vadd.f32 %v1634, 1e-06
    %v1639 = vadd.f32 %v1635, 1e-06
    %v1640 = vadd.f32 %v1636, 1e-06
    %v1641 = vadd.f32 %v1637, 1e-06
    %v1642 = vrsqrt.pop %v1638
    %v1643 = vrsqrt.pop %v1639
    %v1644 = vrsqrt.pop %v1640
    %v1645 = vrsqrt.pop %v1641
    %v1646 = vmul.f32 %v1614, %v1642
    %v1647 = vmul.f32 %v1615, %v1643
    %v1648 = vmul.f32 %v1616, %v1644
    %v1649 = vmul.f32 %v1617, %v1645
    %v1650 = vpack.c.bf16 %v1647, %v1646
    %v1651 = vpack.c.bf16 %v1649, %v1648
    %s1652 = scalar_lea.vmem %s6, 16
    %v1653 = vld [vmem:[%s1652] sm:$0xf]
    %v1654 = vld [vmem:[%s1652 + $0x4] sm:$0xf]
    %v1655 = vld [vmem:[%s1652 + $0x8] sm:$0xf]
    %v1656 = vld [vmem:[%s1652 + $0xc] sm:$0xf]
    %v1661 = vunpack.c.l.b16 %v1653
    %v1662 = vunpack.c.l.b16 %v1654
    %v1663 = vunpack.c.l.b16 %v1655
    %v1664 = vunpack.c.l.b16 %v1656
    %v1665 = vpack.c.b16 %v1662, %v1661
    %v1666 = vpack.c.b16 %v1664, %v1663
    %v1670 = vsel %vm142, %v1650, 0
    %v1673 = vsel %vm142, %v1651, 0
    %1675 = vmatprep.subr.bf16.mxu0 0
    %1676 = vmatpush1.bf16.msra.mxu0 %v1665
    %1677 = vmatprep.subr.bf16.mxu0 0
    %1678 = vmatpush1.bf16.msra.mxu0 %v1666
    %1679 = vmatprep.subr.bf16.mxu0 0
    %1680 = vmatpush1.bf16.msra.mxu0 0
    %1681 = vmatprep.subr.bf16.mxu0 0
    %1682 = vmatpush1.bf16.msra.mxu0 0
    %1683 = vmatprep.subr.bf16.mxu0 0
    %1684 = vmatpush1.bf16.msra.mxu0 0
    %1685 = vmatprep.subr.bf16.mxu0 0
    %1686 = vmatpush1.bf16.msra.mxu0 0
    %1687 = vmatprep.subr.bf16.mxu0 0
    %1688 = vmatpush1.bf16.msra.mxu0 0
    %1689 = vmatprep.subr.bf16.mxu0 0
    %1690 = vmatpush1.bf16.msra.mxu0 0
    %1691 = vmatprep.subr.bf16.mxu0 0
    %1692 = vmatpush1.bf16.msra.mxu0 0
    %1693 = vmatprep.subr.bf16.mxu0 0
    %1694 = vmatpush1.bf16.msra.mxu0 0
    %1695 = vmatprep.subr.bf16.mxu0 0
    %1696 = vmatpush1.bf16.msra.mxu0 0
    %1697 = vmatprep.subr.bf16.mxu0 0
    %1698 = vmatpush1.bf16.msra.mxu0 0
    %1699 = vmatprep.subr.bf16.mxu0 0
    %1700 = vmatpush1.bf16.msra.mxu0 0
    %1701 = vmatprep.subr.bf16.mxu0 0
    %1702 = vmatpush1.bf16.msra.mxu0 0
    %1703 = vmatprep.subr.bf16.mxu0 0
    %1704 = vmatpush1.bf16.msra.mxu0 0
    %1705 = vmatprep.subr.bf16.mxu0 0
    %1706 = vmatpush1.bf16.msra.mxu0 0
    %1707 = vmatprep.mubr.bf16.mxu0 0
    %1708 = vmatmul.mubr.bf16.gmra.mrb[0].mxu0 %v1670
    %v1709 = vpop.f32.mrb[0].mxu0
    %v1710 = vadd.f32 0.0, %v1709
    %v1711 = vpop.f32.mrb[0].mxu0
    %v1712 = vpop.f32.mrb[0].mxu0
    %v1713 = vadd.f32 0.0, %v1712
    %v1714 = vpop.f32.mrb[0].mxu0
    %1715 = vmatprep.mubr.bf16.mxu0 0
    %1716 = vmatmul.mubr.bf16.gmra.mrb[0].mxu0 %v1673
    %v1717 = vpop.f32.mrb[0].mxu0
    %v1718 = vadd.f32 0.0, %v1717
    %v1719 = vpop.f32.mrb[0].mxu0
    %v1720 = vpop.f32.mrb[0].mxu0
    %v1721 = vadd.f32 0.0, %v1720
    %v1722 = vpop.f32.mrb[0].mxu0
    %1723 = vdwg.mxu0
    %v1724 = vmul.f32 %v1710, %v1710
    %v1725 = vmul.f32 %v1713, %v1713
    %v1726 = vmul.f32 %v1718, %v1718
    %v1727 = vmul.f32 %v1721, %v1721
    %v1728 = vsel %vm249, %v1724, 0.0
    %1729 = vadd.xlane.f32.xlu0 %v1728
    %v1730 = vpop.xlane.xlu0 %1729
    %v1731 = vsel %vm249, %v1725, 0.0
    %1732 = vadd.xlane.f32.xlu0 %v1731
    %v1733 = vpop.xlane.xlu0 %1732
    %v1734 = vsel %vm249, %v1726, 0.0
    %1735 = vadd.xlane.f32.xlu0 %v1734
    %v1736 = vpop.xlane.xlu0 %1735
    %v1737 = vsel %vm249, %v1727, 0.0
    %1738 = vadd.xlane.f32.xlu0 %v1737
    %v1739 = vpop.xlane.xlu0 %1738
    %v1740 = vmul.f32 %v1730, %v262
    %v1741 = vmul.f32 %v1733, %v262
    %v1742 = vmul.f32 %v1736, %v262
    %v1743 = vmul.f32 %v1739, %v262
    %v1744 = vadd.f32 %v1740, 1e-06
    %v1745 = vadd.f32 %v1741, 1e-06
    %v1746 = vadd.f32 %v1742, 1e-06
    %v1747 = vadd.f32 %v1743, 1e-06
    %v1748 = vrsqrt.pop %v1744
    %v1749 = vrsqrt.pop %v1745
    %v1750 = vrsqrt.pop %v1746
    %v1751 = vrsqrt.pop %v1747
    %v1752 = vmul.f32 %v1710, %v1748
    %v1753 = vmul.f32 %v1713, %v1749
    %v1754 = vmul.f32 %v1718, %v1750
    %v1755 = vmul.f32 %v1721, %v1751
    %1760 = vrot.lane.b32.xlu0 %v1724, 96
    %v1761 = vpop.permute.xlu0 %1760
    %1762 = vrot.lane.b32.xlu0 %v1725, 96
    %v1763 = vpop.permute.xlu0 %1762
    %1764 = vrot.lane.b32.xlu0 %v1726, 96
    %v1765 = vpop.permute.xlu0 %1764
    %1766 = vrot.lane.b32.xlu0 %v1727, 96
    %v1767 = vpop.permute.xlu0 %1766
    %v1772 = vsel %vm249, %v1761, 0.0
    %1773 = vadd.xlane.f32.xlu0 %v1772
    %v1774 = vpop.xlane.xlu0 %1773
    %v1775 = vsel %vm249, %v1763, 0.0
    %1776 = vadd.xlane.f32.xlu0 %v1775
    %v1777 = vpop.xlane.xlu0 %1776
    %v1778 = vsel %vm249, %v1765, 0.0
    %1779 = vadd.xlane.f32.xlu0 %v1778
    %v1780 = vpop.xlane.xlu0 %1779
    %v1781 = vsel %vm249, %v1767, 0.0
    %1782 = vadd.xlane.f32.xlu0 %v1781
    %v1783 = vpop.xlane.xlu0 %1782
    %v1784 = vmul.f32 %v1774, %v262
    %v1785 = vmul.f32 %v1777, %v262
    %v1786 = vmul.f32 %v1780, %v262
    %v1787 = vmul.f32 %v1783, %v262
    %v1788 = vadd.f32 %v1784, 1e-06
    %v1789 = vadd.f32 %v1785, 1e-06
    %v1790 = vadd.f32 %v1786, 1e-06
    %v1791 = vadd.f32 %v1787, 1e-06
    %v1792 = vrsqrt.pop %v1788
    %v1793 = vrsqrt.pop %v1789
    %v1794 = vrsqrt.pop %v1790
    %v1795 = vrsqrt.pop %v1791
    %v1796 = vmul.f32 %v1710, %v1792
    %v1797 = vmul.f32 %v1713, %v1793
    %v1798 = vmul.f32 %v1718, %v1794
    %v1799 = vmul.f32 %v1721, %v1795
    %v1800 = vmul.f32 %v1752, %v323
    %v1801 = vmul.f32 %v1753, %v324
    %v1802 = vmul.f32 %v1754, %v325
    %v1803 = vmul.f32 %v1755, %v326
    %v1804 = vmul.f32 %v1752, %v340
    %v1805 = vmul.f32 %v1753, %v342
    %v1806 = vmul.f32 %v1754, %v344
    %v1807 = vmul.f32 %v1755, %v346
    %1812 = vrot.lane.b32.xlu0 %v1804, 120
    %v1813 = vpop.permute.xlu0 %1812
    %1814 = vrot.lane.b32.xlu0 %v1805, 120
    %v1815 = vpop.permute.xlu0 %1814
    %1816 = vrot.lane.b32.xlu0 %v1806, 120
    %v1817 = vpop.permute.xlu0 %1816
    %1818 = vrot.lane.b32.xlu0 %v1807, 120
    %v1819 = vpop.permute.xlu0 %1818
    %v1824 = vsub.f32 %v1800, %v1813
    %v1825 = vsub.f32 %v1801, %v1815
    %v1826 = vsub.f32 %v1802, %v1817
    %v1827 = vsub.f32 %v1803, %v1819
    %v1828 = vmul.f32 %v1752, %v327
    %v1829 = vmul.f32 %v1753, %v328
    %v1830 = vmul.f32 %v1754, %v329
    %v1831 = vmul.f32 %v1755, %v330
    %v1832 = vmul.f32 %v1752, %v384
    %v1833 = vmul.f32 %v1753, %v386
    %v1834 = vmul.f32 %v1754, %v388
    %v1835 = vmul.f32 %v1755, %v390
    %1840 = vrot.lane.b32.xlu0 %v1832, 120
    %v1841 = vpop.permute.xlu0 %1840
    %1842 = vrot.lane.b32.xlu0 %v1833, 120
    %v1843 = vpop.permute.xlu0 %1842
    %1844 = vrot.lane.b32.xlu0 %v1834, 120
    %v1845 = vpop.permute.xlu0 %1844
    %1846 = vrot.lane.b32.xlu0 %v1835, 120
    %v1847 = vpop.permute.xlu0 %1846
    %v1852 = vadd.f32 %v1828, %v1841
    %v1853 = vadd.f32 %v1829, %v1843
    %v1854 = vadd.f32 %v1830, %v1845
    %v1855 = vadd.f32 %v1831, %v1847
    %1860 = vrot.lane.b32.xlu0 %v1852, 8
    %v1861 = vpop.permute.xlu0 %1860
    %1862 = vrot.lane.b32.xlu0 %v1853, 8
    %v1863 = vpop.permute.xlu0 %1862
    %1864 = vrot.lane.b32.xlu0 %v1854, 8
    %v1865 = vpop.permute.xlu0 %1864
    %1866 = vrot.lane.b32.xlu0 %v1855, 8
    %v1867 = vpop.permute.xlu0 %1866
    %v1872 = vsel %vm435, %v1824, %v1861
    %v1873 = vsel %vm435, %v1825, %v1863
    %v1874 = vsel %vm435, %v1826, %v1865
    %v1875 = vsel %vm435, %v1827, %v1867
    %v1876 = vmul.f32 %v1872, 0.25
    %v1877 = vmul.f32 %v1873, 0.25
    %v1878 = vmul.f32 %v1874, 0.25
    %v1879 = vmul.f32 %v1875, 0.25
    %v1880 = vmul.f32 %v1796, %v445
    %v1881 = vmul.f32 %v1797, %v447
    %v1882 = vmul.f32 %v1798, %v449
    %v1883 = vmul.f32 %v1799, %v451
    %v1884 = vmul.f32 %v1796, %v461
    %v1885 = vmul.f32 %v1797, %v463
    %v1886 = vmul.f32 %v1798, %v465
    %v1887 = vmul.f32 %v1799, %v467
    %1892 = vrot.lane.b32.xlu0 %v1884, 120
    %v1893 = vpop.permute.xlu0 %1892
    %1894 = vrot.lane.b32.xlu0 %v1885, 120
    %v1895 = vpop.permute.xlu0 %1894
    %1896 = vrot.lane.b32.xlu0 %v1886, 120
    %v1897 = vpop.permute.xlu0 %1896
    %1898 = vrot.lane.b32.xlu0 %v1887, 120
    %v1899 = vpop.permute.xlu0 %1898
    %v1904 = vsub.f32 %v1880, %v1893
    %v1905 = vsub.f32 %v1881, %v1895
    %v1906 = vsub.f32 %v1882, %v1897
    %v1907 = vsub.f32 %v1883, %v1899
    %v1908 = vmul.f32 %v1796, %v497
    %v1909 = vmul.f32 %v1797, %v499
    %v1910 = vmul.f32 %v1798, %v501
    %v1911 = vmul.f32 %v1799, %v503
    %v1912 = vmul.f32 %v1796, %v513
    %v1913 = vmul.f32 %v1797, %v515
    %v1914 = vmul.f32 %v1798, %v517
    %v1915 = vmul.f32 %v1799, %v519
    %1920 = vrot.lane.b32.xlu0 %v1912, 120
    %v1921 = vpop.permute.xlu0 %1920
    %1922 = vrot.lane.b32.xlu0 %v1913, 120
    %v1923 = vpop.permute.xlu0 %1922
    %1924 = vrot.lane.b32.xlu0 %v1914, 120
    %v1925 = vpop.permute.xlu0 %1924
    %1926 = vrot.lane.b32.xlu0 %v1915, 120
    %v1927 = vpop.permute.xlu0 %1926
    %v1932 = vadd.f32 %v1908, %v1921
    %v1933 = vadd.f32 %v1909, %v1923
    %v1934 = vadd.f32 %v1910, %v1925
    %v1935 = vadd.f32 %v1911, %v1927
    %1940 = vrot.lane.b32.xlu0 %v1904, 96
    %v1941 = vpop.permute.xlu0 %1940
    %1942 = vrot.lane.b32.xlu0 %v1905, 96
    %v1943 = vpop.permute.xlu0 %1942
    %1944 = vrot.lane.b32.xlu0 %v1906, 96
    %v1945 = vpop.permute.xlu0 %1944
    %1946 = vrot.lane.b32.xlu0 %v1907, 96
    %v1947 = vpop.permute.xlu0 %1946
    %1956 = vrot.lane.b32.xlu0 %v1932, 104
    %v1957 = vpop.permute.xlu0 %1956
    %1958 = vrot.lane.b32.xlu0 %v1933, 104
    %v1959 = vpop.permute.xlu0 %1958
    %1960 = vrot.lane.b32.xlu0 %v1934, 104
    %v1961 = vpop.permute.xlu0 %1960
    %1962 = vrot.lane.b32.xlu0 %v1935, 104
    %v1963 = vpop.permute.xlu0 %1962
    %v1968 = vsel %vm435, %v1941, %v1957
    %v1969 = vsel %vm435, %v1943, %v1959
    %v1970 = vsel %vm435, %v1945, %v1961
    %v1971 = vsel %vm435, %v1947, %v1963
    %v1972 = vpack.c.bf16 %v1877, %v1876
    %v1973 = vpack.c.bf16 %v1879, %v1878
    %v1974 = vpack.c.bf16 %v1969, %v1968
    %v1975 = vpack.c.bf16 %v1971, %v1970
    %v1977 = vsel %vm249, %v1972, 0
    %v1980 = vsel %vm249, %v1973, 0
    %v1983 = vsel %vm249, %v1974, 0
    %v1986 = vsel %vm249, %v1975, 0
    %1988 = vmatprep.subr.bf16.mxu0 0
    %1989 = vmatpush1.bf16.xpose.msra.mxu0 %v1983
    %1990 = vmatprep.subr.bf16.mxu0 0
    %1991 = vmatpush1.bf16.xpose.msra.mxu0 %v1986
    %1992 = vmatprep.subr.bf16.mxu0 0
    %1993 = vmatpush1.bf16.xpose.msra.mxu0 0
    %1994 = vmatprep.subr.bf16.mxu0 0
    %1995 = vmatpush1.bf16.xpose.msra.mxu0 0
    %1996 = vmatprep.subr.bf16.mxu0 0
    %1997 = vmatpush1.bf16.xpose.msra.mxu0 0
    %1998 = vmatprep.subr.bf16.mxu0 0
    %1999 = vmatpush1.bf16.xpose.msra.mxu0 0
    %2000 = vmatprep.subr.bf16.mxu0 0
    %2001 = vmatpush1.bf16.xpose.msra.mxu0 0
    %2002 = vmatprep.subr.bf16.mxu0 0
    %2003 = vmatpush1.bf16.xpose.msra.mxu0 0
    %2004 = vmatprep.subr.bf16.mxu0 0
    %2005 = vmatpush1.bf16.xpose.msra.mxu0 0
    %2006 = vmatprep.subr.bf16.mxu0 0
    %2007 = vmatpush1.bf16.xpose.msra.mxu0 0
    %2008 = vmatprep.subr.bf16.mxu0 0
    %2009 = vmatpush1.bf16.xpose.msra.mxu0 0
    %2010 = vmatprep.subr.bf16.mxu0 0
    %2011 = vmatpush1.bf16.xpose.msra.mxu0 0
    %2012 = vmatprep.subr.bf16.mxu0 0
    %2013 = vmatpush1.bf16.xpose.msra.mxu0 0
    %2014 = vmatprep.subr.bf16.mxu0 0
    %2015 = vmatpush1.bf16.xpose.msra.mxu0 0
    %2016 = vmatprep.subr.bf16.mxu0 0
    %2017 = vmatpush1.bf16.xpose.msra.mxu0 0
    %2018 = vmatprep.subr.bf16.mxu0 0
    %2019 = vmatpush1.bf16.xpose.msra.mxu0 0
    %2020 = vmatprep.mubr.bf16.mxu0 0
    %2021 = vmatmul.mubr.bf16.gmra.mrb[0].mxu0 %v1977
    %v2022 = vpop.f32.mrb[0].mxu0
    %v2023 = vadd.f32 %v134, %v2022
    %v2024 = vpop.f32.mrb[0].mxu0
    %v2025 = vpop.f32.mrb[0].mxu0
    %v2026 = vadd.f32 %v135, %v2025
    %v2027 = vpop.f32.mrb[0].mxu0
    %2028 = vmatprep.mubr.bf16.mxu0 0
    %2029 = vmatmul.mubr.bf16.gmra.mrb[0].mxu0 %v1980
    %v2030 = vpop.f32.mrb[0].mxu0
    %v2031 = vadd.f32 %v136, %v2030
    %v2032 = vpop.f32.mrb[0].mxu0
    %v2033 = vpop.f32.mrb[0].mxu0
    %v2034 = vadd.f32 %v137, %v2033
    %v2035 = vpop.f32.mrb[0].mxu0
    %2036 = vdwg.mxu0
    %v2037 = vsel %vm142, %v2023, -inf
    %2038 = vmax.xlane.f32.xlu0 %v2037
    %v2039 = vpop.xlane.xlu0 %2038
    %v2040 = vsel %vm142, %v2026, -inf
    %2041 = vmax.xlane.f32.xlu0 %v2040
    %v2042 = vpop.xlane.xlu0 %2041
    %v2043 = vsel %vm142, %v2031, -inf
    %2044 = vmax.xlane.f32.xlu0 %v2043
    %v2045 = vpop.xlane.xlu0 %2044
    %v2046 = vsel %vm142, %v2034, -inf
    %2047 = vmax.xlane.f32.xlu0 %v2046
    %v2048 = vpop.xlane.xlu0 %2047
    %v2049 = vsub.f32 %v2023, %v2039
    %v2050 = vsub.f32 %v2026, %v2042
    %v2051 = vsub.f32 %v2031, %v2045
    %v2052 = vsub.f32 %v2034, %v2048
    %v2053 = vmul.f32 %v2049, 1.442695
    %v2054 = vpow.pop %v2053
    %v2055 = vmul.f32 %v2050, 1.442695
    %v2056 = vpow.pop %v2055
    %v2057 = vmul.f32 %v2051, 1.442695
    %v2058 = vpow.pop %v2057
    %v2059 = vmul.f32 %v2052, 1.442695
    %v2060 = vpow.pop %v2059
    %v2061 = vsel %vm142, %v2054, 0.0
    %2062 = vadd.xlane.f32.xlu0 %v2061
    %v2063 = vpop.xlane.xlu0 %2062
    %v2064 = vsel %vm142, %v2056, 0.0
    %2065 = vadd.xlane.f32.xlu0 %v2064
    %v2066 = vpop.xlane.xlu0 %2065
    %v2067 = vsel %vm142, %v2058, 0.0
    %2068 = vadd.xlane.f32.xlu0 %v2067
    %v2069 = vpop.xlane.xlu0 %2068
    %v2070 = vsel %vm142, %v2060, 0.0
    %2071 = vadd.xlane.f32.xlu0 %v2070
    %v2072 = vpop.xlane.xlu0 %2071
    %v2073 = vrcp.pop %v2063
    %v2074 = vrcp.pop %v2066
    %v2075 = vrcp.pop %v2069
    %v2076 = vrcp.pop %v2072
    %v2077 = vmul.f32 %v2054, %v2073
    %v2078 = vmul.f32 %v2056, %v2074
    %v2079 = vmul.f32 %v2058, %v2075
    %v2080 = vmul.f32 %v2060, %v2076
    %v2081 = vpack.c.bf16 %v2078, %v2077
    %v2082 = vpack.c.bf16 %v2080, %v2079
    %v2083 = vpack.c.bf16 %v1713, %v1710
    %v2084 = vpack.c.bf16 %v1721, %v1718
    %2087 = vrot.lane.b32.xlu0 %v2083, 64
    %v2088 = vpop.permute.xlu0 %2087
    %2089 = vrot.lane.b32.xlu0 %v2084, 64
    %v2090 = vpop.permute.xlu0 %2089
    %v2094 = vsel %vm142, %v2081, 0
    %v2097 = vsel %vm142, %v2082, 0
    %2099 = vmatprep.subr.bf16.mxu0 0
    %2100 = vmatpush1.bf16.msra.mxu0 %v2088
    %2101 = vmatprep.subr.bf16.mxu0 0
    %2102 = vmatpush1.bf16.msra.mxu0 %v2090
    %2103 = vmatprep.subr.bf16.mxu0 0
    %2104 = vmatpush1.bf16.msra.mxu0 0
    %2105 = vmatprep.subr.bf16.mxu0 0
    %2106 = vmatpush1.bf16.msra.mxu0 0
    %2107 = vmatprep.subr.bf16.mxu0 0
    %2108 = vmatpush1.bf16.msra.mxu0 0
    %2109 = vmatprep.subr.bf16.mxu0 0
    %2110 = vmatpush1.bf16.msra.mxu0 0
    %2111 = vmatprep.subr.bf16.mxu0 0
    %2112 = vmatpush1.bf16.msra.mxu0 0
    %2113 = vmatprep.subr.bf16.mxu0 0
    %2114 = vmatpush1.bf16.msra.mxu0 0
    %2115 = vmatprep.subr.bf16.mxu0 0
    %2116 = vmatpush1.bf16.msra.mxu0 0
    %2117 = vmatprep.subr.bf16.mxu0 0
    %2118 = vmatpush1.bf16.msra.mxu0 0
    %2119 = vmatprep.subr.bf16.mxu0 0
    %2120 = vmatpush1.bf16.msra.mxu0 0
    %2121 = vmatprep.subr.bf16.mxu0 0
    %2122 = vmatpush1.bf16.msra.mxu0 0
    %2123 = vmatprep.subr.bf16.mxu0 0
    %2124 = vmatpush1.bf16.msra.mxu0 0
    %2125 = vmatprep.subr.bf16.mxu0 0
    %2126 = vmatpush1.bf16.msra.mxu0 0
    %2127 = vmatprep.subr.bf16.mxu0 0
    %2128 = vmatpush1.bf16.msra.mxu0 0
    %2129 = vmatprep.subr.bf16.mxu0 0
    %2130 = vmatpush1.bf16.msra.mxu0 0
    %2131 = vmatprep.mubr.bf16.mxu0 0
    %2132 = vmatmul.mubr.bf16.gmra.mrb[0].mxu0 %v2094
    %v2133 = vpop.f32.mrb[0].mxu0
    %v2134 = vadd.f32 0.0, %v2133
    %v2135 = vpop.f32.mrb[0].mxu0
    %v2136 = vpop.f32.mrb[0].mxu0
    %v2137 = vadd.f32 0.0, %v2136
    %v2138 = vpop.f32.mrb[0].mxu0
    %2139 = vmatprep.mubr.bf16.mxu0 0
    %2140 = vmatmul.mubr.bf16.gmra.mrb[0].mxu0 %v2097
    %v2141 = vpop.f32.mrb[0].mxu0
    %v2142 = vadd.f32 0.0, %v2141
    %v2143 = vpop.f32.mrb[0].mxu0
    %v2144 = vpop.f32.mrb[0].mxu0
    %v2145 = vadd.f32 0.0, %v2144
    %v2146 = vpop.f32.mrb[0].mxu0
    %2147 = vdwg.mxu0
    %2148 = vrot.lane.b32.xlu0 %v1724, 112
    %v2149 = vpop.permute.xlu0 %2148
    %2150 = vrot.lane.b32.xlu0 %v1725, 112
    %v2151 = vpop.permute.xlu0 %2150
    %2152 = vrot.lane.b32.xlu0 %v1726, 112
    %v2153 = vpop.permute.xlu0 %2152
    %2154 = vrot.lane.b32.xlu0 %v1727, 112
    %v2155 = vpop.permute.xlu0 %2154
    %v2160 = vsel %vm249, %v2149, 0.0
    %2161 = vadd.xlane.f32.xlu0 %v2160
    %v2162 = vpop.xlane.xlu0 %2161
    %v2163 = vsel %vm249, %v2151, 0.0
    %2164 = vadd.xlane.f32.xlu0 %v2163
    %v2165 = vpop.xlane.xlu0 %2164
    %v2166 = vsel %vm249, %v2153, 0.0
    %2167 = vadd.xlane.f32.xlu0 %v2166
    %v2168 = vpop.xlane.xlu0 %2167
    %v2169 = vsel %vm249, %v2155, 0.0
    %2170 = vadd.xlane.f32.xlu0 %v2169
    %v2171 = vpop.xlane.xlu0 %2170
    %v2172 = vmul.f32 %v2162, %v262
    %v2173 = vmul.f32 %v2165, %v262
    %v2174 = vmul.f32 %v2168, %v262
    %v2175 = vmul.f32 %v2171, %v262
    %v2176 = vadd.f32 %v2172, 1e-06
    %v2177 = vadd.f32 %v2173, 1e-06
    %v2178 = vadd.f32 %v2174, 1e-06
    %v2179 = vadd.f32 %v2175, 1e-06
    %v2180 = vrsqrt.pop %v2176
    %v2181 = vrsqrt.pop %v2177
    %v2182 = vrsqrt.pop %v2178
    %v2183 = vrsqrt.pop %v2179
    %v2184 = vmul.f32 %v1710, %v2180
    %v2185 = vmul.f32 %v1713, %v2181
    %v2186 = vmul.f32 %v1718, %v2182
    %v2187 = vmul.f32 %v1721, %v2183
    %2188 = vrot.lane.b32.xlu0 %v1724, 80
    %v2189 = vpop.permute.xlu0 %2188
    %2190 = vrot.lane.b32.xlu0 %v1725, 80
    %v2191 = vpop.permute.xlu0 %2190
    %2192 = vrot.lane.b32.xlu0 %v1726, 80
    %v2193 = vpop.permute.xlu0 %2192
    %2194 = vrot.lane.b32.xlu0 %v1727, 80
    %v2195 = vpop.permute.xlu0 %2194
    %v2200 = vsel %vm249, %v2189, 0.0
    %2201 = vadd.xlane.f32.xlu0 %v2200
    %v2202 = vpop.xlane.xlu0 %2201
    %v2203 = vsel %vm249, %v2191, 0.0
    %2204 = vadd.xlane.f32.xlu0 %v2203
    %v2205 = vpop.xlane.xlu0 %2204
    %v2206 = vsel %vm249, %v2193, 0.0
    %2207 = vadd.xlane.f32.xlu0 %v2206
    %v2208 = vpop.xlane.xlu0 %2207
    %v2209 = vsel %vm249, %v2195, 0.0
    %2210 = vadd.xlane.f32.xlu0 %v2209
    %v2211 = vpop.xlane.xlu0 %2210
    %v2212 = vmul.f32 %v2202, %v262
    %v2213 = vmul.f32 %v2205, %v262
    %v2214 = vmul.f32 %v2208, %v262
    %v2215 = vmul.f32 %v2211, %v262
    %v2216 = vadd.f32 %v2212, 1e-06
    %v2217 = vadd.f32 %v2213, 1e-06
    %v2218 = vadd.f32 %v2214, 1e-06
    %v2219 = vadd.f32 %v2215, 1e-06
    %v2220 = vrsqrt.pop %v2216
    %v2221 = vrsqrt.pop %v2217
    %v2222 = vrsqrt.pop %v2218
    %v2223 = vrsqrt.pop %v2219
    %v2224 = vmul.f32 %v1710, %v2220
    %v2225 = vmul.f32 %v1713, %v2221
    %v2226 = vmul.f32 %v1718, %v2222
    %v2227 = vmul.f32 %v1721, %v2223
    %v2228 = vmul.f32 %v2184, %v855
    %v2229 = vmul.f32 %v2185, %v857
    %v2230 = vmul.f32 %v2186, %v859
    %v2231 = vmul.f32 %v2187, %v861
    %v2232 = vmul.f32 %v2184, %v875
    %v2233 = vmul.f32 %v2185, %v877
    %v2234 = vmul.f32 %v2186, %v879
    %v2235 = vmul.f32 %v2187, %v881
    %2240 = vrot.lane.b32.xlu0 %v2232, 120
    %v2241 = vpop.permute.xlu0 %2240
    %2242 = vrot.lane.b32.xlu0 %v2233, 120
    %v2243 = vpop.permute.xlu0 %2242
    %2244 = vrot.lane.b32.xlu0 %v2234, 120
    %v2245 = vpop.permute.xlu0 %2244
    %2246 = vrot.lane.b32.xlu0 %v2235, 120
    %v2247 = vpop.permute.xlu0 %2246
    %v2252 = vsub.f32 %v2228, %v2241
    %v2253 = vsub.f32 %v2229, %v2243
    %v2254 = vsub.f32 %v2230, %v2245
    %v2255 = vsub.f32 %v2231, %v2247
    %v2256 = vmul.f32 %v2184, %v911
    %v2257 = vmul.f32 %v2185, %v913
    %v2258 = vmul.f32 %v2186, %v915
    %v2259 = vmul.f32 %v2187, %v917
    %v2260 = vmul.f32 %v2184, %v927
    %v2261 = vmul.f32 %v2185, %v929
    %v2262 = vmul.f32 %v2186, %v931
    %v2263 = vmul.f32 %v2187, %v933
    %2268 = vrot.lane.b32.xlu0 %v2260, 120
    %v2269 = vpop.permute.xlu0 %2268
    %2270 = vrot.lane.b32.xlu0 %v2261, 120
    %v2271 = vpop.permute.xlu0 %2270
    %2272 = vrot.lane.b32.xlu0 %v2262, 120
    %v2273 = vpop.permute.xlu0 %2272
    %2274 = vrot.lane.b32.xlu0 %v2263, 120
    %v2275 = vpop.permute.xlu0 %2274
    %v2280 = vadd.f32 %v2256, %v2269
    %v2281 = vadd.f32 %v2257, %v2271
    %v2282 = vadd.f32 %v2258, %v2273
    %v2283 = vadd.f32 %v2259, %v2275
    %2288 = vrot.lane.b32.xlu0 %v2252, 112
    %v2289 = vpop.permute.xlu0 %2288
    %2290 = vrot.lane.b32.xlu0 %v2253, 112
    %v2291 = vpop.permute.xlu0 %2290
    %2292 = vrot.lane.b32.xlu0 %v2254, 112
    %v2293 = vpop.permute.xlu0 %2292
    %2294 = vrot.lane.b32.xlu0 %v2255, 112
    %v2295 = vpop.permute.xlu0 %2294
    %2304 = vrot.lane.b32.xlu0 %v2280, 120
    %v2305 = vpop.permute.xlu0 %2304
    %2306 = vrot.lane.b32.xlu0 %v2281, 120
    %v2307 = vpop.permute.xlu0 %2306
    %2308 = vrot.lane.b32.xlu0 %v2282, 120
    %v2309 = vpop.permute.xlu0 %2308
    %2310 = vrot.lane.b32.xlu0 %v2283, 120
    %v2311 = vpop.permute.xlu0 %2310
    %v2316 = vsel %vm435, %v2289, %v2305
    %v2317 = vsel %vm435, %v2291, %v2307
    %v2318 = vsel %vm435, %v2293, %v2309
    %v2319 = vsel %vm435, %v2295, %v2311
    %v2320 = vmul.f32 %v2316, 0.25
    %v2321 = vmul.f32 %v2317, 0.25
    %v2322 = vmul.f32 %v2318, 0.25
    %v2323 = vmul.f32 %v2319, 0.25
    %v2324 = vmul.f32 %v2224, %v1003
    %v2325 = vmul.f32 %v2225, %v1005
    %v2326 = vmul.f32 %v2226, %v1007
    %v2327 = vmul.f32 %v2227, %v1009
    %v2328 = vmul.f32 %v2224, %v1019
    %v2329 = vmul.f32 %v2225, %v1021
    %v2330 = vmul.f32 %v2226, %v1023
    %v2331 = vmul.f32 %v2227, %v1025
    %2336 = vrot.lane.b32.xlu0 %v2328, 120
    %v2337 = vpop.permute.xlu0 %2336
    %2338 = vrot.lane.b32.xlu0 %v2329, 120
    %v2339 = vpop.permute.xlu0 %2338
    %2340 = vrot.lane.b32.xlu0 %v2330, 120
    %v2341 = vpop.permute.xlu0 %2340
    %2342 = vrot.lane.b32.xlu0 %v2331, 120
    %v2343 = vpop.permute.xlu0 %2342
    %v2348 = vsub.f32 %v2324, %v2337
    %v2349 = vsub.f32 %v2325, %v2339
    %v2350 = vsub.f32 %v2326, %v2341
    %v2351 = vsub.f32 %v2327, %v2343
    %v2352 = vmul.f32 %v2224, %v1055
    %v2353 = vmul.f32 %v2225, %v1057
    %v2354 = vmul.f32 %v2226, %v1059
    %v2355 = vmul.f32 %v2227, %v1061
    %v2356 = vmul.f32 %v2224, %v1071
    %v2357 = vmul.f32 %v2225, %v1073
    %v2358 = vmul.f32 %v2226, %v1075
    %v2359 = vmul.f32 %v2227, %v1077
    %2364 = vrot.lane.b32.xlu0 %v2356, 120
    %v2365 = vpop.permute.xlu0 %2364
    %2366 = vrot.lane.b32.xlu0 %v2357, 120
    %v2367 = vpop.permute.xlu0 %2366
    %2368 = vrot.lane.b32.xlu0 %v2358, 120
    %v2369 = vpop.permute.xlu0 %2368
    %2370 = vrot.lane.b32.xlu0 %v2359, 120
    %v2371 = vpop.permute.xlu0 %2370
    %v2376 = vadd.f32 %v2352, %v2365
    %v2377 = vadd.f32 %v2353, %v2367
    %v2378 = vadd.f32 %v2354, %v2369
    %v2379 = vadd.f32 %v2355, %v2371
    %2384 = vrot.lane.b32.xlu0 %v2348, 80
    %v2385 = vpop.permute.xlu0 %2384
    %2386 = vrot.lane.b32.xlu0 %v2349, 80
    %v2387 = vpop.permute.xlu0 %2386
    %2388 = vrot.lane.b32.xlu0 %v2350, 80
    %v2389 = vpop.permute.xlu0 %2388
    %2390 = vrot.lane.b32.xlu0 %v2351, 80
    %v2391 = vpop.permute.xlu0 %2390
    %2400 = vrot.lane.b32.xlu0 %v2376, 88
    %v2401 = vpop.permute.xlu0 %2400
    %2402 = vrot.lane.b32.xlu0 %v2377, 88
    %v2403 = vpop.permute.xlu0 %2402
    %2404 = vrot.lane.b32.xlu0 %v2378, 88
    %v2405 = vpop.permute.xlu0 %2404
    %2406 = vrot.lane.b32.xlu0 %v2379, 88
    %v2407 = vpop.permute.xlu0 %2406
    %v2412 = vsel %vm435, %v2385, %v2401
    %v2413 = vsel %vm435, %v2387, %v2403
    %v2414 = vsel %vm435, %v2389, %v2405
    %v2415 = vsel %vm435, %v2391, %v2407
    %v2416 = vpack.c.bf16 %v2321, %v2320
    %v2417 = vpack.c.bf16 %v2323, %v2322
    %v2418 = vpack.c.bf16 %v2413, %v2412
    %v2419 = vpack.c.bf16 %v2415, %v2414
    %v2421 = vsel %vm249, %v2416, 0
    %v2424 = vsel %vm249, %v2417, 0
    %v2427 = vsel %vm249, %v2418, 0
    %v2430 = vsel %vm249, %v2419, 0
    %2432 = vmatprep.subr.bf16.mxu0 0
    %2433 = vmatpush1.bf16.xpose.msra.mxu0 %v2427
    %2434 = vmatprep.subr.bf16.mxu0 0
    %2435 = vmatpush1.bf16.xpose.msra.mxu0 %v2430
    %2436 = vmatprep.subr.bf16.mxu0 0
    %2437 = vmatpush1.bf16.xpose.msra.mxu0 0
    %2438 = vmatprep.subr.bf16.mxu0 0
    %2439 = vmatpush1.bf16.xpose.msra.mxu0 0
    %2440 = vmatprep.subr.bf16.mxu0 0
    %2441 = vmatpush1.bf16.xpose.msra.mxu0 0
    %2442 = vmatprep.subr.bf16.mxu0 0
    %2443 = vmatpush1.bf16.xpose.msra.mxu0 0
    %2444 = vmatprep.subr.bf16.mxu0 0
    %2445 = vmatpush1.bf16.xpose.msra.mxu0 0
    %2446 = vmatprep.subr.bf16.mxu0 0
    %2447 = vmatpush1.bf16.xpose.msra.mxu0 0
    %2448 = vmatprep.subr.bf16.mxu0 0
    %2449 = vmatpush1.bf16.xpose.msra.mxu0 0
    %2450 = vmatprep.subr.bf16.mxu0 0
    %2451 = vmatpush1.bf16.xpose.msra.mxu0 0
    %2452 = vmatprep.subr.bf16.mxu0 0
    %2453 = vmatpush1.bf16.xpose.msra.mxu0 0
    %2454 = vmatprep.subr.bf16.mxu0 0
    %2455 = vmatpush1.bf16.xpose.msra.mxu0 0
    %2456 = vmatprep.subr.bf16.mxu0 0
    %2457 = vmatpush1.bf16.xpose.msra.mxu0 0
    %2458 = vmatprep.subr.bf16.mxu0 0
    %2459 = vmatpush1.bf16.xpose.msra.mxu0 0
    %2460 = vmatprep.subr.bf16.mxu0 0
    %2461 = vmatpush1.bf16.xpose.msra.mxu0 0
    %2462 = vmatprep.subr.bf16.mxu0 0
    %2463 = vmatpush1.bf16.xpose.msra.mxu0 0
    %2464 = vmatprep.mubr.bf16.mxu0 0
    %2465 = vmatmul.mubr.bf16.gmra.mrb[0].mxu0 %v2421
    %v2466 = vpop.f32.mrb[0].mxu0
    %v2467 = vadd.f32 %v134, %v2466
    %v2468 = vpop.f32.mrb[0].mxu0
    %v2469 = vpop.f32.mrb[0].mxu0
    %v2470 = vadd.f32 %v135, %v2469
    %v2471 = vpop.f32.mrb[0].mxu0
    %2472 = vmatprep.mubr.bf16.mxu0 0
    %2473 = vmatmul.mubr.bf16.gmra.mrb[0].mxu0 %v2424
    %v2474 = vpop.f32.mrb[0].mxu0
    %v2475 = vadd.f32 %v136, %v2474
    %v2476 = vpop.f32.mrb[0].mxu0
    %v2477 = vpop.f32.mrb[0].mxu0
    %v2478 = vadd.f32 %v137, %v2477
    %v2479 = vpop.f32.mrb[0].mxu0
    %2480 = vdwg.mxu0
    %v2481 = vsel %vm142, %v2467, -inf
    %2482 = vmax.xlane.f32.xlu0 %v2481
    %v2483 = vpop.xlane.xlu0 %2482
    %v2484 = vsel %vm142, %v2470, -inf
    %2485 = vmax.xlane.f32.xlu0 %v2484
    %v2486 = vpop.xlane.xlu0 %2485
    %v2487 = vsel %vm142, %v2475, -inf
    %2488 = vmax.xlane.f32.xlu0 %v2487
    %v2489 = vpop.xlane.xlu0 %2488
    %v2490 = vsel %vm142, %v2478, -inf
    %2491 = vmax.xlane.f32.xlu0 %v2490
    %v2492 = vpop.xlane.xlu0 %2491
    %v2493 = vsub.f32 %v2467, %v2483
    %v2494 = vsub.f32 %v2470, %v2486
    %v2495 = vsub.f32 %v2475, %v2489
    %v2496 = vsub.f32 %v2478, %v2492
    %v2497 = vmul.f32 %v2493, 1.442695
    %v2498 = vpow.pop %v2497
    %v2499 = vmul.f32 %v2494, 1.442695
    %v2500 = vpow.pop %v2499
    %v2501 = vmul.f32 %v2495, 1.442695
    %v2502 = vpow.pop %v2501
    %v2503 = vmul.f32 %v2496, 1.442695
    %v2504 = vpow.pop %v2503
    %v2505 = vsel %vm142, %v2498, 0.0
    %2506 = vadd.xlane.f32.xlu0 %v2505
    %v2507 = vpop.xlane.xlu0 %2506
    %v2508 = vsel %vm142, %v2500, 0.0
    %2509 = vadd.xlane.f32.xlu0 %v2508
    %v2510 = vpop.xlane.xlu0 %2509
    %v2511 = vsel %vm142, %v2502, 0.0
    %2512 = vadd.xlane.f32.xlu0 %v2511
    %v2513 = vpop.xlane.xlu0 %2512
    %v2514 = vsel %vm142, %v2504, 0.0
    %2515 = vadd.xlane.f32.xlu0 %v2514
    %v2516 = vpop.xlane.xlu0 %2515
    %v2517 = vrcp.pop %v2507
    %v2518 = vrcp.pop %v2510
    %v2519 = vrcp.pop %v2513
    %v2520 = vrcp.pop %v2516
    %v2521 = vmul.f32 %v2498, %v2517
    %v2522 = vmul.f32 %v2500, %v2518
    %v2523 = vmul.f32 %v2502, %v2519
    %v2524 = vmul.f32 %v2504, %v2520
    %v2525 = vpack.c.bf16 %v2522, %v2521
    %v2526 = vpack.c.bf16 %v2524, %v2523
    %2527 = vrot.lane.b32.xlu0 %v2083, 48
    %v2528 = vpop.permute.xlu0 %2527
    %2529 = vrot.lane.b32.xlu0 %v2084, 48
    %v2530 = vpop.permute.xlu0 %2529
    %v2534 = vsel %vm142, %v2525, 0
    %v2537 = vsel %vm142, %v2526, 0
    %2539 = vmatprep.subr.bf16.mxu0 0
    %2540 = vmatpush1.bf16.msra.mxu0 %v2528
    %2541 = vmatprep.subr.bf16.mxu0 0
    %2542 = vmatpush1.bf16.msra.mxu0 %v2530
    %2543 = vmatprep.subr.bf16.mxu0 0
    %2544 = vmatpush1.bf16.msra.mxu0 0
    %2545 = vmatprep.subr.bf16.mxu0 0
    %2546 = vmatpush1.bf16.msra.mxu0 0
    %2547 = vmatprep.subr.bf16.mxu0 0
    %2548 = vmatpush1.bf16.msra.mxu0 0
    %2549 = vmatprep.subr.bf16.mxu0 0
    %2550 = vmatpush1.bf16.msra.mxu0 0
    %2551 = vmatprep.subr.bf16.mxu0 0
    %2552 = vmatpush1.bf16.msra.mxu0 0
    %2553 = vmatprep.subr.bf16.mxu0 0
    %2554 = vmatpush1.bf16.msra.mxu0 0
    %2555 = vmatprep.subr.bf16.mxu0 0
    %2556 = vmatpush1.bf16.msra.mxu0 0
    %2557 = vmatprep.subr.bf16.mxu0 0
    %2558 = vmatpush1.bf16.msra.mxu0 0
    %2559 = vmatprep.subr.bf16.mxu0 0
    %2560 = vmatpush1.bf16.msra.mxu0 0
    %2561 = vmatprep.subr.bf16.mxu0 0
    %2562 = vmatpush1.bf16.msra.mxu0 0
    %2563 = vmatprep.subr.bf16.mxu0 0
    %2564 = vmatpush1.bf16.msra.mxu0 0
    %2565 = vmatprep.subr.bf16.mxu0 0
    %2566 = vmatpush1.bf16.msra.mxu0 0
    %2567 = vmatprep.subr.bf16.mxu0 0
    %2568 = vmatpush1.bf16.msra.mxu0 0
    %2569 = vmatprep.subr.bf16.mxu0 0
    %2570 = vmatpush1.bf16.msra.mxu0 0
    %2571 = vmatprep.mubr.bf16.mxu0 0
    %2572 = vmatmul.mubr.bf16.gmra.mrb[0].mxu0 %v2534
    %v2573 = vpop.f32.mrb[0].mxu0
    %v2574 = vadd.f32 0.0, %v2573
    %v2575 = vpop.f32.mrb[0].mxu0
    %v2576 = vpop.f32.mrb[0].mxu0
    %v2577 = vadd.f32 0.0, %v2576
    %v2578 = vpop.f32.mrb[0].mxu0
    %2579 = vmatprep.mubr.bf16.mxu0 0
    %2580 = vmatmul.mubr.bf16.gmra.mrb[0].mxu0 %v2537
    %v2581 = vpop.f32.mrb[0].mxu0
    %v2582 = vadd.f32 0.0, %v2581
    %v2583 = vpop.f32.mrb[0].mxu0
    %v2584 = vpop.f32.mrb[0].mxu0
    %v2585 = vadd.f32 0.0, %v2584
    %v2586 = vpop.f32.mrb[0].mxu0
    %2587 = vdwg.mxu0
    %2592 = vrot.lane.b32.xlu0 %v2574, 16
    %v2593 = vpop.permute.xlu0 %2592
    %2594 = vrot.lane.b32.xlu0 %v2577, 16
    %v2595 = vpop.permute.xlu0 %2594
    %2596 = vrot.lane.b32.xlu0 %v2582, 16
    %v2597 = vpop.permute.xlu0 %2596
    %2598 = vrot.lane.b32.xlu0 %v2585, 16
    %v2599 = vpop.permute.xlu0 %2598
    %v2604 = vsel %vm249, %v2134, %v2593
    %v2605 = vsel %vm249, %v2137, %v2595
    %v2606 = vsel %vm249, %v2142, %v2597
    %v2607 = vsel %vm249, %v2145, %v2599
    %v2608 = vpack.c.bf16 %v2605, %v2604
    %v2609 = vpack.c.bf16 %v2607, %v2606
    %s2610 = scalar_lea.vmem %s7, 16
    %v2611 = vld [vmem:[%s2610] sm:$0xf]
    %v2612 = vld [vmem:[%s2610 + $0x4] sm:$0xf]
    %v2613 = vld [vmem:[%s2610 + $0x8] sm:$0xf]
    %v2614 = vld [vmem:[%s2610 + $0xc] sm:$0xf]
    %v2619 = vunpack.c.l.b16 %v2611
    %v2620 = vunpack.c.l.b16 %v2612
    %v2621 = vunpack.c.l.b16 %v2613
    %v2622 = vunpack.c.l.b16 %v2614
    %v2623 = vpack.c.b16 %v2620, %v2619
    %v2624 = vpack.c.b16 %v2622, %v2621
    %v2628 = vsel %vm142, %v2608, 0
    %v2631 = vsel %vm142, %v2609, 0
    %2633 = vmatprep.subr.bf16.mxu0 0
    %2634 = vmatpush1.bf16.msra.mxu0 %v2623
    %2635 = vmatprep.subr.bf16.mxu0 0
    %2636 = vmatpush1.bf16.msra.mxu0 %v2624
    %2637 = vmatprep.subr.bf16.mxu0 0
    %2638 = vmatpush1.bf16.msra.mxu0 0
    %2639 = vmatprep.subr.bf16.mxu0 0
    %2640 = vmatpush1.bf16.msra.mxu0 0
    %2641 = vmatprep.subr.bf16.mxu0 0
    %2642 = vmatpush1.bf16.msra.mxu0 0
    %2643 = vmatprep.subr.bf16.mxu0 0
    %2644 = vmatpush1.bf16.msra.mxu0 0
    %2645 = vmatprep.subr.bf16.mxu0 0
    %2646 = vmatpush1.bf16.msra.mxu0 0
    %2647 = vmatprep.subr.bf16.mxu0 0
    %2648 = vmatpush1.bf16.msra.mxu0 0
    %2649 = vmatprep.subr.bf16.mxu0 0
    %2650 = vmatpush1.bf16.msra.mxu0 0
    %2651 = vmatprep.subr.bf16.mxu0 0
    %2652 = vmatpush1.bf16.msra.mxu0 0
    %2653 = vmatprep.subr.bf16.mxu0 0
    %2654 = vmatpush1.bf16.msra.mxu0 0
    %2655 = vmatprep.subr.bf16.mxu0 0
    %2656 = vmatpush1.bf16.msra.mxu0 0
    %2657 = vmatprep.subr.bf16.mxu0 0
    %2658 = vmatpush1.bf16.msra.mxu0 0
    %2659 = vmatprep.subr.bf16.mxu0 0
    %2660 = vmatpush1.bf16.msra.mxu0 0
    %2661 = vmatprep.subr.bf16.mxu0 0
    %2662 = vmatpush1.bf16.msra.mxu0 0
    %2663 = vmatprep.subr.bf16.mxu0 0
    %2664 = vmatpush1.bf16.msra.mxu0 0
    %2665 = vmatprep.mubr.bf16.mxu0 0
    %2666 = vmatmul.mubr.bf16.gmra.mrb[0].mxu0 %v2628
    %v2667 = vpop.f32.mrb[0].mxu0
    %v2668 = vadd.f32 0.0, %v2667
    %v2669 = vpop.f32.mrb[0].mxu0
    %v2670 = vpop.f32.mrb[0].mxu0
    %v2671 = vadd.f32 0.0, %v2670
    %v2672 = vpop.f32.mrb[0].mxu0
    %2673 = vmatprep.mubr.bf16.mxu0 0
    %2674 = vmatmul.mubr.bf16.gmra.mrb[0].mxu0 %v2631
    %v2675 = vpop.f32.mrb[0].mxu0
    %v2676 = vadd.f32 0.0, %v2675
    %v2677 = vpop.f32.mrb[0].mxu0
    %v2678 = vpop.f32.mrb[0].mxu0
    %v2679 = vadd.f32 0.0, %v2678
    %v2680 = vpop.f32.mrb[0].mxu0
    %2681 = vdwg.mxu0
    %v2682 = vadd.f32 %v1614, %v2668
    %v2683 = vadd.f32 %v1615, %v2671
    %v2684 = vadd.f32 %v1616, %v2676
    %v2685 = vadd.f32 %v1617, %v2679
    %v2686 = vmul.f32 %v2682, %v2682
    %v2687 = vmul.f32 %v2683, %v2683
    %v2688 = vmul.f32 %v2684, %v2684
    %v2689 = vmul.f32 %v2685, %v2685
    %v2690 = vsel %vm142, %v2686, 0.0
    %2691 = vadd.xlane.f32.xlu0 %v2690
    %v2692 = vpop.xlane.xlu0 %2691
    %v2693 = vsel %vm142, %v2687, 0.0
    %2694 = vadd.xlane.f32.xlu0 %v2693
    %v2695 = vpop.xlane.xlu0 %2694
    %v2696 = vsel %vm142, %v2688, 0.0
    %2697 = vadd.xlane.f32.xlu0 %v2696
    %v2698 = vpop.xlane.xlu0 %2697
    %v2699 = vsel %vm142, %v2689, 0.0
    %2700 = vadd.xlane.f32.xlu0 %v2699
    %v2701 = vpop.xlane.xlu0 %2700
    %v2702 = vmul.f32 %v2692, %v155
    %v2703 = vmul.f32 %v2695, %v155
    %v2704 = vmul.f32 %v2698, %v155
    %v2705 = vmul.f32 %v2701, %v155
    %v2706 = vadd.f32 %v2702, 1e-06
    %v2707 = vadd.f32 %v2703, 1e-06
    %v2708 = vadd.f32 %v2704, 1e-06
    %v2709 = vadd.f32 %v2705, 1e-06
    %v2710 = vrsqrt.pop %v2706
    %v2711 = vrsqrt.pop %v2707
    %v2712 = vrsqrt.pop %v2708
    %v2713 = vrsqrt.pop %v2709
    %v2714 = vmul.f32 %v2682, %v2710
    %v2715 = vmul.f32 %v2683, %v2711
    %v2716 = vmul.f32 %v2684, %v2712
    %v2717 = vmul.f32 %v2685, %v2713
    %v2718 = vpack.c.bf16 %v2715, %v2714
    %v2719 = vpack.c.bf16 %v2717, %v2716
    %s2720 = scalar_lea.vmem %s8, 16
    %v2721 = vld [vmem:[%s2720] sm:$0xf]
    %v2722 = vld [vmem:[%s2720 + $0x4] sm:$0xf]
    %v2723 = vld [vmem:[%s2720 + $0x8] sm:$0xf]
    %v2724 = vld [vmem:[%s2720 + $0xc] sm:$0xf]
    %v2729 = vunpack.c.l.b16 %v2721
    %v2730 = vunpack.c.l.b16 %v2722
    %v2731 = vunpack.c.l.b16 %v2723
    %v2732 = vunpack.c.l.b16 %v2724
    %v2733 = vpack.c.b16 %v2730, %v2729
    %v2734 = vpack.c.b16 %v2732, %v2731
    %v2738 = vsel %vm142, %v2718, 0
    %v2741 = vsel %vm142, %v2719, 0
    %2743 = vmatprep.subr.bf16.mxu0 0
    %2744 = vmatpush1.bf16.msra.mxu0 %v2733
    %2745 = vmatprep.subr.bf16.mxu0 0
    %2746 = vmatpush1.bf16.msra.mxu0 %v2734
    %2747 = vmatprep.subr.bf16.mxu0 0
    %2748 = vmatpush1.bf16.msra.mxu0 0
    %2749 = vmatprep.subr.bf16.mxu0 0
    %2750 = vmatpush1.bf16.msra.mxu0 0
    %2751 = vmatprep.subr.bf16.mxu0 0
    %2752 = vmatpush1.bf16.msra.mxu0 0
    %2753 = vmatprep.subr.bf16.mxu0 0
    %2754 = vmatpush1.bf16.msra.mxu0 0
    %2755 = vmatprep.subr.bf16.mxu0 0
    %2756 = vmatpush1.bf16.msra.mxu0 0
    %2757 = vmatprep.subr.bf16.mxu0 0
    %2758 = vmatpush1.bf16.msra.mxu0 0
    %2759 = vmatprep.subr.bf16.mxu0 0
    %2760 = vmatpush1.bf16.msra.mxu0 0
    %2761 = vmatprep.subr.bf16.mxu0 0
    %2762 = vmatpush1.bf16.msra.mxu0 0
    %2763 = vmatprep.subr.bf16.mxu0 0
    %2764 = vmatpush1.bf16.msra.mxu0 0
    %2765 = vmatprep.subr.bf16.mxu0 0
    %2766 = vmatpush1.bf16.msra.mxu0 0
    %2767 = vmatprep.subr.bf16.mxu0 0
    %2768 = vmatpush1.bf16.msra.mxu0 0
    %2769 = vmatprep.subr.bf16.mxu0 0
    %2770 = vmatpush1.bf16.msra.mxu0 0
    %2771 = vmatprep.subr.bf16.mxu0 0
    %2772 = vmatpush1.bf16.msra.mxu0 0
    %2773 = vmatprep.subr.bf16.mxu0 0
    %2774 = vmatpush1.bf16.msra.mxu0 0
    %2775 = vmatprep.mubr.bf16.mxu0 0
    %2776 = vmatmul.mubr.bf16.gmra.mrb[0].mxu0 %v2738
    %v2777 = vpop.f32.mrb[0].mxu0
    %v2778 = vadd.f32 0.0, %v2777
    %v2779 = vpop.f32.mrb[0].mxu0
    %v2780 = vpop.f32.mrb[0].mxu0
    %v2781 = vadd.f32 0.0, %v2780
    %v2782 = vpop.f32.mrb[0].mxu0
    %2783 = vmatprep.mubr.bf16.mxu0 0
    %2784 = vmatmul.mubr.bf16.gmra.mrb[0].mxu0 %v2741
    %v2785 = vpop.f32.mrb[0].mxu0
    %v2786 = vadd.f32 0.0, %v2785
    %v2787 = vpop.f32.mrb[0].mxu0
    %v2788 = vpop.f32.mrb[0].mxu0
    %v2789 = vadd.f32 0.0, %v2788
    %v2790 = vpop.f32.mrb[0].mxu0
    %2791 = vdwg.mxu0
    %v2792 = vmax.f32 %v2778, 0.0
    %v2793 = vmax.f32 %v2781, 0.0
    %v2794 = vmax.f32 %v2786, 0.0
    %v2795 = vmax.f32 %v2789, 0.0
    %v2796 = vmul.f32 %v2792, %v2792
    %v2797 = vmul.f32 %v2793, %v2793
    %v2798 = vmul.f32 %v2794, %v2794
    %v2799 = vmul.f32 %v2795, %v2795
    %v2800 = vpack.c.bf16 %v2797, %v2796
    %v2801 = vpack.c.bf16 %v2799, %v2798
    %s2802 = scalar_lea.vmem %s9, 32
    %v2803 = vld [vmem:[%s2802] sm:$0xf]
    %v2804 = vld [vmem:[%s2802 + $0x4] sm:$0xf]
    %v2805 = vld [vmem:[%s2802 + $0x8] sm:$0xf]
    %v2806 = vld [vmem:[%s2802 + $0xc] sm:$0xf]
    %v2807 = vld [vmem:[%s2802 + $0x10] sm:$0xf]
    %v2808 = vld [vmem:[%s2802 + $0x14] sm:$0xf]
    %v2809 = vld [vmem:[%s2802 + $0x18] sm:$0xf]
    %v2810 = vld [vmem:[%s2802 + $0x1c] sm:$0xf]
    %v2819 = vunpack.c.l.b16 %v2803
    %v2820 = vunpack.c.l.b16 %v2804
    %v2821 = vunpack.c.l.b16 %v2805
    %v2822 = vunpack.c.l.b16 %v2806
    %v2823 = vunpack.c.l.b16 %v2807
    %v2824 = vunpack.c.l.b16 %v2808
    %v2825 = vunpack.c.l.b16 %v2809
    %v2826 = vunpack.c.l.b16 %v2810
    %v2827 = vpack.c.b16 %v2820, %v2819
    %v2828 = vpack.c.b16 %v2822, %v2821
    %v2829 = vpack.c.b16 %v2824, %v2823
    %v2830 = vpack.c.b16 %v2826, %v2825
    %v2836 = vsel %vm1558, %v2800, 0
    %v2839 = vsel %vm1558, %v2801, 0
    %2841 = vmatprep.subr.bf16.mxu0 0
    %2842 = vmatpush1.bf16.msra.mxu0 %v2827
    %2843 = vmatprep.subr.bf16.mxu0 0
    %2844 = vmatpush1.bf16.msra.mxu0 %v2828
    %2845 = vmatprep.subr.bf16.mxu0 0
    %2846 = vmatpush1.bf16.msra.mxu0 %v2829
    %2847 = vmatprep.subr.bf16.mxu0 0
    %2848 = vmatpush1.bf16.msra.mxu0 %v2830
    %2849 = vmatprep.subr.bf16.mxu0 0
    %2850 = vmatpush1.bf16.msra.mxu0 0
    %2851 = vmatprep.subr.bf16.mxu0 0
    %2852 = vmatpush1.bf16.msra.mxu0 0
    %2853 = vmatprep.subr.bf16.mxu0 0
    %2854 = vmatpush1.bf16.msra.mxu0 0
    %2855 = vmatprep.subr.bf16.mxu0 0
    %2856 = vmatpush1.bf16.msra.mxu0 0
    %2857 = vmatprep.subr.bf16.mxu0 0
    %2858 = vmatpush1.bf16.msra.mxu0 0
    %2859 = vmatprep.subr.bf16.mxu0 0
    %2860 = vmatpush1.bf16.msra.mxu0 0
    %2861 = vmatprep.subr.bf16.mxu0 0
    %2862 = vmatpush1.bf16.msra.mxu0 0
    %2863 = vmatprep.subr.bf16.mxu0 0
    %2864 = vmatpush1.bf16.msra.mxu0 0
    %2865 = vmatprep.subr.bf16.mxu0 0
    %2866 = vmatpush1.bf16.msra.mxu0 0
    %2867 = vmatprep.subr.bf16.mxu0 0
    %2868 = vmatpush1.bf16.msra.mxu0 0
    %2869 = vmatprep.subr.bf16.mxu0 0
    %2870 = vmatpush1.bf16.msra.mxu0 0
    %2871 = vmatprep.subr.bf16.mxu0 0
    %2872 = vmatpush1.bf16.msra.mxu0 0
    %2873 = vmatprep.mubr.bf16.mxu0 0
    %2874 = vmatmul.mubr.bf16.gmra.mrb[0].mxu0 %v2836
    %v2875 = vpop.f32.mrb[0].mxu0
    %v2876 = vadd.f32 0.0, %v2875
    %v2877 = vpop.f32.mrb[0].mxu0
    %v2878 = vpop.f32.mrb[0].mxu0
    %v2879 = vadd.f32 0.0, %v2878
    %v2880 = vpop.f32.mrb[0].mxu0
    %2881 = vmatprep.mubr.bf16.mxu0 0
    %2882 = vmatmul.mubr.bf16.gmra.mrb[0].mxu0 %v2839
    %v2883 = vpop.f32.mrb[0].mxu0
    %v2884 = vadd.f32 0.0, %v2883
    %v2885 = vpop.f32.mrb[0].mxu0
    %v2886 = vpop.f32.mrb[0].mxu0
    %v2887 = vadd.f32 0.0, %v2886
    %v2888 = vpop.f32.mrb[0].mxu0
    %2889 = vdwg.mxu0
    %v2890 = vadd.f32 %v2682, %v2876
    %v2891 = vadd.f32 %v2683, %v2879
    %v2892 = vadd.f32 %v2684, %v2884
    %v2893 = vadd.f32 %v2685, %v2887
    %v2894 = vld [vmem:[%s4] sm:$0x1]
    %v2895 = vpack.c.bf16 %v2891, %v2890
    %v2896 = vpack.c.bf16 %v2893, %v2892
    %v2898 = vsel %vm142, %v2894, 0
    %2900 = vmatprep.subr.bf16.mxu0 0
    %2901 = vmatpush1.bf16.msra.mxu0 %v2895
    %2902 = vmatprep.subr.bf16.mxu0 0
    %2903 = vmatpush1.bf16.msra.mxu0 %v2896
    %2904 = vmatprep.subr.bf16.mxu0 0
    %2905 = vmatpush1.bf16.msra.mxu0 0
    %2906 = vmatprep.subr.bf16.mxu0 0
    %2907 = vmatpush1.bf16.msra.mxu0 0
    %2908 = vmatprep.subr.bf16.mxu0 0
    %2909 = vmatpush1.bf16.msra.mxu0 0
    %2910 = vmatprep.subr.bf16.mxu0 0
    %2911 = vmatpush1.bf16.msra.mxu0 0
    %2912 = vmatprep.subr.bf16.mxu0 0
    %2913 = vmatpush1.bf16.msra.mxu0 0
    %2914 = vmatprep.subr.bf16.mxu0 0
    %2915 = vmatpush1.bf16.msra.mxu0 0
    %2916 = vmatprep.subr.bf16.mxu0 0
    %2917 = vmatpush1.bf16.msra.mxu0 0
    %2918 = vmatprep.subr.bf16.mxu0 0
    %2919 = vmatpush1.bf16.msra.mxu0 0
    %2920 = vmatprep.subr.bf16.mxu0 0
    %2921 = vmatpush1.bf16.msra.mxu0 0
    %2922 = vmatprep.subr.bf16.mxu0 0
    %2923 = vmatpush1.bf16.msra.mxu0 0
    %2924 = vmatprep.subr.bf16.mxu0 0
    %2925 = vmatpush1.bf16.msra.mxu0 0
    %2926 = vmatprep.subr.bf16.mxu0 0
    %2927 = vmatpush1.bf16.msra.mxu0 0
    %2928 = vmatprep.subr.bf16.mxu0 0
    %2929 = vmatpush1.bf16.msra.mxu0 0
    %2930 = vmatprep.subr.bf16.mxu0 0
    %2931 = vmatpush1.bf16.msra.mxu0 0
    %2932 = vmatprep.mubr.bf16.mxu0 0
    %2933 = vmatmul.mubr.bf16.gmra.mrb[0].mxu0 %v2898
    %v2934 = vpop.f32.mrb[0].mxu0
    %v2935 = vadd.f32 0.0, %v2934
    %v2936 = vpop.f32.mrb[0].mxu0
    %v2937 = vpop.f32.mrb[0].mxu0
    %v2938 = vpop.f32.mrb[0].mxu0
    %2939 = vdwg.mxu0
    %v2940 = vmul.f32 %v2935, %v2935
    %vm2941 = vcmask 254976
    %v2942 = vsel %vm2941, %v2940, 0.0
    %2943 = vadd.xlane.f32.xlu0 %v2942
    %v2944 = vpop.xlane.xlu0 %2943
    %v2945 = vmul.f32 %v2944, %v155
    %v2946 = vadd.f32 %v2945, 1e-06
    %v2947 = vrsqrt.pop %v2946
    %v2948 = vmul.f32 %v2935, %v2947
    %v2949 = vpack.c.bf16 %v2948, %v2948
    %v2950 = vld [vmem:[%s10] sm:$0xf]
    %v2951 = vld [vmem:[%s10 + $0x4] sm:$0xf]
    %v2952 = vld [vmem:[%s10 + $0x8] sm:$0xf]
    %v2953 = vld [vmem:[%s10 + $0xc] sm:$0xf]
    %v2958 = vunpack.c.l.b16 %v2950
    %v2959 = vunpack.c.l.b16 %v2951
    %v2960 = vunpack.c.l.b16 %v2952
    %v2961 = vunpack.c.l.b16 %v2953
    %v2962 = vpack.c.b16 %v2959, %v2958
    %v2963 = vpack.c.b16 %v2961, %v2960
    %v2967 = vsel %vm142, %v2949, 0
    %2969 = vmatprep.subr.bf16.mxu0 0
    %2970 = vmatpush1.bf16.msra.mxu0 %v2962
    %2971 = vmatprep.subr.bf16.mxu0 0
    %2972 = vmatpush1.bf16.msra.mxu0 %v2963
    %2973 = vmatprep.subr.bf16.mxu0 0
    %2974 = vmatpush1.bf16.msra.mxu0 0
    %2975 = vmatprep.subr.bf16.mxu0 0
    %2976 = vmatpush1.bf16.msra.mxu0 0
    %2977 = vmatprep.subr.bf16.mxu0 0
    %2978 = vmatpush1.bf16.msra.mxu0 0
    %2979 = vmatprep.subr.bf16.mxu0 0
    %2980 = vmatpush1.bf16.msra.mxu0 0
    %2981 = vmatprep.subr.bf16.mxu0 0
    %2982 = vmatpush1.bf16.msra.mxu0 0
    %2983 = vmatprep.subr.bf16.mxu0 0
    %2984 = vmatpush1.bf16.msra.mxu0 0
    %2985 = vmatprep.subr.bf16.mxu0 0
    %2986 = vmatpush1.bf16.msra.mxu0 0
    %2987 = vmatprep.subr.bf16.mxu0 0
    %2988 = vmatpush1.bf16.msra.mxu0 0
    %2989 = vmatprep.subr.bf16.mxu0 0
    %2990 = vmatpush1.bf16.msra.mxu0 0
    %2991 = vmatprep.subr.bf16.mxu0 0
    %2992 = vmatpush1.bf16.msra.mxu0 0
    %2993 = vmatprep.subr.bf16.mxu0 0
    %2994 = vmatpush1.bf16.msra.mxu0 0
    %2995 = vmatprep.subr.bf16.mxu0 0
    %2996 = vmatpush1.bf16.msra.mxu0 0
    %2997 = vmatprep.subr.bf16.mxu0 0
    %2998 = vmatpush1.bf16.msra.mxu0 0
    %2999 = vmatprep.subr.bf16.mxu0 0
    %3000 = vmatpush1.bf16.msra.mxu0 0
    %3001 = vmatprep.mubr.bf16.mxu0 0
    %3002 = vmatmul.mubr.bf16.gmra.mrb[0].mxu0 %v2967
    %v3003 = vpop.f32.mrb[0].mxu0
    %v3004 = vadd.f32 0.0, %v3003
    %v3005 = vpop.f32.mrb[0].mxu0
    %v3006 = vpop.f32.mrb[0].mxu0
    %v3007 = vpop.f32.mrb[0].mxu0
    %3008 = vdwg.mxu0
    %3009 = vst [vmem:[#allocation2] sm:$0x3] %v3004
    // Predicated region
    $region46: #{tpu_custom_call.1} parent=1 // pred_check
      _
    $region47: #{tpu_custom_call.1} parent=1 // pred_check_branch
      %3011 = sbr.rel (0) target = $region49
    $region48: #{tpu_custom_call.1} parent=1 // pred_region
      %s3013 = ssub.s32 32, 32
      %3014 = vsyncadd [#allocation3], %s3013
      %s3016 = sshll.u32 [#allocation2], 4
      %s3017 = int_to_ptr.vmem [resolvable:$true] %s3016
      %3019 = dma.vmem_to_hbm [thread:$0]  %s3017, 32, %s11, [#allocation3]
    $region49: #{tpu_custom_call.1} parent=1 // pred_fallthru
      _
    // Predicated region
    $region50: #{tpu_custom_call.1} parent=1 // pred_check
      _
    $region51: #{tpu_custom_call.1} parent=1 // pred_check_branch
      %3021 = sbr.rel (0) target = $region53
    $region52: #{tpu_custom_call.1} parent=1 // pred_region
      %3022 = dma.done [#allocation3], 32
    $region53: #{tpu_custom_call.1} parent=1 // pred_fallthru
      _
    %3023 = vsyncpa [#allocation3], 1

</llo_original>
